<compile_context>
chip_gen: v7x
topology: tpu7x:2x2x1
jax: 0.10.0
libtpu: 0.0.40
codegen_flags: <defaults>
</compile_context>

<pallas_src>
import functools

import jax
import jax.numpy as jnp
from jax.experimental import pallas as pl
from jax.experimental.pallas import tpu as pltpu

EXPANSION = 4
BN_EPS = 1e-5


def _round_up(x, m):
    return (x + m - 1) // m * m


# ----------------------------- Pallas kernels ------------------------------ #

def _mm_bias_kernel(x_ref, w_ref, b_ref, o_ref, acc_ref, *, relu):
    """o = relu?(x @ w + bias), K-tiled with f32 VMEM accumulator."""
    @pl.when(pl.program_id(2) == 0)
    def _init():
        acc_ref[...] = jnp.zeros_like(acc_ref)

    acc_ref[...] += jnp.dot(x_ref[...], w_ref[...],
                            preferred_element_type=jnp.float32)

    @pl.when(pl.program_id(2) == pl.num_programs(2) - 1)
    def _finalize():
        y = acc_ref[...] + b_ref[...]
        if relu:
            y = jnp.maximum(y, 0.0)
        o_ref[...] = y.astype(o_ref.dtype)


def _mm_bias_res_kernel(x_ref, w_ref, b_ref, res_ref, o_ref, acc_ref):
    """o = relu(x @ w + bias + residual), K-tiled with f32 VMEM accumulator."""
    @pl.when(pl.program_id(2) == 0)
    def _init():
        acc_ref[...] = jnp.zeros_like(acc_ref)

    acc_ref[...] += jnp.dot(x_ref[...], w_ref[...],
                            preferred_element_type=jnp.float32)

    @pl.when(pl.program_id(2) == pl.num_programs(2) - 1)
    def _finalize():
        y = acc_ref[...] + b_ref[...] + res_ref[...].astype(jnp.float32)
        o_ref[...] = jnp.maximum(y, 0.0).astype(o_ref.dtype)


def _conv3x3_kernel(planes_ref, w_ref, b_ref, o_ref, *, stride, ho, wo):
    """3x3 conv (pad 1, stride s) + bias + ReLU for one image.

    planes_ref : (s*s, Hs, Ws, Cin)  parity planes of the padded activation
    w_ref      : (9, Cin, Cout)      per-tap, BN-scale-folded weights (bf16)
    b_ref      : (1, Cout)           folded BN bias (f32)
    o_ref      : (Ho*Wo, Cout)
    """
    s = stride
    co = o_ref.shape[-1]
    acc = jnp.zeros((ho * wo, co), jnp.float32)
    # Unrolled 9-tap reduction: static slices into the parity planes, one MXU
    # matmul per tap, all accumulation stays in f32 registers/VMEM.
    for t in range(9):
        dh, dw = t // 3, t % 3
        p = (dh % s) * s + (dw % s)          # which parity plane
        a, b = dh // s, dw // s              # residual (unit-stride) shift
        slab = planes_ref[p, a:a + ho, b:b + wo, :]          # (ho, wo, cin)
        acc = acc + jnp.dot(slab.reshape(ho * wo, slab.shape[-1]), w_ref[t],
                            preferred_element_type=jnp.float32)
    y = acc + b_ref[...]
    o_ref[...] = jnp.maximum(y, 0.0).astype(o_ref.dtype)


# ------------------------------ kernel wrappers ----------------------------- #

def matmul_bias_act(x, w, bias, *, relu, res=None, out_dtype=jnp.float32,
                    tm=256, tn=256, tk=512):
    """relu?(x @ w + bias [+ res]) with bf16 MXU inputs and f32 accumulation.

    Caller must supply K and N already padded to multiples of 128 (lane-dense);
    M is padded here to the M-tile and stripped on return.
    """
    m, k = x.shape
    kw, n = w.shape
    assert k == kw
    assert k % 128 == 0 and n % 128 == 0, "caller must pad channels to 128"

    tm = min(tm, _round_up(m, 8))
    m_pad = _round_up(m, tm)
    tn = min(tn, n)
    if n % tn:
        tn = 128
    tk = min(tk, k)
    if k % tk:
        tk = 128

    x = x.astype(jnp.bfloat16)
    w = w.astype(jnp.bfloat16)
    bias = bias.reshape(1, n).astype(jnp.float32)
    if m_pad != m:
        x = jnp.pad(x, ((0, m_pad - m), (0, 0)))
        if res is not None:
            res = jnp.pad(res, ((0, m_pad - m), (0, 0)))

    grid = (m_pad // tm, n // tn, k // tk)
    x_spec = pl.BlockSpec((tm, tk), lambda i, j, kk: (i, kk))
    # Weight/bias block indices are invariant along the M axis; Pallas'
    # invariant-index detection keeps them from being needlessly re-fetched.
    w_spec = pl.BlockSpec((tk, tn), lambda i, j, kk: (kk, j))
    b_spec = pl.BlockSpec((1, tn), lambda i, j, kk: (0, j))
    o_spec = pl.BlockSpec((tm, tn), lambda i, j, kk: (i, j))
    scratch = [pltpu.VMEM((tm, tn), jnp.float32)]
    cparams = pltpu.CompilerParams(
        dimension_semantics=("parallel", "parallel", "arbitrary"))
    out_shape = jax.ShapeDtypeStruct((m_pad, n), out_dtype)

    if res is None:
        out = pl.pallas_call(
            functools.partial(_mm_bias_kernel, relu=relu),
            out_shape=out_shape,
            grid=grid,
            in_specs=[x_spec, w_spec, b_spec],
            out_specs=o_spec,
            scratch_shapes=scratch,
            compiler_params=cparams,
        )(x, w, bias)
    else:
        res = res.astype(jnp.float32)
        r_spec = pl.BlockSpec((tm, tn), lambda i, j, kk: (i, j))
        out = pl.pallas_call(
            _mm_bias_res_kernel,
            out_shape=out_shape,
            grid=grid,
            in_specs=[x_spec, w_spec, b_spec, r_spec],
            out_specs=o_spec,
            scratch_shapes=scratch,
            compiler_params=cparams,
        )(x, w, bias, res)
    return out[:m] if m_pad != m else out


def conv3x3_bn_relu(y1, w9, bias, stride):
    """3x3 / pad 1 / stride s conv + folded BN + ReLU, no HBM im2col.

    y1  : (N, H, W, C)  bf16/f32, C a multiple of 128
    w9  : (9, C, Cout)  BN-scale-folded weights, Cout a multiple of 128
    bias: (Cout,)       folded BN bias
    Returns (N, Ho*Wo, Cout) bf16, plus (Ho, Wo).
    """
    n, h, w, c = y1.shape
    s = stride
    ho = (h + 2 - 3) // s + 1
    wo = (w + 2 - 3) // s + 1
    co = w9.shape[-1]

    # Spatial pad (conv padding=1), then round spatial dims up to the stride so
    # the parity decomposition is rectangular.
    y1p = jnp.pad(y1, ((0, 0), (1, 1), (1, 1), (0, 0)))
    hp, wp = h + 2, w + 2
    hp2, wp2 = _round_up(hp, s), _round_up(wp, s)
    y1p = jnp.pad(y1p, ((0, 0), (0, hp2 - hp), (0, wp2 - wp), (0, 0)))

    # planes[n, p*s+q, i, j, :] = y1p[n, i*s+p, j*s+q, :]  (~1x activation vol).
    hs, ws_ = hp2 // s, wp2 // s
    planes = y1p.reshape(n, hs, s, ws_, s, c)
    planes = jnp.transpose(planes, (0, 2, 4, 1, 3, 5)).reshape(n, s * s, hs, ws_, c)
    planes = planes.astype(jnp.bfloat16)
    w9 = w9.astype(jnp.bfloat16)
    bias = bias.reshape(1, co).astype(jnp.float32)

    kernel = functools.partial(_conv3x3_kernel, stride=s, ho=ho, wo=wo)
    out = pl.pallas_call(
        kernel,
        out_shape=jax.ShapeDtypeStruct((n, ho * wo, co), jnp.bfloat16),
        grid=(n,),
        in_specs=[
            pl.BlockSpec((None, s * s, hs, ws_, c), lambda b: (b, 0, 0, 0, 0)),
            pl.BlockSpec((9, c, co), lambda b: (0, 0, 0)),
            pl.BlockSpec((1, co), lambda b: (0, 0)),
        ],
        out_specs=pl.BlockSpec((None, ho * wo, co), lambda b: (b, 0, 0)),
        compiler_params=pltpu.CompilerParams(dimension_semantics=("parallel",)),
    )(planes, w9, bias)
    return out, ho, wo


# ------------------------------ JAX glue ----------------------------------- #

def _fold_bn(gamma, beta, mean, var):
    scale = gamma / jnp.sqrt(var + BN_EPS)
    bias = beta - mean * scale
    return scale, bias


def _pad2(w, k_to, n_to):
    k, n = w.shape
    return jnp.pad(w, ((0, k_to - k), (0, n_to - n)))


def _pad1(v, n_to):
    return jnp.pad(v, (0, n_to - v.shape[0]))


def init_params(key, in_channels, out_channels):
    c_out4 = out_channels * EXPANSION
    keys = jax.random.split(key, 8)

    def conv_w(k, cout, cin, kh, kw):
        fan_in = cin * kh * kw
        return jax.random.normal(k, (cout, cin, kh, kw), jnp.float32) / jnp.sqrt(
            float(fan_in))

    def bn_p(k, c):
        k1, k2, k3, k4 = jax.random.split(k, 4)
        gamma = 1.0 + 0.1 * jax.random.normal(k1, (c,), jnp.float32)
        beta = 0.1 * jax.random.normal(k2, (c,), jnp.float32)
        mean = 0.1 * jax.random.normal(k3, (c,), jnp.float32)
        var = jnp.abs(jax.random.normal(k4, (c,), jnp.float32)) + 0.5
        return gamma, beta, mean, var

    return {
        "w1": conv_w(keys[0], out_channels, in_channels, 1, 1),
        "bn1": bn_p(keys[1], out_channels),
        "w2": conv_w(keys[2], out_channels, out_channels, 3, 3),
        "bn2": bn_p(keys[3], out_channels),
        "w3": conv_w(keys[4], c_out4, out_channels, 1, 1),
        "bn3": bn_p(keys[5], c_out4),
        "ws": conv_w(keys[6], c_out4, in_channels, 1, 1),
        "bns": bn_p(keys[7], c_out4),
    }


def bottleneck_forward(x_nchw, params, in_channels, out_channels, stride):
    cm = out_channels
    c4 = out_channels * EXPANSION
    cin_p = _round_up(in_channels, 128)
    cm_p = _round_up(cm, 128)
    c4_p = _round_up(c4, 128)

    n, c, h, w = x_nchw.shape
    assert c == in_channels
    x = jnp.transpose(x_nchw, (0, 2, 3, 1))                       # NHWC
    x = jnp.pad(x, ((0, 0), (0, 0), (0, 0), (0, cin_p - in_channels)))

    s1, b1 = _fold_bn(*params["bn1"])
    s2, b2 = _fold_bn(*params["bn2"])
    s3, b3 = _fold_bn(*params["bn3"])

    # conv1 (1x1) + BN + ReLU; scale folded into weights, channels padded.
    w1 = params["w1"][:, :, 0, 0].T * s1[None, :]                 # (cin, cm)
    w1 = _pad2(w1, cin_p, cm_p)
    y1 = matmul_bias_act(x.reshape(-1, cin_p), w1, _pad1(b1, cm_p),
                         relu=True, out_dtype=jnp.bfloat16)
    y1 = y1.reshape(n, h, w, cm_p)

    # conv2 (3x3, stride, pad 1) + BN + ReLU via parity-plane tap reduction.
    w2 = jnp.transpose(params["w2"], (2, 3, 1, 0)) * s2[None, None, None, :]
    w2 = w2.reshape(9, cm, cm)
    w2 = jnp.pad(w2, ((0, 0), (0, cm_p - cm), (0, cm_p - cm)))
    y2, ho, wo = conv3x3_bn_relu(y1, w2, _pad1(b2, cm_p), stride)  # (n, ho*wo, cm_p)

    # shortcut
    if stride != 1 or in_channels != c4:
        ss, bs = _fold_bn(*params["bns"])
        ws = params["ws"][:, :, 0, 0].T * ss[None, :]              # (cin, c4)
        ws = _pad2(ws, cin_p, c4_p)
        x_sub = x[:, ::stride, ::stride, :].reshape(-1, cin_p)
        sc = matmul_bias_act(x_sub, ws, _pad1(bs, c4_p),
                             relu=False, out_dtype=jnp.float32)
    else:
        assert in_channels == c4, "identity shortcut requires in_channels == 4*out_channels"
        sc = x.reshape(-1, cin_p).astype(jnp.float32)              # cin_p == c4_p

    # conv3 (1x1) + BN + residual add + ReLU (fused).
    w3 = params["w3"][:, :, 0, 0].T * s3[None, :]                  # (cm, c4)
    w3 = _pad2(w3, cm_p, c4_p)
    out = matmul_bias_act(y2.reshape(-1, cm_p), w3, _pad1(b3, c4_p),
                          relu=True, res=sc, out_dtype=jnp.float32)
    out = out.reshape(n, ho, wo, c4_p)[:, :, :, :c4]
    return jnp.transpose(out, (0, 3, 1, 2))                        # NCHW


# --------------------------- pure-JAX reference ----------------------------- #

def _im2col_3x3(x_nhwc, stride):
    n, h, w, c = x_nhwc.shape
    xp = jnp.pad(x_nhwc, ((0, 0), (1, 1), (1, 1), (0, 0)))
    ho = (h + 2 - 3) // stride + 1
    wo = (w + 2 - 3) // stride + 1
    cols = []
    for dh in range(3):
        for dw in range(3):
            cols.append(xp[:, dh:dh + stride * ho:stride,
                           dw:dw + stride * wo:stride, :])
    return jnp.concatenate(cols, axis=-1), ho, wo


def reference_forward(x_nchw, params, in_channels, out_channels, stride):
    """Pure-JAX reference mirroring the same bf16-input / f32-accumulate math."""
    cm = out_channels
    c4 = out_channels * EXPANSION
    n, c, h, w = x_nchw.shape
    x = jnp.transpose(x_nchw, (0, 2, 3, 1))

    s1, b1 = _fold_bn(*params["bn1"])
    s2, b2 = _fold_bn(*params["bn2"])
    s3, b3 = _fold_bn(*params["bn3"])

    def mm(a, wt, bias):
        return jnp.dot(a.astype(jnp.bfloat16), wt.astype(jnp.bfloat16),
                       preferred_element_type=jnp.float32) + bias

    w1 = params["w1"][:, :, 0, 0].T * s1[None, :]
    y1 = jnp.maximum(mm(x.reshape(-1, in_channels), w1, b1), 0.0)
    y1 = y1.astype(jnp.bfloat16).reshape(n, h, w, cm)

    cols, ho, wo = _im2col_3x3(y1, stride)
    w2 = (jnp.transpose(params["w2"], (2, 3, 1, 0)) * s2).reshape(9 * cm, cm)
    y2 = jnp.maximum(mm(cols.reshape(-1, 9 * cm), w2, b2), 0.0)
    y2 = y2.astype(jnp.bfloat16)

    if stride != 1 or in_channels != c4:
        ss, bs = _fold_bn(*params["bns"])
        ws = params["ws"][:, :, 0, 0].T * ss[None, :]
        x_sub = x[:, ::stride, ::stride, :].reshape(-1, in_channels)
        sc = mm(x_sub, ws, bs)
    else:
        sc = x.reshape(-1, c4)

    w3 = params["w3"][:, :, 0, 0].T * s3[None, :]
    out = jnp.maximum(mm(y2, w3, b3) + sc, 0.0)
    out = out.reshape(n, ho, wo, c4)
    return jnp.transpose(out, (0, 3, 1, 2))


# --------------------------------- main ------------------------------------ #

if __name__ == "__main__":
    in_channels, out_channels, stride = 8, 8, 2
    N, H, W = 2, 16, 16

    key = jax.random.PRNGKey(0)
    kx, kp = jax.random.split(key)
    x = jax.random.normal(kx, (N, in_channels, H, W), jnp.float32)
    params = init_params(kp, in_channels, out_channels)

    fwd = jax.jit(bottleneck_forward, static_argnums=(2, 3, 4))
    out = jax.block_until_ready(fwd(x, params, in_channels, out_channels, stride))

    ref = reference_forward(x, params, in_channels, out_channels, stride)
    assert out.shape == (N, out_channels * EXPANSION, H // stride, W // stride)
    assert jnp.allclose(out, ref, atol=5e-2, rtol=5e-2), "mismatch vs JAX ref"

    print("KERNEL_OK")
</pallas_src>

<mosaic_0001>
module attributes {stable_mosaic.version = 11 : i64} {
  func.func @_mm_bias_kernel(%arg0: i32, %arg1: i32, %arg2: i32, %arg3: memref<256x128xbf16, #tpu.memory_space<vmem>>, %arg4: memref<128x128xbf16, #tpu.memory_space<vmem>>, %arg5: memref<1x128xf32, #tpu.memory_space<vmem>>, %arg6: memref<256x128xbf16, #tpu.memory_space<vmem>>, %arg7: memref<256x128xf32, #tpu.memory_space<vmem>>) attributes {dimension_semantics = [#tpu.dimension_semantics<parallel>, #tpu.dimension_semantics<parallel>, #tpu.dimension_semantics<arbitrary>], iteration_bounds = array<i64: 2, 1, 1>, scalar_prefetch = 0 : i64, scratch_operands = 1 : i64, tpu.core_type = #tpu.core_type<tc>, window_params = [{transform_indices = @transform_0, window_bounds = array<i64: 256, 128>}, {transform_indices = @transform_1, window_bounds = array<i64: 128, 128>}, {transform_indices = @transform_2, window_bounds = array<i64: 1, 128>}, {transform_indices = @transform_3, window_bounds = array<i64: 256, 128>}]} {
    %c0_i32 = arith.constant 0 : i32
    %0 = arith.cmpi eq, %arg2, %c0_i32 : i32
    %1 = arith.extui %0 : i1 to i32
    %c0_i32_0 = arith.constant 0 : i32
    %2 = arith.cmpi ne, %1, %c0_i32_0 : i32
    scf.if %2 {
      %cst_10 = arith.constant 0.000000e+00 : f32
      %12 = vector.broadcast %cst_10 : f32 to vector<256x128xf32>
      %c0_11 = arith.constant 0 : index
      %c0_12 = arith.constant 0 : index
      %13 = vector.load %arg7[%c0_11, %c0_12] : memref<256x128xf32, #tpu.memory_space<vmem>>, vector<256x128xf32>
      tpu.vector_store %arg7[%c0_11, %c0_12], %12 {strides = array<i32>} : memref<256x128xf32, #tpu.memory_space<vmem>>, vector<256x128xf32>,
    } else {
    }
    %c0 = arith.constant 0 : index
    %c0_1 = arith.constant 0 : index
    %3 = vector.load %arg7[%c0, %c0_1] : memref<256x128xf32, #tpu.memory_space<vmem>>, vector<256x128xf32>
    %c0_2 = arith.constant 0 : index
    %c0_3 = arith.constant 0 : index
    %4 = vector.load %arg3[%c0_2, %c0_3] : memref<256x128xbf16, #tpu.memory_space<vmem>>, vector<256x128xbf16>
    %c0_4 = arith.constant 0 : index
    %c0_5 = arith.constant 0 : index
    %5 = vector.load %arg4[%c0_4, %c0_5] : memref<128x128xbf16, #tpu.memory_space<vmem>>, vector<128x128xbf16>
    %cst = arith.constant dense<0.000000e+00> : vector<256x128xf32>
    %6 = tpu.matmul %4, %5, %cst {dimension_numbers = #tpu.dot_dimension_numbers<[1], [0], [0], [1], [0, 0, 1, 1], [], []>} : vector<256x128xbf16>, vector<128x128xbf16>, vector<256x128xf32> -> vector<256x128xf32>
    %7 = arith.addf %3, %6 : vector<256x128xf32>
    %c0_6 = arith.constant 0 : index
    %c0_7 = arith.constant 0 : index
    %8 = vector.load %arg7[%c0_6, %c0_7] : memref<256x128xf32, #tpu.memory_space<vmem>>, vector<256x128xf32>
    tpu.vector_store %arg7[%c0_6, %c0_7], %7 {strides = array<i32>} : memref<256x128xf32, #tpu.memory_space<vmem>>, vector<256x128xf32>,
    %c0_i32_8 = arith.constant 0 : i32
    %9 = arith.cmpi eq, %arg2, %c0_i32_8 : i32
    %10 = arith.extui %9 : i1 to i32
    %c0_i32_9 = arith.constant 0 : i32
    %11 = arith.cmpi ne, %10, %c0_i32_9 : i32
    scf.if %11 {
      %c0_10 = arith.constant 0 : index
      %c0_11 = arith.constant 0 : index
      %12 = vector.load %arg7[%c0_10, %c0_11] : memref<256x128xf32, #tpu.memory_space<vmem>>, vector<256x128xf32>
      %c0_12 = arith.constant 0 : index
      %c0_13 = arith.constant 0 : index
      %13 = vector.load %arg5[%c0_12, %c0_13] : memref<1x128xf32, #tpu.memory_space<vmem>>, vector<1x128xf32>
      %14 = vector.broadcast %13 : vector<1x128xf32> to vector<256x128xf32>
      %15 = arith.addf %12, %14 : vector<256x128xf32>
      %cst_14 = arith.constant 0.000000e+00 : f32
      %16 = vector.broadcast %cst_14 : f32 to vector<256x128xf32>
      %17 = arith.maximumf %15, %16 : vector<256x128xf32>
      %18 = arith.truncf %17 : vector<256x128xf32> to vector<256x128xbf16>
      %c0_15 = arith.constant 0 : index
      %c0_16 = arith.constant 0 : index
      %19 = vector.load %arg6[%c0_15, %c0_16] : memref<256x128xbf16, #tpu.memory_space<vmem>>, vector<256x128xbf16>
      tpu.vector_store %arg6[%c0_15, %c0_16], %18 {strides = array<i32>} : memref<256x128xbf16, #tpu.memory_space<vmem>>, vector<256x128xbf16>,
    } else {
    }
    return
  }
  func.func @transform_0(%arg0: i32, %arg1: i32, %arg2: i32) -> (i32, i32) {
    %c0_i32 = arith.constant 0 : i32
    return %arg0, %arg2 : i32, i32
  }
  func.func @transform_1(%arg0: i32, %arg1: i32, %arg2: i32) -> (i32, i32) {
    %c0_i32 = arith.constant 0 : i32
    return %arg2, %arg1 : i32, i32
  }
  func.func @transform_2(%arg0: i32, %arg1: i32, %arg2: i32) -> (i32, i32) {
    %c0_i32 = arith.constant 0 : i32
    %c0_i32_0 = arith.constant 0 : i32
    return %c0_i32, %arg1 : i32, i32
  }
  func.func @transform_3(%arg0: i32, %arg1: i32, %arg2: i32) -> (i32, i32) {
    %c0_i32 = arith.constant 0 : i32
    return %arg0, %arg1 : i32, i32
  }
}

module attributes {stable_mosaic.version = 11 : i64} {
  func.func @_conv3x3_kernel(%arg0: i32, %arg1: memref<1x4x9x9x128xbf16, #tpu.memory_space<vmem>>, %arg2: memref<9x128x128xbf16, #tpu.memory_space<vmem>>, %arg3: memref<1x128xf32, #tpu.memory_space<vmem>>, %arg4: memref<1x64x128xbf16, #tpu.memory_space<vmem>>) attributes {dimension_semantics = [#tpu.dimension_semantics<parallel>], iteration_bounds = array<i64: 2>, scalar_prefetch = 0 : i64, scratch_operands = 0 : i64, tpu.core_type = #tpu.core_type<tc>, window_params = [{transform_indices = @transform_0, window_bounds = array<i64: 1, 4, 9, 9, 128>}, {pipeline_mode = #tpu.pipeline_mode<synchronous>, transform_indices = @transform_1, window_bounds = array<i64: 9, 128, 128>}, {pipeline_mode = #tpu.pipeline_mode<synchronous>, transform_indices = @transform_2, window_bounds = array<i64: 1, 128>}, {transform_indices = @transform_3, window_bounds = array<i64: 1, 64, 128>}]} {
    %cst = arith.constant 0.000000e+00 : f32
    %0 = vector.broadcast %cst : f32 to vector<64x128xf32>
    %c0 = arith.constant 0 : index
    %c0_0 = arith.constant 0 : index
    %c0_1 = arith.constant 0 : index
    %c0_2 = arith.constant 0 : index
    %c0_3 = arith.constant 0 : index
    %1 = vector.load %arg1[%c0, %c0_0, %c0_1, %c0_2, %c0_3] : memref<1x4x9x9x128xbf16, #tpu.memory_space<vmem>>, vector<1x1x8x8x128xbf16>
    %2 = vector.shape_cast %1 : vector<1x1x8x8x128xbf16> to vector<8x8x128xbf16>
    %3 = vector.shape_cast %2 : vector<8x8x128xbf16> to vector<64x128xbf16>
    %c0_4 = arith.constant 0 : index
    %c0_5 = arith.constant 0 : index
    %c0_6 = arith.constant 0 : index
    %4 = vector.load %arg2[%c0_4, %c0_5, %c0_6] : memref<9x128x128xbf16, #tpu.memory_space<vmem>>, vector<1x128x128xbf16>
    %5 = vector.shape_cast %4 : vector<1x128x128xbf16> to vector<128x128xbf16>
    %cst_7 = arith.constant dense<0.000000e+00> : vector<64x128xf32>
    %6 = tpu.matmul %3, %5, %cst_7 {dimension_numbers = #tpu.dot_dimension_numbers<[1], [0], [0], [1], [0, 0, 1, 1], [], []>} : vector<64x128xbf16>, vector<128x128xbf16>, vector<64x128xf32> -> vector<64x128xf32>
    %7 = arith.addf %0, %6 : vector<64x128xf32>
    %c0_8 = arith.constant 0 : index
    %c1 = arith.constant 1 : index
    %c0_9 = arith.constant 0 : index
    %c0_10 = arith.constant 0 : index
    %c0_11 = arith.constant 0 : index
    %8 = vector.load %arg1[%c0_8, %c1, %c0_9, %c0_10, %c0_11] : memref<1x4x9x9x128xbf16, #tpu.memory_space<vmem>>, vector<1x1x8x8x128xbf16>
    %9 = vector.shape_cast %8 : vector<1x1x8x8x128xbf16> to vector<8x8x128xbf16>
    %10 = vector.shape_cast %9 : vector<8x8x128xbf16> to vector<64x128xbf16>
    %c1_12 = arith.constant 1 : index
    %c0_13 = arith.constant 0 : index
    %c0_14 = arith.constant 0 : index
    %11 = vector.load %arg2[%c1_12, %c0_13, %c0_14] : memref<9x128x128xbf16, #tpu.memory_space<vmem>>, vector<1x128x128xbf16>
    %12 = vector.shape_cast %11 : vector<1x128x128xbf16> to vector<128x128xbf16>
    %cst_15 = arith.constant dense<0.000000e+00> : vector<64x128xf32>
    %13 = tpu.matmul %10, %12, %cst_15 {dimension_numbers = #tpu.dot_dimension_numbers<[1], [0], [0], [1], [0, 0, 1, 1], [], []>} : vector<64x128xbf16>, vector<128x128xbf16>, vector<64x128xf32> -> vector<64x128xf32>
    %14 = arith.addf %7, %13 : vector<64x128xf32>
    %c0_16 = arith.constant 0 : index
    %c0_17 = arith.constant 0 : index
    %c0_18 = arith.constant 0 : index
    %c1_19 = arith.constant 1 : index
    %c0_20 = arith.constant 0 : index
    %15 = vector.load %arg1[%c0_16, %c0_17, %c0_18, %c1_19, %c0_20] : memref<1x4x9x9x128xbf16, #tpu.memory_space<vmem>>, vector<1x1x8x8x128xbf16>
    %16 = vector.shape_cast %15 : vector<1x1x8x8x128xbf16> to vector<8x8x128xbf16>
    %17 = vector.shape_cast %16 : vector<8x8x128xbf16> to vector<64x128xbf16>
    %c2 = arith.constant 2 : index
    %c0_21 = arith.constant 0 : index
    %c0_22 = arith.constant 0 : index
    %18 = vector.load %arg2[%c2, %c0_21, %c0_22] : memref<9x128x128xbf16, #tpu.memory_space<vmem>>, vector<1x128x128xbf16>
    %19 = vector.shape_cast %18 : vector<1x128x128xbf16> to vector<128x128xbf16>
    %cst_23 = arith.constant dense<0.000000e+00> : vector<64x128xf32>
    %20 = tpu.matmul %17, %19, %cst_23 {dimension_numbers = #tpu.dot_dimension_numbers<[1], [0], [0], [1], [0, 0, 1, 1], [], []>} : vector<64x128xbf16>, vector<128x128xbf16>, vector<64x128xf32> -> vector<64x128xf32>
    %21 = arith.addf %14, %20 : vector<64x128xf32>
    %c0_24 = arith.constant 0 : index
    %c2_25 = arith.constant 2 : index
    %c0_26 = arith.constant 0 : index
    %c0_27 = arith.constant 0 : index
    %c0_28 = arith.constant 0 : index
    %22 = vector.load %arg1[%c0_24, %c2_25, %c0_26, %c0_27, %c0_28] : memref<1x4x9x9x128xbf16, #tpu.memory_space<vmem>>, vector<1x1x8x8x128xbf16>
    %23 = vector.shape_cast %22 : vector<1x1x8x8x128xbf16> to vector<8x8x128xbf16>
    %24 = vector.shape_cast %23 : vector<8x8x128xbf16> to vector<64x128xbf16>
    %c3 = arith.constant 3 : index
    %c0_29 = arith.constant 0 : index
    %c0_30 = arith.constant 0 : index
    %25 = vector.load %arg2[%c3, %c0_29, %c0_30] : memref<9x128x128xbf16, #tpu.memory_space<vmem>>, vector<1x128x128xbf16>
    %26 = vector.shape_cast %25 : vector<1x128x128xbf16> to vector<128x128xbf16>
    %cst_31 = arith.constant dense<0.000000e+00> : vector<64x128xf32>
    %27 = tpu.matmul %24, %26, %cst_31 {dimension_numbers = #tpu.dot_dimension_numbers<[1], [0], [0], [1], [0, 0, 1, 1], [], []>} : vector<64x128xbf16>, vector<128x128xbf16>, vector<64x128xf32> -> vector<64x128xf32>
    %28 = arith.addf %21, %27 : vector<64x128xf32>
    %c0_32 = arith.constant 0 : index
    %c3_33 = arith.constant 3 : index
    %c0_34 = arith.constant 0 : index
    %c0_35 = arith.constant 0 : index
    %c0_36 = arith.constant 0 : index
    %29 = vector.load %arg1[%c0_32, %c3_33, %c0_34, %c0_35, %c0_36] : memref<1x4x9x9x128xbf16, #tpu.memory_space<vmem>>, vector<1x1x8x8x128xbf16>
    %30 = vector.shape_cast %29 : vector<1x1x8x8x128xbf16> to vector<8x8x128xbf16>
    %31 = vector.shape_cast %30 : vector<8x8x128xbf16> to vector<64x128xbf16>
    %c4 = arith.constant 4 : index
    %c0_37 = arith.constant 0 : index
    %c0_38 = arith.constant 0 : index
    %32 = vector.load %arg2[%c4, %c0_37, %c0_38] : memref<9x128x128xbf16, #tpu.memory_space<vmem>>, vector<1x128x128xbf16>
    %33 = vector.shape_cast %32 : vector<1x128x128xbf16> to vector<128x128xbf16>
    %cst_39 = arith.constant dense<0.000000e+00> : vector<64x128xf32>
    %34 = tpu.matmul %31, %33, %cst_39 {dimension_numbers = #tpu.dot_dimension_numbers<[1], [0], [0], [1], [0, 0, 1, 1], [], []>} : vector<64x128xbf16>, vector<128x128xbf16>, vector<64x128xf32> -> vector<64x128xf32>
    %35 = arith.addf %28, %34 : vector<64x128xf32>
    %c0_40 = arith.constant 0 : index
    %c2_41 = arith.constant 2 : index
    %c0_42 = arith.constant 0 : index
    %c1_43 = arith.constant 1 : index
    %c0_44 = arith.constant 0 : index
    %36 = vector.load %arg1[%c0_40, %c2_41, %c0_42, %c1_43, %c0_44] : memref<1x4x9x9x128xbf16, #tpu.memory_space<vmem>>, vector<1x1x8x8x128xbf16>
    %37 = vector.shape_cast %36 : vector<1x1x8x8x128xbf16> to vector<8x8x128xbf16>
    %38 = vector.shape_cast %37 : vector<8x8x128xbf16> to vector<64x128xbf16>
    %c5 = arith.constant 5 : index
    %c0_45 = arith.constant 0 : index
    %c0_46 = arith.constant 0 : index
    %39 = vector.load %arg2[%c5, %c0_45, %c0_46] : memref<9x128x128xbf16, #tpu.memory_space<vmem>>, vector<1x128x128xbf16>
    %40 = vector.shape_cast %39 : vector<1x128x128xbf16> to vector<128x128xbf16>
    %cst_47 = arith.constant dense<0.000000e+00> : vector<64x128xf32>
    %41 = tpu.matmul %38, %40, %cst_47 {dimension_numbers = #tpu.dot_dimension_numbers<[1], [0], [0], [1], [0, 0, 1, 1], [], []>} : vector<64x128xbf16>, vector<128x128xbf16>, vector<64x128xf32> -> vector<64x128xf32>
    %42 = arith.addf %35, %41 : vector<64x128xf32>
    %c0_48 = arith.constant 0 : index
    %c0_49 = arith.constant 0 : index
    %c1_50 = arith.constant 1 : index
    %c0_51 = arith.constant 0 : index
    %c0_52 = arith.constant 0 : index
    %43 = vector.load %arg1[%c0_48, %c0_49, %c1_50, %c0_51, %c0_52] : memref<1x4x9x9x128xbf16, #tpu.memory_space<vmem>>, vector<1x1x8x8x128xbf16>
    %44 = vector.shape_cast %43 : vector<1x1x8x8x128xbf16> to vector<8x8x128xbf16>
    %45 = vector.shape_cast %44 : vector<8x8x128xbf16> to vector<64x128xbf16>
    %c6 = arith.constant 6 : index
    %c0_53 = arith.constant 0 : index
    %c0_54 = arith.constant 0 : index
    %46 = vector.load %arg2[%c6, %c0_53, %c0_54] : memref<9x128x128xbf16, #tpu.memory_space<vmem>>, vector<1x128x128xbf16>
    %47 = vector.shape_cast %46 : vector<1x128x128xbf16> to vector<128x128xbf16>
    %cst_55 = arith.constant dense<0.000000e+00> : vector<64x128xf32>
    %48 = tpu.matmul %45, %47, %cst_55 {dimension_numbers = #tpu.dot_dimension_numbers<[1], [0], [0], [1], [0, 0, 1, 1], [], []>} : vector<64x128xbf16>, vector<128x128xbf16>, vector<64x128xf32> -> vector<64x128xf32>
    %49 = arith.addf %42, %48 : vector<64x128xf32>
    %c0_56 = arith.constant 0 : index
    %c1_57 = arith.constant 1 : index
    %c1_58 = arith.constant 1 : index
    %c0_59 = arith.constant 0 : index
    %c0_60 = arith.constant 0 : index
    %50 = vector.load %arg1[%c0_56, %c1_57, %c1_58, %c0_59, %c0_60] : memref<1x4x9x9x128xbf16, #tpu.memory_space<vmem>>, vector<1x1x8x8x128xbf16>
    %51 = vector.shape_cast %50 : vector<1x1x8x8x128xbf16> to vector<8x8x128xbf16>
    %52 = vector.shape_cast %51 : vector<8x8x128xbf16> to vector<64x128xbf16>
    %c7 = arith.constant 7 : index
    %c0_61 = arith.constant 0 : index
    %c0_62 = arith.constant 0 : index
    %53 = vector.load %arg2[%c7, %c0_61, %c0_62] : memref<9x128x128xbf16, #tpu.memory_space<vmem>>, vector<1x128x128xbf16>
    %54 = vector.shape_cast %53 : vector<1x128x128xbf16> to vector<128x128xbf16>
    %cst_63 = arith.constant dense<0.000000e+00> : vector<64x128xf32>
    %55 = tpu.matmul %52, %54, %cst_63 {dimension_numbers = #tpu.dot_dimension_numbers<[1], [0], [0], [1], [0, 0, 1, 1], [], []>} : vector<64x128xbf16>, vector<128x128xbf16>, vector<64x128xf32> -> vector<64x128xf32>
    %56 = arith.addf %49, %55 : vector<64x128xf32>
    %c0_64 = arith.constant 0 : index
    %c0_65 = arith.constant 0 : index
    %c1_66 = arith.constant 1 : index
    %c1_67 = arith.constant 1 : index
    %c0_68 = arith.constant 0 : index
    %57 = vector.load %arg1[%c0_64, %c0_65, %c1_66, %c1_67, %c0_68] : memref<1x4x9x9x128xbf16, #tpu.memory_space<vmem>>, vector<1x1x8x8x128xbf16>
    %58 = vector.shape_cast %57 : vector<1x1x8x8x128xbf16> to vector<8x8x128xbf16>
    %59 = vector.shape_cast %58 : vector<8x8x128xbf16> to vector<64x128xbf16>
    %c8 = arith.constant 8 : index
    %c0_69 = arith.constant 0 : index
    %c0_70 = arith.constant 0 : index
    %60 = vector.load %arg2[%c8, %c0_69, %c0_70] : memref<9x128x128xbf16, #tpu.memory_space<vmem>>, vector<1x128x128xbf16>
    %61 = vector.shape_cast %60 : vector<1x128x128xbf16> to vector<128x128xbf16>
    %cst_71 = arith.constant dense<0.000000e+00> : vector<64x128xf32>
    %62 = tpu.matmul %59, %61, %cst_71 {dimension_numbers = #tpu.dot_dimension_numbers<[1], [0], [0], [1], [0, 0, 1, 1], [], []>} : vector<64x128xbf16>, vector<128x128xbf16>, vector<64x128xf32> -> vector<64x128xf32>
    %63 = arith.addf %56, %62 : vector<64x128xf32>
    %c0_72 = arith.constant 0 : index
    %c0_73 = arith.constant 0 : index
    %64 = vector.load %arg3[%c0_72, %c0_73] : memref<1x128xf32, #tpu.memory_space<vmem>>, vector<1x128xf32>
    %65 = vector.broadcast %64 : vector<1x128xf32> to vector<64x128xf32>
    %66 = arith.addf %63, %65 : vector<64x128xf32>
    %cst_74 = arith.constant 0.000000e+00 : f32
    %67 = vector.broadcast %cst_74 : f32 to vector<64x128xf32>
    %68 = arith.maximumf %66, %67 : vector<64x128xf32>
    %69 = arith.truncf %68 : vector<64x128xf32> to vector<64x128xbf16>
    %c0_75 = arith.constant 0 : index
    %c0_76 = arith.constant 0 : index
    %c0_77 = arith.constant 0 : index
    %70 = vector.load %arg4[%c0_75, %c0_76, %c0_77] : memref<1x64x128xbf16, #tpu.memory_space<vmem>>, vector<1x64x128xbf16>
    %71 = vector.shape_cast %70 : vector<1x64x128xbf16> to vector<64x128xbf16>
    %72 = vector.shape_cast %69 : vector<64x128xbf16> to vector<1x64x128xbf16>
    tpu.vector_store %arg4[%c0_75, %c0_76, %c0_77], %72 {strides = array<i32>} : memref<1x64x128xbf16, #tpu.memory_space<vmem>>, vector<1x64x128xbf16>,
    return
  }
  func.func @transform_0(%arg0: i32) -> (i32, i32, i32, i32, i32) {
    %c0_i32 = arith.constant 0 : i32
    %c0_i32_0 = arith.constant 0 : i32
    %c0_i32_1 = arith.constant 0 : i32
    %c0_i32_2 = arith.constant 0 : i32
    %c0_i32_3 = arith.constant 0 : i32
    return %arg0, %c0_i32, %c0_i32_0, %c0_i32_1, %c0_i32_2 : i32, i32, i32, i32, i32
  }
  func.func @transform_1(%arg0: i32) -> (i32, i32, i32) {
    %c0_i32 = arith.constant 0 : i32
    %c0_i32_0 = arith.constant 0 : i32
    %c0_i32_1 = arith.constant 0 : i32
    %c0_i32_2 = arith.constant 0 : i32
    return %c0_i32, %c0_i32_0, %c0_i32_1 : i32, i32, i32
  }
  func.func @transform_2(%arg0: i32) -> (i32, i32) {
    %c0_i32 = arith.constant 0 : i32
    %c0_i32_0 = arith.constant 0 : i32
    %c0_i32_1 = arith.constant 0 : i32
    return %c0_i32, %c0_i32_0 : i32, i32
  }
  func.func @transform_3(%arg0: i32) -> (i32, i32, i32) {
    %c0_i32 = arith.constant 0 : i32
    %c0_i32_0 = arith.constant 0 : i32
    %c0_i32_1 = arith.constant 0 : i32
    return %arg0, %c0_i32, %c0_i32_0 : i32, i32, i32
  }
}

module attributes {stable_mosaic.version = 11 : i64} {
  func.func @_mm_bias_kernel(%arg0: i32, %arg1: i32, %arg2: i32, %arg3: memref<128x128xbf16, #tpu.memory_space<vmem>>, %arg4: memref<128x128xbf16, #tpu.memory_space<vmem>>, %arg5: memref<1x128xf32, #tpu.memory_space<vmem>>, %arg6: memref<128x128xf32, #tpu.memory_space<vmem>>, %arg7: memref<128x128xf32, #tpu.memory_space<vmem>>) attributes {dimension_semantics = [#tpu.dimension_semantics<parallel>, #tpu.dimension_semantics<parallel>, #tpu.dimension_semantics<arbitrary>], iteration_bounds = array<i64: 1, 1, 1>, scalar_prefetch = 0 : i64, scratch_operands = 1 : i64, tpu.core_type = #tpu.core_type<tc>, window_params = [{transform_indices = @transform_0, window_bounds = array<i64: 128, 128>}, {transform_indices = @transform_1, window_bounds = array<i64: 128, 128>}, {transform_indices = @transform_2, window_bounds = array<i64: 1, 128>}, {transform_indices = @transform_3, window_bounds = array<i64: 128, 128>}]} {
    %c0_i32 = arith.constant 0 : i32
    %0 = arith.cmpi eq, %arg2, %c0_i32 : i32
    %1 = arith.extui %0 : i1 to i32
    %c0_i32_0 = arith.constant 0 : i32
    %2 = arith.cmpi ne, %1, %c0_i32_0 : i32
    scf.if %2 {
      %cst_10 = arith.constant 0.000000e+00 : f32
      %12 = vector.broadcast %cst_10 : f32 to vector<128x128xf32>
      %c0_11 = arith.constant 0 : index
      %c0_12 = arith.constant 0 : index
      %13 = vector.load %arg7[%c0_11, %c0_12] : memref<128x128xf32, #tpu.memory_space<vmem>>, vector<128x128xf32>
      tpu.vector_store %arg7[%c0_11, %c0_12], %12 {strides = array<i32>} : memref<128x128xf32, #tpu.memory_space<vmem>>, vector<128x128xf32>,
    } else {
    }
    %c0 = arith.constant 0 : index
    %c0_1 = arith.constant 0 : index
    %3 = vector.load %arg7[%c0, %c0_1] : memref<128x128xf32, #tpu.memory_space<vmem>>, vector<128x128xf32>
    %c0_2 = arith.constant 0 : index
    %c0_3 = arith.constant 0 : index
    %4 = vector.load %arg3[%c0_2, %c0_3] : memref<128x128xbf16, #tpu.memory_space<vmem>>, vector<128x128xbf16>
    %c0_4 = arith.constant 0 : index
    %c0_5 = arith.constant 0 : index
    %5 = vector.load %arg4[%c0_4, %c0_5] : memref<128x128xbf16, #tpu.memory_space<vmem>>, vector<128x128xbf16>
    %cst = arith.constant dense<0.000000e+00> : vector<128x128xf32>
    %6 = tpu.matmul %4, %5, %cst {dimension_numbers = #tpu.dot_dimension_numbers<[1], [0], [0], [1], [0, 0, 1, 1], [], []>} : vector<128x128xbf16>, vector<128x128xbf16>, vector<128x128xf32> -> vector<128x128xf32>
    %7 = arith.addf %3, %6 : vector<128x128xf32>
    %c0_6 = arith.constant 0 : index
    %c0_7 = arith.constant 0 : index
    %8 = vector.load %arg7[%c0_6, %c0_7] : memref<128x128xf32, #tpu.memory_space<vmem>>, vector<128x128xf32>
    tpu.vector_store %arg7[%c0_6, %c0_7], %7 {strides = array<i32>} : memref<128x128xf32, #tpu.memory_space<vmem>>, vector<128x128xf32>,
    %c0_i32_8 = arith.constant 0 : i32
    %9 = arith.cmpi eq, %arg2, %c0_i32_8 : i32
    %10 = arith.extui %9 : i1 to i32
    %c0_i32_9 = arith.constant 0 : i32
    %11 = arith.cmpi ne, %10, %c0_i32_9 : i32
    scf.if %11 {
      %c0_10 = arith.constant 0 : index
      %c0_11 = arith.constant 0 : index
      %12 = vector.load %arg7[%c0_10, %c0_11] : memref<128x128xf32, #tpu.memory_space<vmem>>, vector<128x128xf32>
      %c0_12 = arith.constant 0 : index
      %c0_13 = arith.constant 0 : index
      %13 = vector.load %arg5[%c0_12, %c0_13] : memref<1x128xf32, #tpu.memory_space<vmem>>, vector<1x128xf32>
      %14 = vector.broadcast %13 : vector<1x128xf32> to vector<128x128xf32>
      %15 = arith.addf %12, %14 : vector<128x128xf32>
      %c0_14 = arith.constant 0 : index
      %c0_15 = arith.constant 0 : index
      %16 = vector.load %arg6[%c0_14, %c0_15] : memref<128x128xf32, #tpu.memory_space<vmem>>, vector<128x128xf32>
      tpu.vector_store %arg6[%c0_14, %c0_15], %15 {strides = array<i32>} : memref<128x128xf32, #tpu.memory_space<vmem>>, vector<128x128xf32>,
    } else {
    }
    return
  }
  func.func @transform_0(%arg0: i32, %arg1: i32, %arg2: i32) -> (i32, i32) {
    %c0_i32 = arith.constant 0 : i32
    return %arg0, %arg2 : i32, i32
  }
  func.func @transform_1(%arg0: i32, %arg1: i32, %arg2: i32) -> (i32, i32) {
    %c0_i32 = arith.constant 0 : i32
    return %arg2, %arg1 : i32, i32
  }
  func.func @transform_2(%arg0: i32, %arg1: i32, %arg2: i32) -> (i32, i32) {
    %c0_i32 = arith.constant 0 : i32
    %c0_i32_0 = arith.constant 0 : i32
    return %c0_i32, %arg1 : i32, i32
  }
  func.func @transform_3(%arg0: i32, %arg1: i32, %arg2: i32) -> (i32, i32) {
    %c0_i32 = arith.constant 0 : i32
    return %arg0, %arg1 : i32, i32
  }
}

module attributes {stable_mosaic.version = 11 : i64} {
  func.func @_mm_bias_res_kernel(%arg0: i32, %arg1: i32, %arg2: i32, %arg3: memref<128x128xbf16, #tpu.memory_space<vmem>>, %arg4: memref<128x128xbf16, #tpu.memory_space<vmem>>, %arg5: memref<1x128xf32, #tpu.memory_space<vmem>>, %arg6: memref<128x128xf32, #tpu.memory_space<vmem>>, %arg7: memref<128x128xf32, #tpu.memory_space<vmem>>, %arg8: memref<128x128xf32, #tpu.memory_space<vmem>>) attributes {dimension_semantics = [#tpu.dimension_semantics<parallel>, #tpu.dimension_semantics<parallel>, #tpu.dimension_semantics<arbitrary>], iteration_bounds = array<i64: 1, 1, 1>, scalar_prefetch = 0 : i64, scratch_operands = 1 : i64, tpu.core_type = #tpu.core_type<tc>, window_params = [{transform_indices = @transform_0, window_bounds = array<i64: 128, 128>}, {transform_indices = @transform_1, window_bounds = array<i64: 128, 128>}, {transform_indices = @transform_2, window_bounds = array<i64: 1, 128>}, {transform_indices = @transform_3, window_bounds = array<i64: 128, 128>}, {transform_indices = @transform_4, window_bounds = array<i64: 128, 128>}]} {
    %c0_i32 = arith.constant 0 : i32
    %0 = arith.cmpi eq, %arg2, %c0_i32 : i32
    %1 = arith.extui %0 : i1 to i32
    %c0_i32_0 = arith.constant 0 : i32
    %2 = arith.cmpi ne, %1, %c0_i32_0 : i32
    scf.if %2 {
      %cst_10 = arith.constant 0.000000e+00 : f32
      %12 = vector.broadcast %cst_10 : f32 to vector<128x128xf32>
      %c0_11 = arith.constant 0 : index
      %c0_12 = arith.constant 0 : index
      %13 = vector.load %arg8[%c0_11, %c0_12] : memref<128x128xf32, #tpu.memory_space<vmem>>, vector<128x128xf32>
      tpu.vector_store %arg8[%c0_11, %c0_12], %12 {strides = array<i32>} : memref<128x128xf32, #tpu.memory_space<vmem>>, vector<128x128xf32>,
    } else {
    }
    %c0 = arith.constant 0 : index
    %c0_1 = arith.constant 0 : index
    %3 = vector.load %arg8[%c0, %c0_1] : memref<128x128xf32, #tpu.memory_space<vmem>>, vector<128x128xf32>
    %c0_2 = arith.constant 0 : index
    %c0_3 = arith.constant 0 : index
    %4 = vector.load %arg3[%c0_2, %c0_3] : memref<128x128xbf16, #tpu.memory_space<vmem>>, vector<128x128xbf16>
    %c0_4 = arith.constant 0 : index
    %c0_5 = arith.constant 0 : index
    %5 = vector.load %arg4[%c0_4, %c0_5] : memref<128x128xbf16, #tpu.memory_space<vmem>>, vector<128x128xbf16>
    %cst = arith.constant dense<0.000000e+00> : vector<128x128xf32>
    %6 = tpu.matmul %4, %5, %cst {dimension_numbers = #tpu.dot_dimension_numbers<[1], [0], [0], [1], [0, 0, 1, 1], [], []>} : vector<128x128xbf16>, vector<128x128xbf16>, vector<128x128xf32> -> vector<128x128xf32>
    %7 = arith.addf %3, %6 : vector<128x128xf32>
    %c0_6 = arith.constant 0 : index
    %c0_7 = arith.constant 0 : index
    %8 = vector.load %arg8[%c0_6, %c0_7] : memref<128x128xf32, #tpu.memory_space<vmem>>, vector<128x128xf32>
    tpu.vector_store %arg8[%c0_6, %c0_7], %7 {strides = array<i32>} : memref<128x128xf32, #tpu.memory_space<vmem>>, vector<128x128xf32>,
    %c0_i32_8 = arith.constant 0 : i32
    %9 = arith.cmpi eq, %arg2, %c0_i32_8 : i32
    %10 = arith.extui %9 : i1 to i32
    %c0_i32_9 = arith.constant 0 : i32
    %11 = arith.cmpi ne, %10, %c0_i32_9 : i32
    scf.if %11 {
      %c0_10 = arith.constant 0 : index
      %c0_11 = arith.constant 0 : index
      %12 = vector.load %arg8[%c0_10, %c0_11] : memref<128x128xf32, #tpu.memory_space<vmem>>, vector<128x128xf32>
      %c0_12 = arith.constant 0 : index
      %c0_13 = arith.constant 0 : index
      %13 = vector.load %arg5[%c0_12, %c0_13] : memref<1x128xf32, #tpu.memory_space<vmem>>, vector<1x128xf32>
      %14 = vector.broadcast %13 : vector<1x128xf32> to vector<128x128xf32>
      %15 = arith.addf %12, %14 : vector<128x128xf32>
      %c0_14 = arith.constant 0 : index
      %c0_15 = arith.constant 0 : index
      %16 = vector.load %arg6[%c0_14, %c0_15] : memref<128x128xf32, #tpu.memory_space<vmem>>, vector<128x128xf32>
      %17 = arith.addf %15, %16 : vector<128x128xf32>
      %cst_16 = arith.constant 0.000000e+00 : f32
      %18 = vector.broadcast %cst_16 : f32 to vector<128x128xf32>
      %19 = arith.maximumf %17, %18 : vector<128x128xf32>
      %c0_17 = arith.constant 0 : index
      %c0_18 = arith.constant 0 : index
      %20 = vector.load %arg7[%c0_17, %c0_18] : memref<128x128xf32, #tpu.memory_space<vmem>>, vector<128x128xf32>
      tpu.vector_store %arg7[%c0_17, %c0_18], %19 {strides = array<i32>} : memref<128x128xf32, #tpu.memory_space<vmem>>, vector<128x128xf32>,
    } else {
    }
    return
  }
  func.func @transform_0(%arg0: i32, %arg1: i32, %arg2: i32) -> (i32, i32) {
    %c0_i32 = arith.constant 0 : i32
    return %arg0, %arg2 : i32, i32
  }
  func.func @transform_1(%arg0: i32, %arg1: i32, %arg2: i32) -> (i32, i32) {
    %c0_i32 = arith.constant 0 : i32
    return %arg2, %arg1 : i32, i32
  }
  func.func @transform_2(%arg0: i32, %arg1: i32, %arg2: i32) -> (i32, i32) {
    %c0_i32 = arith.constant 0 : i32
    %c0_i32_0 = arith.constant 0 : i32
    return %c0_i32, %arg1 : i32, i32
  }
  func.func @transform_3(%arg0: i32, %arg1: i32, %arg2: i32) -> (i32, i32) {
    %c0_i32 = arith.constant 0 : i32
    return %arg0, %arg1 : i32, i32
  }
  func.func @transform_4(%arg0: i32, %arg1: i32, %arg2: i32) -> (i32, i32) {
    %c0_i32 = arith.constant 0 : i32
    return %arg0, %arg1 : i32, i32
  }
}

</mosaic_0001>

<llo_original>
// kernel: bottleneck_forward.4
$region0: #{bottleneck_forward.4}
  #allocation0 [shape = 'u32[]', space=smem, size = 0x4, offset = 0x4, fixed_abs, tag = 'smem constant byte address 0x4 - core index']
  #allocation1 [shape = 'u32[144,128]{1,0:T(1,128)}', space=vmem, size = 0x12000, scoped, tag = 'internal scratch']
  #allocation2 [shape = 'f32[256,128]{1,0:T(8,128)}', space=vmem, size = 0x20000, scoped, tag = 'scratch operand']
  %s0 = inlined_call_operand.vmem [shape: bf16[512,128], index: 0, kind: input, shape index: {}]
  %s1 = inlined_call_operand.vmem [shape: bf16[128,128], index: 1, kind: input, shape index: {}]
  %s2 = inlined_call_operand.vmem [shape: f32[1,128], index: 2, kind: input, shape index: {}]
  %s3 = inlined_call_operand.vmem [shape: bf16[512,128], index: 3, kind: output, shape index: {}]
  %s4 = sld [smem:[#allocation0]]
  $region53: #{bottleneck_forward.4} parent=0
    _
  %s6 = ssub.s32 1, %s4
  %s7 = scalar_select 0, %s6, %s4
  loop: start=0, step=1, limit=4
  $region2: #{bottleneck_forward.4} parent=0 // loop_pre_header
    _
  $region3: #{bottleneck_forward.4} parent=0 // loop_header
    %s9 = sphi 0, %s13
    %p10 = scmp.ge.s32.totalorder %s9, 4
    %s16 = sphi 0, %s35
    %s17 = sphi 0, %s31
    %s18 = sphi 0, %s27
    %s19 = sphi 0, %s16
    %s20 = sphi 0, %s17
    %s21 = sphi 0, %s18
    %s22 = sphi 0, %s19
    %s23 = sphi 0, %s20
    %s24 = sphi 0, %s21
    %s40 = sphi 0, %s42
    %s43 = sphi 0, %s40
    %s44 = sphi 0, %s43
    %s60 = sphi 0, %s44
    %s68 = sphi 0, %s70
    %s71 = sphi 0, %s68
    %s72 = sphi 0, %s71
    %s88 = sphi 0, %s72
    %s94 = sphi 0, %s96
    %s97 = sphi 0, %s94
    %s98 = sphi 0, %s97
    %s114 = sphi 0, %s98
    %s122 = sphi 0, %s124
    %s125 = sphi 0, %s122
    %s126 = sphi 0, %s125
    %s142 = sphi 0, %s126
  $region4: #{bottleneck_forward.4} parent=0 // loop_header_branch
    %12 = sbr.rel (%p10) target = $region8
  $region5: #{bottleneck_forward.4} parent=0 // loop_body
    %s14 = ssub.s32 %s9, 1
    %s15 = ssub.s32 %s9, 2
    %s25 = sadd.s32 1, %s18
    %p26 = scmp.ge.s32.totalorder %s25, 1
    %s27 = scalar_select %p26, 0, %s25
    %s28 = sadd.s32 1, %s17
    %s29 = scalar_select %p26, %s28, %s17
    %p30 = scmp.ge.s32.totalorder %s29, 1
    %s31 = scalar_select %p30, 0, %s29
    %s32 = sadd.s32 1, %s16
    %s33 = scalar_select %p30, %s32, %s16
    %p34 = scmp.ge.s32.totalorder %s33, 2
    %s35 = scalar_select %p34, 0, %s33
    %s36 = ssub.s32 %s16, %s35
    %s37 = ssub.s32 %s18, %s27
    %s38 = sor.u32 %s36, %s37
    %p39 = scmp.eq.s32.totalorder %s38, 0
    %s41 = sadd.s32 %s40, 1
    %s42 = scalar_select %p39, %s40, %s41
    %p45 = pneg %p39
    %p46 = scmp.eq.s32.totalorder %s9, 1
    %p47 = por %p45, %p46
    %p48 = scmp.ne.s32.totalorder %s40, %s43
    %p49 = scmp.eq.s32.totalorder %s9, 0
    %p50 = por %p48, %p49
    %p51 = scmp.ne.s32.totalorder %s40, %s43
    %p52 = scmp.eq.s32.totalorder %s14, 1
    %p53 = por %p51, %p52
    %p54 = scmp.ne.s32.totalorder %s43, %s44
    %p55 = scmp.eq.s32.totalorder %s14, 0
    %p56 = por %p54, %p55
    %p57 = scmp.ne.s32.totalorder %s43, %s44
    %p58 = scmp.eq.s32.totalorder %s15, 1
    %p59 = por %p57, %p58
    %p61 = scmp.ne.s32.totalorder %s44, %s60
    %p62 = scmp.eq.s32.totalorder %s15, 0
    %p63 = por %p61, %p62
    %s64 = ssub.s32 %s18, %s27
    %s65 = ssub.s32 %s17, %s31
    %s66 = sor.u32 %s64, %s65
    %p67 = scmp.eq.s32.totalorder %s66, 0
    %s69 = sadd.s32 %s68, 1
    %s70 = scalar_select %p67, %s68, %s69
    %p73 = pneg %p67
    %p74 = scmp.eq.s32.totalorder %s9, 1
    %p75 = por %p73, %p74
    %p76 = scmp.ne.s32.totalorder %s68, %s71
    %p77 = scmp.eq.s32.totalorder %s9, 0
    %p78 = por %p76, %p77
    %p79 = scmp.ne.s32.totalorder %s68, %s71
    %p80 = scmp.eq.s32.totalorder %s14, 1
    %p81 = por %p79, %p80
    %p82 = scmp.ne.s32.totalorder %s71, %s72
    %p83 = scmp.eq.s32.totalorder %s14, 0
    %p84 = por %p82, %p83
    %p85 = scmp.ne.s32.totalorder %s71, %s72
    %p86 = scmp.eq.s32.totalorder %s15, 1
    %p87 = por %p85, %p86
    %p89 = scmp.ne.s32.totalorder %s72, %s88
    %p90 = scmp.eq.s32.totalorder %s15, 0
    %p91 = por %p89, %p90
    %s92 = ssub.s32 %s17, %s31
    %p93 = scmp.eq.s32.totalorder %s92, 0
    %s95 = sadd.s32 %s94, 1
    %s96 = scalar_select %p93, %s94, %s95
    %p99 = pneg %p93
    %p100 = scmp.eq.s32.totalorder %s9, 1
    %p101 = por %p99, %p100
    %p102 = scmp.ne.s32.totalorder %s94, %s97
    %p103 = scmp.eq.s32.totalorder %s9, 0
    %p104 = por %p102, %p103
    %p105 = scmp.ne.s32.totalorder %s94, %s97
    %p106 = scmp.eq.s32.totalorder %s14, 1
    %p107 = por %p105, %p106
    %p108 = scmp.ne.s32.totalorder %s97, %s98
    %p109 = scmp.eq.s32.totalorder %s14, 0
    %p110 = por %p108, %p109
    %p111 = scmp.ne.s32.totalorder %s97, %s98
    %p112 = scmp.eq.s32.totalorder %s15, 1
    %p113 = por %p111, %p112
    %p115 = scmp.ne.s32.totalorder %s98, %s114
    %p116 = scmp.eq.s32.totalorder %s15, 0
    %p117 = por %p115, %p116
    %s118 = ssub.s32 %s16, %s35
    %s119 = ssub.s32 %s17, %s31
    %s120 = sor.u32 %s118, %s119
    %p121 = scmp.eq.s32.totalorder %s120, 0
    %s123 = sadd.s32 %s122, 1
    %s124 = scalar_select %p121, %s122, %s123
    %p127 = pneg %p121
    %p128 = scmp.eq.s32.totalorder %s9, 1
    %p129 = por %p127, %p128
    %p130 = scmp.ne.s32.totalorder %s122, %s125
    %p131 = scmp.eq.s32.totalorder %s9, 0
    %p132 = por %p130, %p131
    %p133 = scmp.ne.s32.totalorder %s122, %s125
    %p134 = scmp.eq.s32.totalorder %s14, 1
    %p135 = por %p133, %p134
    %p136 = scmp.ne.s32.totalorder %s125, %s126
    %p137 = scmp.eq.s32.totalorder %s14, 0
    %p138 = por %p136, %p137
    %p139 = scmp.ne.s32.totalorder %s125, %s126
    %p140 = scmp.eq.s32.totalorder %s15, 1
    %p141 = por %p139, %p140
    %p143 = scmp.ne.s32.totalorder %s126, %s142
    %p144 = scmp.eq.s32.totalorder %s15, 0
    %p145 = por %p143, %p144
    %p146 = scmp.le.s32.totalorder 1, %s9
    %p147 = scmp.lt.s32.totalorder %s9, 3
    %p148 = pnand %p146, %p147
    %p149 = pneg %p148
    // Predicated region
    $region9: #{bottleneck_forward.4} parent=5 // pred_check
      _
    $region10: #{bottleneck_forward.4} parent=5 // pred_check_branch
      %151 = sbr.rel (%p148) target = $region12
    $region11: #{bottleneck_forward.4} parent=5 // pred_region
      %s152 = ssub.s32 %s9, 1
      // Predicated region
      $region13: #{bottleneck_forward.4} parent=11 // pred_check
        %p153 = pneg %p84
      $region14: #{bottleneck_forward.4} parent=11 // pred_check_branch
        %155 = sbr.rel (%p153) target = $region16
      $region15: #{bottleneck_forward.4} parent=11 // pred_region
        %s156 = smul.u32 16, %s21
        %p157 = scmp.lt.s32.totalorder %s156, 15
        %s158 = scalar_select %p157, %s156, 15
        %p159 = scmp.lt.s32.totalorder %s20, 0
        %s160 = scalar_select %p159, %s20, 0
        %s161 = sadd.s32 %s160, %s158
        %s162 = smul.addr %s161, 4
        %s163 = scalar_lea.vmem %s1, %s162
        %s164 = smul.u32 16, %s21
      $region16: #{bottleneck_forward.4} parent=11 // pred_fallthru
        _
      // Predicated region
      $region17: #{bottleneck_forward.4} parent=11 // pred_check
        %p165 = pneg %p110
      $region18: #{bottleneck_forward.4} parent=11 // pred_check_branch
        %167 = sbr.rel (%p165) target = $region20
      $region19: #{bottleneck_forward.4} parent=11 // pred_region
        %p168 = scmp.lt.s32.totalorder %s20, 0
        %s169 = scalar_select %p168, %s20, 0
        %s170 = scalar_lea.vmem %s2, %s169
      $region20: #{bottleneck_forward.4} parent=11 // pred_fallthru
        _
    $region12: #{bottleneck_forward.4} parent=5 // pred_fallthru
      _
    %p171 = scmp.lt.s32.totalorder %s9, 2
    // Predicated region
    $region21: #{bottleneck_forward.4} parent=5 // pred_check
      %p172 = pneg %p171
    $region22: #{bottleneck_forward.4} parent=5 // pred_check_branch
      %174 = sbr.rel (%p172) target = $region24
    $region23: #{bottleneck_forward.4} parent=5 // pred_region
      // Predicated region
      $region25: #{bottleneck_forward.4} parent=23 // pred_check
        %p175 = pneg %p50
      $region26: #{bottleneck_forward.4} parent=23 // pred_check_branch
        %177 = sbr.rel (%p175) target = $region28
      $region27: #{bottleneck_forward.4} parent=23 // pred_region
        %s178 = smul.u32 32, %s16
        %p179 = scmp.lt.s32.totalorder %s178, 63
        %s180 = scalar_select %p179, %s178, 63
        %p181 = scmp.lt.s32.totalorder %s18, 0
        %s182 = scalar_select %p181, %s18, 0
        %s183 = sadd.s32 %s182, %s180
        %s184 = smul.addr %s183, 4
        %s185 = scalar_lea.vmem %s0, %s184
        %s186 = smul.u32 32, %s16
      $region28: #{bottleneck_forward.4} parent=23 // pred_fallthru
        _
    $region24: #{bottleneck_forward.4} parent=5 // pred_fallthru
      _
    %p187 = scmp.le.s32.totalorder 1, %s9
    %p188 = scmp.lt.s32.totalorder %s9, 3
    %p189 = pnand %p187, %p188
    %p190 = pneg %p189
    // Predicated region
    $region29: #{bottleneck_forward.4} parent=5 // pred_check
      _
    $region30: #{bottleneck_forward.4} parent=5 // pred_check_branch
      %192 = sbr.rel (%p189) target = $region32
    $region31: #{bottleneck_forward.4} parent=5 // pred_region
      %s193 = ssub.s32 %s9, 1
      %s194 = smul.u32 32, %s19
      %p195 = scmp.lt.s32.totalorder %s194, 63
      %s196 = scalar_select %p195, %s194, 63
      %p197 = scmp.lt.s32.totalorder %s21, 0
      %s198 = scalar_select %p197, %s21, 0
      %s199 = sadd.s32 %s198, %s196
      %s200 = smul.addr %s199, 4
      %s201 = scalar_lea.vmem %s0, %s200
      %p202 = pneg %p56
      %p203 = pneg %p53
      %s204 = smul.u32 16, %s21
      %p205 = scmp.lt.s32.totalorder %s204, 15
      %s206 = scalar_select %p205, %s204, 15
      %p207 = scmp.lt.s32.totalorder %s20, 0
      %s208 = scalar_select %p207, %s20, 0
      %s209 = sadd.s32 %s208, %s206
      %s210 = smul.addr %s209, 4
      %s211 = scalar_lea.vmem %s1, %s210
      %p212 = pneg %p84
      %p213 = pneg %p81
      %p214 = scmp.lt.s32.totalorder %s20, 0
      %s215 = scalar_select %p214, %s20, 0
      %s216 = scalar_lea.vmem %s2, %s215
      %p217 = pneg %p110
      %p218 = pneg %p107
      %p219 = pneg %p138
      %p220 = pneg %p135
      %s221 = smul.u32 32, %s19
      %p222 = scmp.lt.s32.totalorder %s221, 63
      %s223 = scalar_select %p222, %s221, 63
      %p224 = scmp.lt.s32.totalorder %s20, 0
      %s225 = scalar_select %p224, %s20, 0
      %s226 = sadd.s32 %s225, %s223
      %s227 = smul.addr %s226, 4
      %s228 = scalar_lea.vmem %s3, %s227
      %s229 = smul.u32 32, %s19
      %p230 = scmp.lt.s32.totalorder %s229, 63
      %s231 = scalar_select %p230, %s229, 63
      %p232 = scmp.lt.s32.totalorder %s21, 0
      %s233 = scalar_select %p232, %s21, 0
      %s234 = sadd.s32 %s233, %s231
      %s235 = smul.addr %s234, 4
      %s236 = scalar_lea.vmem %s0, %s235
      %s237 = smul.u32 32, %s19
      %s238 = smul.u32 16, %s21
      %p239 = scmp.lt.s32.totalorder %s238, 15
      %s240 = scalar_select %p239, %s238, 15
      %p241 = scmp.lt.s32.totalorder %s20, 0
      %s242 = scalar_select %p241, %s20, 0
      %s243 = sadd.s32 %s242, %s240
      %s244 = smul.addr %s243, 4
      %s245 = scalar_lea.vmem %s1, %s244
      %s246 = smul.u32 16, %s21
      %p247 = scmp.lt.s32.totalorder %s20, 0
      %s248 = scalar_select %p247, %s20, 0
      %s249 = scalar_lea.vmem %s2, %s248
      %s250 = smul.u32 32, %s19
      %p251 = scmp.lt.s32.totalorder %s250, 63
      %s252 = scalar_select %p251, %s250, 63
      %p253 = scmp.lt.s32.totalorder %s20, 0
      %s254 = scalar_select %p253, %s20, 0
      %s255 = sadd.s32 %s254, %s252
      %s256 = smul.addr %s255, 4
      %s257 = scalar_lea.vmem %s3, %s256
      %s258 = smul.u32 32, %s19
      %p260 = scmp.eq.s32.totalorder %s21, 0
      // Predicated region
      $region33: #{bottleneck_forward.4} parent=31 // pred_check
        %p261 = pneg %p260
      $region34: #{bottleneck_forward.4} parent=31 // pred_check_branch
        %263 = sbr.rel (%p261) target = $region36
      $region35: #{bottleneck_forward.4} parent=31 // pred_region
        %264 = vst [vmem:[#allocation2] sm:$0xff] 0.0
        %265 = vst [vmem:[#allocation2 + $0x8] sm:$0xff] 0.0
        %266 = vst [vmem:[#allocation2 + $0x10] sm:$0xff] 0.0
        %267 = vst [vmem:[#allocation2 + $0x18] sm:$0xff] 0.0
        %268 = vst [vmem:[#allocation2 + $0x20] sm:$0xff] 0.0
        %269 = vst [vmem:[#allocation2 + $0x28] sm:$0xff] 0.0
        %270 = vst [vmem:[#allocation2 + $0x30] sm:$0xff] 0.0
        %271 = vst [vmem:[#allocation2 + $0x38] sm:$0xff] 0.0
        %272 = vst [vmem:[#allocation2 + $0x40] sm:$0xff] 0.0
        %273 = vst [vmem:[#allocation2 + $0x48] sm:$0xff] 0.0
        %274 = vst [vmem:[#allocation2 + $0x50] sm:$0xff] 0.0
        %275 = vst [vmem:[#allocation2 + $0x58] sm:$0xff] 0.0
        %276 = vst [vmem:[#allocation2 + $0x60] sm:$0xff] 0.0
        %277 = vst [vmem:[#allocation2 + $0x68] sm:$0xff] 0.0
        %278 = vst [vmem:[#allocation2 + $0x70] sm:$0xff] 0.0
        %279 = vst [vmem:[#allocation2 + $0x78] sm:$0xff] 0.0
        %280 = vst [vmem:[#allocation2 + $0x80] sm:$0xff] 0.0
        %281 = vst [vmem:[#allocation2 + $0x88] sm:$0xff] 0.0
        %282 = vst [vmem:[#allocation2 + $0x90] sm:$0xff] 0.0
        %283 = vst [vmem:[#allocation2 + $0x98] sm:$0xff] 0.0
        %284 = vst [vmem:[#allocation2 + $0xa0] sm:$0xff] 0.0
        %285 = vst [vmem:[#allocation2 + $0xa8] sm:$0xff] 0.0
        %286 = vst [vmem:[#allocation2 + $0xb0] sm:$0xff] 0.0
        %287 = vst [vmem:[#allocation2 + $0xb8] sm:$0xff] 0.0
        %288 = vst [vmem:[#allocation2 + $0xc0] sm:$0xff] 0.0
        %289 = vst [vmem:[#allocation2 + $0xc8] sm:$0xff] 0.0
        %290 = vst [vmem:[#allocation2 + $0xd0] sm:$0xff] 0.0
        %291 = vst [vmem:[#allocation2 + $0xd8] sm:$0xff] 0.0
        %292 = vst [vmem:[#allocation2 + $0xe0] sm:$0xff] 0.0
        %293 = vst [vmem:[#allocation2 + $0xe8] sm:$0xff] 0.0
        %294 = vst [vmem:[#allocation2 + $0xf0] sm:$0xff] 0.0
        %295 = vst [vmem:[#allocation2 + $0xf8] sm:$0xff] 0.0
      $region36: #{bottleneck_forward.4} parent=31 // pred_fallthru
        _
      %v296 = vld [vmem:[#allocation2] sm:$0xff]
      %v297 = vld [vmem:[#allocation2 + $0x8] sm:$0xff]
      %v298 = vld [vmem:[#allocation2 + $0x10] sm:$0xff]
      %v299 = vld [vmem:[#allocation2 + $0x18] sm:$0xff]
      %v300 = vld [vmem:[#allocation2 + $0x20] sm:$0xff]
      %v301 = vld [vmem:[#allocation2 + $0x28] sm:$0xff]
      %v302 = vld [vmem:[#allocation2 + $0x30] sm:$0xff]
      %v303 = vld [vmem:[#allocation2 + $0x38] sm:$0xff]
      %v304 = vld [vmem:[#allocation2 + $0x40] sm:$0xff]
      %v305 = vld [vmem:[#allocation2 + $0x48] sm:$0xff]
      %v306 = vld [vmem:[#allocation2 + $0x50] sm:$0xff]
      %v307 = vld [vmem:[#allocation2 + $0x58] sm:$0xff]
      %v308 = vld [vmem:[#allocation2 + $0x60] sm:$0xff]
      %v309 = vld [vmem:[#allocation2 + $0x68] sm:$0xff]
      %v310 = vld [vmem:[#allocation2 + $0x70] sm:$0xff]
      %v311 = vld [vmem:[#allocation2 + $0x78] sm:$0xff]
      %v312 = vld [vmem:[#allocation2 + $0x80] sm:$0xff]
      %v313 = vld [vmem:[#allocation2 + $0x88] sm:$0xff]
      %v314 = vld [vmem:[#allocation2 + $0x90] sm:$0xff]
      %v315 = vld [vmem:[#allocation2 + $0x98] sm:$0xff]
      %v316 = vld [vmem:[#allocation2 + $0xa0] sm:$0xff]
      %v317 = vld [vmem:[#allocation2 + $0xa8] sm:$0xff]
      %v318 = vld [vmem:[#allocation2 + $0xb0] sm:$0xff]
      %v319 = vld [vmem:[#allocation2 + $0xb8] sm:$0xff]
      %v320 = vld [vmem:[#allocation2 + $0xc0] sm:$0xff]
      %v321 = vld [vmem:[#allocation2 + $0xc8] sm:$0xff]
      %v322 = vld [vmem:[#allocation2 + $0xd0] sm:$0xff]
      %v323 = vld [vmem:[#allocation2 + $0xd8] sm:$0xff]
      %v324 = vld [vmem:[#allocation2 + $0xe0] sm:$0xff]
      %v325 = vld [vmem:[#allocation2 + $0xe8] sm:$0xff]
      %v326 = vld [vmem:[#allocation2 + $0xf0] sm:$0xff]
      %v327 = vld [vmem:[#allocation2 + $0xf8] sm:$0xff]
      %v328 = vld [vmem:[%s236] sm:$0xf]
      %v329 = vld [vmem:[%s236 + $0x4] sm:$0xf]
      %v330 = vld [vmem:[%s236 + $0x8] sm:$0xf]
      %v331 = vld [vmem:[%s236 + $0xc] sm:$0xf]
      %v332 = vld [vmem:[%s236 + $0x10] sm:$0xf]
      %v333 = vld [vmem:[%s236 + $0x14] sm:$0xf]
      %v334 = vld [vmem:[%s236 + $0x18] sm:$0xf]
      %v335 = vld [vmem:[%s236 + $0x1c] sm:$0xf]
      %v336 = vld [vmem:[%s236 + $0x20] sm:$0xf]
      %v337 = vld [vmem:[%s236 + $0x24] sm:$0xf]
      %v338 = vld [vmem:[%s236 + $0x28] sm:$0xf]
      %v339 = vld [vmem:[%s236 + $0x2c] sm:$0xf]
      %v340 = vld [vmem:[%s236 + $0x30] sm:$0xf]
      %v341 = vld [vmem:[%s236 + $0x34] sm:$0xf]
      %v342 = vld [vmem:[%s236 + $0x38] sm:$0xf]
      %v343 = vld [vmem:[%s236 + $0x3c] sm:$0xf]
      %v344 = vld [vmem:[%s236 + $0x40] sm:$0xf]
      %v345 = vld [vmem:[%s236 + $0x44] sm:$0xf]
      %v346 = vld [vmem:[%s236 + $0x48] sm:$0xf]
      %v347 = vld [vmem:[%s236 + $0x4c] sm:$0xf]
      %v348 = vld [vmem:[%s236 + $0x50] sm:$0xf]
      %v349 = vld [vmem:[%s236 + $0x54] sm:$0xf]
      %v350 = vld [vmem:[%s236 + $0x58] sm:$0xf]
      %v351 = vld [vmem:[%s236 + $0x5c] sm:$0xf]
      %v352 = vld [vmem:[%s236 + $0x60] sm:$0xf]
      %v353 = vld [vmem:[%s236 + $0x64] sm:$0xf]
      %v354 = vld [vmem:[%s236 + $0x68] sm:$0xf]
      %v355 = vld [vmem:[%s236 + $0x6c] sm:$0xf]
      %v356 = vld [vmem:[%s236 + $0x70] sm:$0xf]
      %v357 = vld [vmem:[%s236 + $0x74] sm:$0xf]
      %v358 = vld [vmem:[%s236 + $0x78] sm:$0xf]
      %v359 = vld [vmem:[%s236 + $0x7c] sm:$0xf]
      %v360 = vld [vmem:[%s245] sm:$0xf]
      %v361 = vld [vmem:[%s245 + $0x4] sm:$0xf]
      %v362 = vld [vmem:[%s245 + $0x8] sm:$0xf]
      %v363 = vld [vmem:[%s245 + $0xc] sm:$0xf]
      %v364 = vld [vmem:[%s245 + $0x10] sm:$0xf]
      %v365 = vld [vmem:[%s245 + $0x14] sm:$0xf]
      %v366 = vld [vmem:[%s245 + $0x18] sm:$0xf]
      %v367 = vld [vmem:[%s245 + $0x1c] sm:$0xf]
      %v368 = vld [vmem:[%s245 + $0x20] sm:$0xf]
      %v369 = vld [vmem:[%s245 + $0x24] sm:$0xf]
      %v370 = vld [vmem:[%s245 + $0x28] sm:$0xf]
      %v371 = vld [vmem:[%s245 + $0x2c] sm:$0xf]
      %v372 = vld [vmem:[%s245 + $0x30] sm:$0xf]
      %v373 = vld [vmem:[%s245 + $0x34] sm:$0xf]
      %v374 = vld [vmem:[%s245 + $0x38] sm:$0xf]
      %v375 = vld [vmem:[%s245 + $0x3c] sm:$0xf]
      %v408 = vunpack.c.l.b16 %v328
      %v409 = vunpack.c.l.b16 %v329
      %v410 = vunpack.c.l.b16 %v330
      %v411 = vunpack.c.l.b16 %v331
      %v412 = vunpack.c.l.b16 %v332
      %v413 = vunpack.c.l.b16 %v333
      %v414 = vunpack.c.l.b16 %v334
      %v415 = vunpack.c.l.b16 %v335
      %v416 = vunpack.c.l.b16 %v336
      %v417 = vunpack.c.l.b16 %v337
      %v418 = vunpack.c.l.b16 %v338
      %v419 = vunpack.c.l.b16 %v339
      %v420 = vunpack.c.l.b16 %v340
      %v421 = vunpack.c.l.b16 %v341
      %v422 = vunpack.c.l.b16 %v342
      %v423 = vunpack.c.l.b16 %v343
      %v424 = vunpack.c.l.b16 %v344
      %v425 = vunpack.c.l.b16 %v345
      %v426 = vunpack.c.l.b16 %v346
      %v427 = vunpack.c.l.b16 %v347
      %v428 = vunpack.c.l.b16 %v348
      %v429 = vunpack.c.l.b16 %v349
      %v430 = vunpack.c.l.b16 %v350
      %v431 = vunpack.c.l.b16 %v351
      %v432 = vunpack.c.l.b16 %v352
      %v433 = vunpack.c.l.b16 %v353
      %v434 = vunpack.c.l.b16 %v354
      %v435 = vunpack.c.l.b16 %v355
      %v436 = vunpack.c.l.b16 %v356
      %v437 = vunpack.c.l.b16 %v357
      %v438 = vunpack.c.l.b16 %v358
      %v439 = vunpack.c.l.b16 %v359
      %v440 = vpack.c.b16 %v409, %v408
      %v441 = vpack.c.b16 %v411, %v410
      %v442 = vpack.c.b16 %v413, %v412
      %v443 = vpack.c.b16 %v415, %v414
      %v444 = vpack.c.b16 %v417, %v416
      %v445 = vpack.c.b16 %v419, %v418
      %v446 = vpack.c.b16 %v421, %v420
      %v447 = vpack.c.b16 %v423, %v422
      %v448 = vpack.c.b16 %v425, %v424
      %v449 = vpack.c.b16 %v427, %v426
      %v450 = vpack.c.b16 %v429, %v428
      %v451 = vpack.c.b16 %v431, %v430
      %v452 = vpack.c.b16 %v433, %v432
      %v453 = vpack.c.b16 %v435, %v434
      %v454 = vpack.c.b16 %v437, %v436
      %v455 = vpack.c.b16 %v439, %v438
      %v488 = vunpack.c.l.b16 %v360
      %v489 = vunpack.c.l.b16 %v361
      %v490 = vunpack.c.l.b16 %v362
      %v491 = vunpack.c.l.b16 %v363
      %v492 = vunpack.c.l.b16 %v364
      %v493 = vunpack.c.l.b16 %v365
      %v494 = vunpack.c.l.b16 %v366
      %v495 = vunpack.c.l.b16 %v367
      %v496 = vunpack.c.l.b16 %v368
      %v497 = vunpack.c.l.b16 %v369
      %v498 = vunpack.c.l.b16 %v370
      %v499 = vunpack.c.l.b16 %v371
      %v500 = vunpack.c.l.b16 %v372
      %v501 = vunpack.c.l.b16 %v373
      %v502 = vunpack.c.l.b16 %v374
      %v503 = vunpack.c.l.b16 %v375
      %v504 = vpack.c.b16 %v489, %v488
      %v505 = vpack.c.b16 %v491, %v490
      %v506 = vpack.c.b16 %v493, %v492
      %v507 = vpack.c.b16 %v495, %v494
      %v508 = vpack.c.b16 %v497, %v496
      %v509 = vpack.c.b16 %v499, %v498
      %v510 = vpack.c.b16 %v501, %v500
      %v511 = vpack.c.b16 %v503, %v502
      %520 = vmatprep.subr.bf16.mxu0 0
      %521 = vmatpush1.bf16.msra.mxu0 %v504
      %522 = vmatprep.subr.bf16.mxu0 0
      %523 = vmatpush1.bf16.msra.mxu0 %v505
      %524 = vmatprep.subr.bf16.mxu0 0
      %525 = vmatpush1.bf16.msra.mxu0 %v506
      %526 = vmatprep.subr.bf16.mxu0 0
      %527 = vmatpush1.bf16.msra.mxu0 %v507
      %528 = vmatprep.subr.bf16.mxu0 0
      %529 = vmatpush1.bf16.msra.mxu0 %v508
      %530 = vmatprep.subr.bf16.mxu0 0
      %531 = vmatpush1.bf16.msra.mxu0 %v509
      %532 = vmatprep.subr.bf16.mxu0 0
      %533 = vmatpush1.bf16.msra.mxu0 %v510
      %534 = vmatprep.subr.bf16.mxu0 0
      %535 = vmatpush1.bf16.msra.mxu0 %v511
      %536 = vmatprep.subr.bf16.mxu0 0
      %537 = vmatpush1.bf16.msra.mxu0 0
      %538 = vmatprep.subr.bf16.mxu0 0
      %539 = vmatpush1.bf16.msra.mxu0 0
      %540 = vmatprep.subr.bf16.mxu0 0
      %541 = vmatpush1.bf16.msra.mxu0 0
      %542 = vmatprep.subr.bf16.mxu0 0
      %543 = vmatpush1.bf16.msra.mxu0 0
      %544 = vmatprep.subr.bf16.mxu0 0
      %545 = vmatpush1.bf16.msra.mxu0 0
      %546 = vmatprep.subr.bf16.mxu0 0
      %547 = vmatpush1.bf16.msra.mxu0 0
      %548 = vmatprep.subr.bf16.mxu0 0
      %549 = vmatpush1.bf16.msra.mxu0 0
      %550 = vmatprep.subr.bf16.mxu0 0
      %551 = vmatpush1.bf16.msra.mxu0 0
      %552 = vmatprep.mubr.bf16.mxu0 0
      %553 = vmatmul.mubr.bf16.gmra.mrb[0].mxu0 %v440
      %v554 = vpop.f32.mrb[0].mxu0
      %v555 = vadd.f32 0.0, %v554
      %v556 = vpop.f32.mrb[0].mxu0
      %v557 = vpop.f32.mrb[0].mxu0
      %v558 = vadd.f32 0.0, %v557
      %v559 = vpop.f32.mrb[0].mxu0
      %560 = vmatprep.mubr.bf16.mxu0 0
      %561 = vmatmul.mubr.bf16.gmra.mrb[0].mxu0 %v441
      %v562 = vpop.f32.mrb[0].mxu0
      %v563 = vadd.f32 0.0, %v562
      %v564 = vpop.f32.mrb[0].mxu0
      %v565 = vpop.f32.mrb[0].mxu0
      %v566 = vadd.f32 0.0, %v565
      %v567 = vpop.f32.mrb[0].mxu0
      %568 = vmatprep.mubr.bf16.mxu0 0
      %569 = vmatmul.mubr.bf16.gmra.mrb[0].mxu0 %v442
      %v570 = vpop.f32.mrb[0].mxu0
      %v571 = vadd.f32 0.0, %v570
      %v572 = vpop.f32.mrb[0].mxu0
      %v573 = vpop.f32.mrb[0].mxu0
      %v574 = vadd.f32 0.0, %v573
      %v575 = vpop.f32.mrb[0].mxu0
      %576 = vmatprep.mubr.bf16.mxu0 0
      %577 = vmatmul.mubr.bf16.gmra.mrb[0].mxu0 %v443
      %v578 = vpop.f32.mrb[0].mxu0
      %v579 = vadd.f32 0.0, %v578
      %v580 = vpop.f32.mrb[0].mxu0
      %v581 = vpop.f32.mrb[0].mxu0
      %v582 = vadd.f32 0.0, %v581
      %v583 = vpop.f32.mrb[0].mxu0
      %584 = vmatprep.mubr.bf16.mxu0 0
      %585 = vmatmul.mubr.bf16.gmra.mrb[0].mxu0 %v444
      %v586 = vpop.f32.mrb[0].mxu0
      %v587 = vadd.f32 0.0, %v586
      %v588 = vpop.f32.mrb[0].mxu0
      %v589 = vpop.f32.mrb[0].mxu0
      %v590 = vadd.f32 0.0, %v589
      %v591 = vpop.f32.mrb[0].mxu0
      %592 = vmatprep.mubr.bf16.mxu0 0
      %593 = vmatmul.mubr.bf16.gmra.mrb[0].mxu0 %v445
      %v594 = vpop.f32.mrb[0].mxu0
      %v595 = vadd.f32 0.0, %v594
      %v596 = vpop.f32.mrb[0].mxu0
      %v597 = vpop.f32.mrb[0].mxu0
      %v598 = vadd.f32 0.0, %v597
      %v599 = vpop.f32.mrb[0].mxu0
      %600 = vmatprep.mubr.bf16.mxu0 0
      %601 = vmatmul.mubr.bf16.gmra.mrb[0].mxu0 %v446
      %v602 = vpop.f32.mrb[0].mxu0
      %v603 = vadd.f32 0.0, %v602
      %v604 = vpop.f32.mrb[0].mxu0
      %v605 = vpop.f32.mrb[0].mxu0
      %v606 = vadd.f32 0.0, %v605
      %v607 = vpop.f32.mrb[0].mxu0
      %608 = vmatprep.mubr.bf16.mxu0 0
      %609 = vmatmul.mubr.bf16.gmra.mrb[0].mxu0 %v447
      %v610 = vpop.f32.mrb[0].mxu0
      %v611 = vadd.f32 0.0, %v610
      %v612 = vpop.f32.mrb[0].mxu0
      %v613 = vpop.f32.mrb[0].mxu0
      %v614 = vadd.f32 0.0, %v613
      %v615 = vpop.f32.mrb[0].mxu0
      %616 = vmatprep.mubr.bf16.mxu0 0
      %617 = vmatmul.mubr.bf16.gmra.mrb[0].mxu0 %v448
      %v618 = vpop.f32.mrb[0].mxu0
      %v619 = vadd.f32 0.0, %v618
      %v620 = vpop.f32.mrb[0].mxu0
      %v621 = vpop.f32.mrb[0].mxu0
      %v622 = vadd.f32 0.0, %v621
      %v623 = vpop.f32.mrb[0].mxu0
      %624 = vmatprep.mubr.bf16.mxu0 0
      %625 = vmatmul.mubr.bf16.gmra.mrb[0].mxu0 %v449
      %v626 = vpop.f32.mrb[0].mxu0
      %v627 = vadd.f32 0.0, %v626
      %v628 = vpop.f32.mrb[0].mxu0
      %v629 = vpop.f32.mrb[0].mxu0
      %v630 = vadd.f32 0.0, %v629
      %v631 = vpop.f32.mrb[0].mxu0
      %632 = vmatprep.mubr.bf16.mxu0 0
      %633 = vmatmul.mubr.bf16.gmra.mrb[0].mxu0 %v450
      %v634 = vpop.f32.mrb[0].mxu0
      %v635 = vadd.f32 0.0, %v634
      %v636 = vpop.f32.mrb[0].mxu0
      %v637 = vpop.f32.mrb[0].mxu0
      %v638 = vadd.f32 0.0, %v637
      %v639 = vpop.f32.mrb[0].mxu0
      %640 = vmatprep.mubr.bf16.mxu0 0
      %641 = vmatmul.mubr.bf16.gmra.mrb[0].mxu0 %v451
      %v642 = vpop.f32.mrb[0].mxu0
      %v643 = vadd.f32 0.0, %v642
      %v644 = vpop.f32.mrb[0].mxu0
      %v645 = vpop.f32.mrb[0].mxu0
      %v646 = vadd.f32 0.0, %v645
      %v647 = vpop.f32.mrb[0].mxu0
      %648 = vmatprep.mubr.bf16.mxu0 0
      %649 = vmatmul.mubr.bf16.gmra.mrb[0].mxu0 %v452
      %v650 = vpop.f32.mrb[0].mxu0
      %v651 = vadd.f32 0.0, %v650
      %v652 = vpop.f32.mrb[0].mxu0
      %v653 = vpop.f32.mrb[0].mxu0
      %v654 = vadd.f32 0.0, %v653
      %v655 = vpop.f32.mrb[0].mxu0
      %656 = vmatprep.mubr.bf16.mxu0 0
      %657 = vmatmul.mubr.bf16.gmra.mrb[0].mxu0 %v453
      %v658 = vpop.f32.mrb[0].mxu0
      %v659 = vadd.f32 0.0, %v658
      %v660 = vpop.f32.mrb[0].mxu0
      %v661 = vpop.f32.mrb[0].mxu0
      %v662 = vadd.f32 0.0, %v661
      %v663 = vpop.f32.mrb[0].mxu0
      %664 = vmatprep.mubr.bf16.mxu0 0
      %665 = vmatmul.mubr.bf16.gmra.mrb[0].mxu0 %v454
      %v666 = vpop.f32.mrb[0].mxu0
      %v667 = vadd.f32 0.0, %v666
      %v668 = vpop.f32.mrb[0].mxu0
      %v669 = vpop.f32.mrb[0].mxu0
      %v670 = vadd.f32 0.0, %v669
      %v671 = vpop.f32.mrb[0].mxu0
      %672 = vmatprep.mubr.bf16.mxu0 0
      %673 = vmatmul.mubr.bf16.gmra.mrb[0].mxu0 %v455
      %v674 = vpop.f32.mrb[0].mxu0
      %v675 = vadd.f32 0.0, %v674
      %v676 = vpop.f32.mrb[0].mxu0
      %v677 = vpop.f32.mrb[0].mxu0
      %v678 = vadd.f32 0.0, %v677
      %v679 = vpop.f32.mrb[0].mxu0
      %680 = vdwg.mxu0
      %v681 = vadd.f32 %v296, %v555
      %v682 = vadd.f32 %v297, %v558
      %v683 = vadd.f32 %v298, %v563
      %v684 = vadd.f32 %v299, %v566
      %v685 = vadd.f32 %v300, %v571
      %v686 = vadd.f32 %v301, %v574
      %v687 = vadd.f32 %v302, %v579
      %v688 = vadd.f32 %v303, %v582
      %v689 = vadd.f32 %v304, %v587
      %v690 = vadd.f32 %v305, %v590
      %v691 = vadd.f32 %v306, %v595
      %v692 = vadd.f32 %v307, %v598
      %v693 = vadd.f32 %v308, %v603
      %v694 = vadd.f32 %v309, %v606
      %v695 = vadd.f32 %v310, %v611
      %v696 = vadd.f32 %v311, %v614
      %v697 = vadd.f32 %v312, %v619
      %v698 = vadd.f32 %v313, %v622
      %v699 = vadd.f32 %v314, %v627
      %v700 = vadd.f32 %v315, %v630
      %v701 = vadd.f32 %v316, %v635
      %v702 = vadd.f32 %v317, %v638
      %v703 = vadd.f32 %v318, %v643
      %v704 = vadd.f32 %v319, %v646
      %v705 = vadd.f32 %v320, %v651
      %v706 = vadd.f32 %v321, %v654
      %v707 = vadd.f32 %v322, %v659
      %v708 = vadd.f32 %v323, %v662
      %v709 = vadd.f32 %v324, %v667
      %v710 = vadd.f32 %v325, %v670
      %v711 = vadd.f32 %v326, %v675
      %v712 = vadd.f32 %v327, %v678
      %713 = vst [vmem:[#allocation2] sm:$0xff] %v681
      %714 = vst [vmem:[#allocation2 + $0x8] sm:$0xff] %v682
      %715 = vst [vmem:[#allocation2 + $0x10] sm:$0xff] %v683
      %716 = vst [vmem:[#allocation2 + $0x18] sm:$0xff] %v684
      %717 = vst [vmem:[#allocation2 + $0x20] sm:$0xff] %v685
      %718 = vst [vmem:[#allocation2 + $0x28] sm:$0xff] %v686
      %719 = vst [vmem:[#allocation2 + $0x30] sm:$0xff] %v687
      %720 = vst [vmem:[#allocation2 + $0x38] sm:$0xff] %v688
      %721 = vst [vmem:[#allocation2 + $0x40] sm:$0xff] %v689
      %722 = vst [vmem:[#allocation2 + $0x48] sm:$0xff] %v690
      %723 = vst [vmem:[#allocation2 + $0x50] sm:$0xff] %v691
      %724 = vst [vmem:[#allocation2 + $0x58] sm:$0xff] %v692
      %725 = vst [vmem:[#allocation2 + $0x60] sm:$0xff] %v693
      %726 = vst [vmem:[#allocation2 + $0x68] sm:$0xff] %v694
      %727 = vst [vmem:[#allocation2 + $0x70] sm:$0xff] %v695
      %728 = vst [vmem:[#allocation2 + $0x78] sm:$0xff] %v696
      %729 = vst [vmem:[#allocation2 + $0x80] sm:$0xff] %v697
      %730 = vst [vmem:[#allocation2 + $0x88] sm:$0xff] %v698
      %731 = vst [vmem:[#allocation2 + $0x90] sm:$0xff] %v699
      %732 = vst [vmem:[#allocation2 + $0x98] sm:$0xff] %v700
      %733 = vst [vmem:[#allocation2 + $0xa0] sm:$0xff] %v701
      %734 = vst [vmem:[#allocation2 + $0xa8] sm:$0xff] %v702
      %735 = vst [vmem:[#allocation2 + $0xb0] sm:$0xff] %v703
      %736 = vst [vmem:[#allocation2 + $0xb8] sm:$0xff] %v704
      %737 = vst [vmem:[#allocation2 + $0xc0] sm:$0xff] %v705
      %738 = vst [vmem:[#allocation2 + $0xc8] sm:$0xff] %v706
      %739 = vst [vmem:[#allocation2 + $0xd0] sm:$0xff] %v707
      %740 = vst [vmem:[#allocation2 + $0xd8] sm:$0xff] %v708
      %741 = vst [vmem:[#allocation2 + $0xe0] sm:$0xff] %v709
      %742 = vst [vmem:[#allocation2 + $0xe8] sm:$0xff] %v710
      %743 = vst [vmem:[#allocation2 + $0xf0] sm:$0xff] %v711
      %744 = vst [vmem:[#allocation2 + $0xf8] sm:$0xff] %v712
      // Predicated region
      $region37: #{bottleneck_forward.4} parent=31 // pred_check
        %p745 = pneg %p260
      $region38: #{bottleneck_forward.4} parent=31 // pred_check_branch
        %747 = sbr.rel (%p745) target = $region40
      $region39: #{bottleneck_forward.4} parent=31 // pred_region
        %v748 = vld [vmem:[#allocation2] sm:$0xff]
        %v749 = vld [vmem:[#allocation2 + $0x8] sm:$0xff]
        %v750 = vld [vmem:[#allocation2 + $0x10] sm:$0xff]
        %v751 = vld [vmem:[#allocation2 + $0x18] sm:$0xff]
        %v752 = vld [vmem:[#allocation2 + $0x20] sm:$0xff]
        %v753 = vld [vmem:[#allocation2 + $0x28] sm:$0xff]
        %v754 = vld [vmem:[#allocation2 + $0x30] sm:$0xff]
        %v755 = vld [vmem:[#allocation2 + $0x38] sm:$0xff]
        %v756 = vld [vmem:[#allocation2 + $0x40] sm:$0xff]
        %v757 = vld [vmem:[#allocation2 + $0x48] sm:$0xff]
        %v758 = vld [vmem:[#allocation2 + $0x50] sm:$0xff]
        %v759 = vld [vmem:[#allocation2 + $0x58] sm:$0xff]
        %v760 = vld [vmem:[#allocation2 + $0x60] sm:$0xff]
        %v761 = vld [vmem:[#allocation2 + $0x68] sm:$0xff]
        %v762 = vld [vmem:[#allocation2 + $0x70] sm:$0xff]
        %v763 = vld [vmem:[#allocation2 + $0x78] sm:$0xff]
        %v764 = vld [vmem:[#allocation2 + $0x80] sm:$0xff]
        %v765 = vld [vmem:[#allocation2 + $0x88] sm:$0xff]
        %v766 = vld [vmem:[#allocation2 + $0x90] sm:$0xff]
        %v767 = vld [vmem:[#allocation2 + $0x98] sm:$0xff]
        %v768 = vld [vmem:[#allocation2 + $0xa0] sm:$0xff]
        %v769 = vld [vmem:[#allocation2 + $0xa8] sm:$0xff]
        %v770 = vld [vmem:[#allocation2 + $0xb0] sm:$0xff]
        %v771 = vld [vmem:[#allocation2 + $0xb8] sm:$0xff]
        %v772 = vld [vmem:[#allocation2 + $0xc0] sm:$0xff]
        %v773 = vld [vmem:[#allocation2 + $0xc8] sm:$0xff]
        %v774 = vld [vmem:[#allocation2 + $0xd0] sm:$0xff]
        %v775 = vld [vmem:[#allocation2 + $0xd8] sm:$0xff]
        %v776 = vld [vmem:[#allocation2 + $0xe0] sm:$0xff]
        %v777 = vld [vmem:[#allocation2 + $0xe8] sm:$0xff]
        %v778 = vld [vmem:[#allocation2 + $0xf0] sm:$0xff]
        %v779 = vld [vmem:[#allocation2 + $0xf8] sm:$0xff]
        %v780 = vld [vmem:[%s249] sm:$0x1]
        %v782 = vlaneseq
        %v783 = vshrl.u32 %v782, 7
        %v784 = vsub.s32 0, %v783
        %v785 = vrot.slane %v780, %v784
        %v787 = vadd.f32 %v748, %v785
        %v788 = vadd.f32 %v749, %v785
        %v789 = vadd.f32 %v750, %v785
        %v790 = vadd.f32 %v751, %v785
        %v791 = vadd.f32 %v752, %v785
        %v792 = vadd.f32 %v753, %v785
        %v793 = vadd.f32 %v754, %v785
        %v794 = vadd.f32 %v755, %v785
        %v795 = vadd.f32 %v756, %v785
        %v796 = vadd.f32 %v757, %v785
        %v797 = vadd.f32 %v758, %v785
        %v798 = vadd.f32 %v759, %v785
        %v799 = vadd.f32 %v760, %v785
        %v800 = vadd.f32 %v761, %v785
        %v801 = vadd.f32 %v762, %v785
        %v802 = vadd.f32 %v763, %v785
        %v803 = vadd.f32 %v764, %v785
        %v804 = vadd.f32 %v765, %v785
        %v805 = vadd.f32 %v766, %v785
        %v806 = vadd.f32 %v767, %v785
        %v807 = vadd.f32 %v768, %v785
        %v808 = vadd.f32 %v769, %v785
        %v809 = vadd.f32 %v770, %v785
        %v810 = vadd.f32 %v771, %v785
        %v811 = vadd.f32 %v772, %v785
        %v812 = vadd.f32 %v773, %v785
        %v813 = vadd.f32 %v774, %v785
        %v814 = vadd.f32 %v775, %v785
        %v815 = vadd.f32 %v776, %v785
        %v816 = vadd.f32 %v777, %v785
        %v817 = vadd.f32 %v778, %v785
        %v818 = vadd.f32 %v779, %v785
        %v819 = vmax.f32 %v787, 0.0
        %v820 = vmax.f32 %v788, 0.0
        %v821 = vmax.f32 %v789, 0.0
        %v822 = vmax.f32 %v790, 0.0
        %v823 = vmax.f32 %v791, 0.0
        %v824 = vmax.f32 %v792, 0.0
        %v825 = vmax.f32 %v793, 0.0
        %v826 = vmax.f32 %v794, 0.0
        %v827 = vmax.f32 %v795, 0.0
        %v828 = vmax.f32 %v796, 0.0
        %v829 = vmax.f32 %v797, 0.0
        %v830 = vmax.f32 %v798, 0.0
        %v831 = vmax.f32 %v799, 0.0
        %v832 = vmax.f32 %v800, 0.0
        %v833 = vmax.f32 %v801, 0.0
        %v834 = vmax.f32 %v802, 0.0
        %v835 = vmax.f32 %v803, 0.0
        %v836 = vmax.f32 %v804, 0.0
        %v837 = vmax.f32 %v805, 0.0
        %v838 = vmax.f32 %v806, 0.0
        %v839 = vmax.f32 %v807, 0.0
        %v840 = vmax.f32 %v808, 0.0
        %v841 = vmax.f32 %v809, 0.0
        %v842 = vmax.f32 %v810, 0.0
        %v843 = vmax.f32 %v811, 0.0
        %v844 = vmax.f32 %v812, 0.0
        %v845 = vmax.f32 %v813, 0.0
        %v846 = vmax.f32 %v814, 0.0
        %v847 = vmax.f32 %v815, 0.0
        %v848 = vmax.f32 %v816, 0.0
        %v849 = vmax.f32 %v817, 0.0
        %v850 = vmax.f32 %v818, 0.0
        %v851 = vpack.c.bf16 %v820, %v819
        %v852 = vpack.c.bf16 %v822, %v821
        %v853 = vpack.c.bf16 %v824, %v823
        %v854 = vpack.c.bf16 %v826, %v825
        %v855 = vpack.c.bf16 %v828, %v827
        %v856 = vpack.c.bf16 %v830, %v829
        %v857 = vpack.c.bf16 %v832, %v831
        %v858 = vpack.c.bf16 %v834, %v833
        %v859 = vpack.c.bf16 %v836, %v835
        %v860 = vpack.c.bf16 %v838, %v837
        %v861 = vpack.c.bf16 %v840, %v839
        %v862 = vpack.c.bf16 %v842, %v841
        %v863 = vpack.c.bf16 %v844, %v843
        %v864 = vpack.c.bf16 %v846, %v845
        %v865 = vpack.c.bf16 %v848, %v847
        %v866 = vpack.c.bf16 %v850, %v849
        %v883 = vunpack.c.l.b16 %v851
        %v884 = vunpack.c.h.b16 %v851
        %v885 = vunpack.c.l.b16 %v852
        %v886 = vunpack.c.h.b16 %v852
        %v887 = vunpack.c.l.b16 %v853
        %v888 = vunpack.c.h.b16 %v853
        %v889 = vunpack.c.l.b16 %v854
        %v890 = vunpack.c.h.b16 %v854
        %v891 = vunpack.c.l.b16 %v855
        %v892 = vunpack.c.h.b16 %v855
        %v893 = vunpack.c.l.b16 %v856
        %v894 = vunpack.c.h.b16 %v856
        %v895 = vunpack.c.l.b16 %v857
        %v896 = vunpack.c.h.b16 %v857
        %v897 = vunpack.c.l.b16 %v858
        %v898 = vunpack.c.h.b16 %v858
        %v899 = vunpack.c.l.b16 %v859
        %v900 = vunpack.c.h.b16 %v859
        %v901 = vunpack.c.l.b16 %v860
        %v902 = vunpack.c.h.b16 %v860
        %v903 = vunpack.c.l.b16 %v861
        %v904 = vunpack.c.h.b16 %v861
        %v905 = vunpack.c.l.b16 %v862
        %v906 = vunpack.c.h.b16 %v862
        %v907 = vunpack.c.l.b16 %v863
        %v908 = vunpack.c.h.b16 %v863
        %v909 = vunpack.c.l.b16 %v864
        %v910 = vunpack.c.h.b16 %v864
        %v911 = vunpack.c.l.b16 %v865
        %v912 = vunpack.c.h.b16 %v865
        %v913 = vunpack.c.l.b16 %v866
        %v914 = vunpack.c.h.b16 %v866
        %v915 = vpack.c.b16 %v883, %v883
        %v916 = vpack.c.b16 %v884, %v884
        %v917 = vpack.c.b16 %v885, %v885
        %v918 = vpack.c.b16 %v886, %v886
        %v919 = vpack.c.b16 %v887, %v887
        %v920 = vpack.c.b16 %v888, %v888
        %v921 = vpack.c.b16 %v889, %v889
        %v922 = vpack.c.b16 %v890, %v890
        %v923 = vpack.c.b16 %v891, %v891
        %v924 = vpack.c.b16 %v892, %v892
        %v925 = vpack.c.b16 %v893, %v893
        %v926 = vpack.c.b16 %v894, %v894
        %v927 = vpack.c.b16 %v895, %v895
        %v928 = vpack.c.b16 %v896, %v896
        %v929 = vpack.c.b16 %v897, %v897
        %v930 = vpack.c.b16 %v898, %v898
        %v931 = vpack.c.b16 %v899, %v899
        %v932 = vpack.c.b16 %v900, %v900
        %v933 = vpack.c.b16 %v901, %v901
        %v934 = vpack.c.b16 %v902, %v902
        %v935 = vpack.c.b16 %v903, %v903
        %v936 = vpack.c.b16 %v904, %v904
        %v937 = vpack.c.b16 %v905, %v905
        %v938 = vpack.c.b16 %v906, %v906
        %v939 = vpack.c.b16 %v907, %v907
        %v940 = vpack.c.b16 %v908, %v908
        %v941 = vpack.c.b16 %v909, %v909
        %v942 = vpack.c.b16 %v910, %v910
        %v943 = vpack.c.b16 %v911, %v911
        %v944 = vpack.c.b16 %v912, %v912
        %v945 = vpack.c.b16 %v913, %v913
        %v946 = vpack.c.b16 %v914, %v914
        %979 = vst [vmem:[%s257] sm:$0xf] %v915
        %980 = vst [vmem:[%s257 + $0x4] sm:$0xf] %v916
        %981 = vst [vmem:[%s257 + $0x8] sm:$0xf] %v917
        %982 = vst [vmem:[%s257 + $0xc] sm:$0xf] %v918
        %983 = vst [vmem:[%s257 + $0x10] sm:$0xf] %v919
        %984 = vst [vmem:[%s257 + $0x14] sm:$0xf] %v920
        %985 = vst [vmem:[%s257 + $0x18] sm:$0xf] %v921
        %986 = vst [vmem:[%s257 + $0x1c] sm:$0xf] %v922
        %987 = vst [vmem:[%s257 + $0x20] sm:$0xf] %v923
        %988 = vst [vmem:[%s257 + $0x24] sm:$0xf] %v924
        %989 = vst [vmem:[%s257 + $0x28] sm:$0xf] %v925
        %990 = vst [vmem:[%s257 + $0x2c] sm:$0xf] %v926
        %991 = vst [vmem:[%s257 + $0x30] sm:$0xf] %v927
        %992 = vst [vmem:[%s257 + $0x34] sm:$0xf] %v928
        %993 = vst [vmem:[%s257 + $0x38] sm:$0xf] %v929
        %994 = vst [vmem:[%s257 + $0x3c] sm:$0xf] %v930
        %995 = vst [vmem:[%s257 + $0x40] sm:$0xf] %v931
        %996 = vst [vmem:[%s257 + $0x44] sm:$0xf] %v932
        %997 = vst [vmem:[%s257 + $0x48] sm:$0xf] %v933
        %998 = vst [vmem:[%s257 + $0x4c] sm:$0xf] %v934
        %999 = vst [vmem:[%s257 + $0x50] sm:$0xf] %v935
        %1000 = vst [vmem:[%s257 + $0x54] sm:$0xf] %v936
        %1001 = vst [vmem:[%s257 + $0x58] sm:$0xf] %v937
        %1002 = vst [vmem:[%s257 + $0x5c] sm:$0xf] %v938
        %1003 = vst [vmem:[%s257 + $0x60] sm:$0xf] %v939
        %1004 = vst [vmem:[%s257 + $0x64] sm:$0xf] %v940
        %1005 = vst [vmem:[%s257 + $0x68] sm:$0xf] %v941
        %1006 = vst [vmem:[%s257 + $0x6c] sm:$0xf] %v942
        %1007 = vst [vmem:[%s257 + $0x70] sm:$0xf] %v943
        %1008 = vst [vmem:[%s257 + $0x74] sm:$0xf] %v944
        %1009 = vst [vmem:[%s257 + $0x78] sm:$0xf] %v945
        %1010 = vst [vmem:[%s257 + $0x7c] sm:$0xf] %v946
      $region40: #{bottleneck_forward.4} parent=31 // pred_fallthru
        _
      %s1011 = smul.u32 32, %s19
      %p1012 = scmp.lt.s32.totalorder %s1011, 63
      %s1013 = scalar_select %p1012, %s1011, 63
      %p1014 = scmp.lt.s32.totalorder %s20, 0
      %s1015 = scalar_select %p1014, %s20, 0
      %s1016 = sadd.s32 %s1015, %s1013
      %s1017 = smul.addr %s1016, 4
      %s1018 = scalar_lea.vmem %s3, %s1017
      // Predicated region
      $region41: #{bottleneck_forward.4} parent=31 // pred_check
        %p1019 = pneg %p135
      $region42: #{bottleneck_forward.4} parent=31 // pred_check_branch
        %1021 = sbr.rel (%p1019) target = $region44
      $region43: #{bottleneck_forward.4} parent=31 // pred_region
        %s1022 = smul.u32 32, %s19
      $region44: #{bottleneck_forward.4} parent=31 // pred_fallthru
        _
    $region32: #{bottleneck_forward.4} parent=5 // pred_fallthru
      _
    %p1023 = scmp.le.s32.totalorder 2, %s9
    // Predicated region
    $region45: #{bottleneck_forward.4} parent=5 // pred_check
      %p1024 = pneg %p1023
    $region46: #{bottleneck_forward.4} parent=5 // pred_check_branch
      %1026 = sbr.rel (%p1024) target = $region48
    $region47: #{bottleneck_forward.4} parent=5 // pred_region
      %s1027 = ssub.s32 %s9, 2
      // Predicated region
      $region49: #{bottleneck_forward.4} parent=47 // pred_check
        %p1028 = pneg %p141
      $region50: #{bottleneck_forward.4} parent=47 // pred_check_branch
        %1030 = sbr.rel (%p1028) target = $region52
      $region51: #{bottleneck_forward.4} parent=47 // pred_region
        %s1031 = smul.u32 32, %s22
        %p1032 = scmp.lt.s32.totalorder %s1031, 63
        %s1033 = scalar_select %p1032, %s1031, 63
        %p1034 = scmp.lt.s32.totalorder %s23, 0
        %s1035 = scalar_select %p1034, %s23, 0
        %s1036 = sadd.s32 %s1035, %s1033
        %s1037 = smul.addr %s1036, 4
        %s1038 = scalar_lea.vmem %s3, %s1037
      $region52: #{bottleneck_forward.4} parent=47 // pred_fallthru
        _
    $region48: #{bottleneck_forward.4} parent=5 // pred_fallthru
      _
  $region6: #{bottleneck_forward.4} parent=0 // loop_footer
    %s13 = sadd.s32 1, %s9
  $region7: #{bottleneck_forward.4} parent=0 // loop_footer_branch
    %8 = sbr.rel target = $region3
  $region8: #{bottleneck_forward.4} parent=0 // loop_exit
    _

// kernel: bottleneck_forward.5
$region0: #{bottleneck_forward.5}
  #allocation0 [shape = 'u32[]', space=smem, size = 0x4, offset = 0x4, fixed_abs, tag = 'smem constant byte address 0x4 - core index']
  #allocation1 [shape = 'u32[144,128]{1,0:T(1,128)}', space=vmem, size = 0x12000, scoped, tag = 'internal scratch']
  %s0 = inlined_call_operand.vmem [shape: bf16[2,4,9,9,128], index: 0, kind: input, shape index: {}]
  %s1 = inlined_call_operand.vmem [shape: bf16[9,128,128], index: 1, kind: input, shape index: {}]
  %s2 = inlined_call_operand.vmem [shape: f32[1,128], index: 2, kind: input, shape index: {}]
  %s3 = inlined_call_operand.vmem [shape: bf16[2,64,128], index: 3, kind: output, shape index: {}]
  %s4 = sld [smem:[#allocation0]]
  $region45: #{bottleneck_forward.5} parent=0
    _
  %s6 = ssub.s32 1, %s4
  %s7 = scalar_select 0, %s6, %s4
  loop: start=0, step=1, limit=4
  $region2: #{bottleneck_forward.5} parent=0 // loop_pre_header
    _
  $region3: #{bottleneck_forward.5} parent=0 // loop_header
    %s9 = sphi 0, %s13
    %p10 = scmp.ge.s32.totalorder %s9, 4
    %s19 = sphi 0, %s21
    %s22 = sphi 0, %s19
    %s23 = sphi 0, %s22
    %s39 = sphi 0, %s23
    %s43 = sphi 0, %s43
    %s45 = sphi 0, %s43
    %s46 = sphi 0, %s45
    %s60 = sphi 0, %s46
    %s64 = sphi 0, %s64
    %s66 = sphi 0, %s64
    %s67 = sphi 0, %s66
    %s81 = sphi 0, %s67
    %s87 = sphi 0, %s89
    %s90 = sphi 0, %s87
    %s91 = sphi 0, %s90
    %s107 = sphi 0, %s91
  $region4: #{bottleneck_forward.5} parent=0 // loop_header_branch
    %12 = sbr.rel (%p10) target = $region8
  $region5: #{bottleneck_forward.5} parent=0 // loop_body
    %s14 = ssub.s32 %s9, 1
    %s15 = ssub.s32 %s9, 2
    %s16 = sadd.s32 %s9, 1
    %s17 = ssub.s32 %s9, %s16
    %p18 = scmp.eq.s32.totalorder %s17, 0
    %s20 = sadd.s32 %s19, 1
    %s21 = scalar_select %p18, %s19, %s20
    %p24 = pneg %p18
    %p25 = scmp.eq.s32.totalorder %s9, 1
    %p26 = por %p24, %p25
    %p27 = scmp.ne.s32.totalorder %s19, %s22
    %p28 = scmp.eq.s32.totalorder %s9, 0
    %p29 = por %p27, %p28
    %p30 = scmp.ne.s32.totalorder %s19, %s22
    %p31 = scmp.eq.s32.totalorder %s14, 1
    %p32 = por %p30, %p31
    %p33 = scmp.ne.s32.totalorder %s22, %s23
    %p34 = scmp.eq.s32.totalorder %s14, 0
    %p35 = por %p33, %p34
    %p36 = scmp.ne.s32.totalorder %s22, %s23
    %p37 = scmp.eq.s32.totalorder %s15, 1
    %p38 = por %p36, %p37
    %p40 = scmp.ne.s32.totalorder %s23, %s39
    %p41 = scmp.eq.s32.totalorder %s15, 0
    %p42 = por %p40, %p41
    %s44 = sadd.s32 %s43, 1
    %p47 = scmp.eq.s32.totalorder %s9, 1
    %p48 = scmp.ne.s32.totalorder %s43, %s45
    %p49 = scmp.eq.s32.totalorder %s9, 0
    %p50 = por %p48, %p49
    %p51 = scmp.ne.s32.totalorder %s43, %s45
    %p52 = scmp.eq.s32.totalorder %s14, 1
    %p53 = por %p51, %p52
    %p54 = scmp.ne.s32.totalorder %s45, %s46
    %p55 = scmp.eq.s32.totalorder %s14, 0
    %p56 = por %p54, %p55
    %p57 = scmp.ne.s32.totalorder %s45, %s46
    %p58 = scmp.eq.s32.totalorder %s15, 1
    %p59 = por %p57, %p58
    %p61 = scmp.ne.s32.totalorder %s46, %s60
    %p62 = scmp.eq.s32.totalorder %s15, 0
    %p63 = por %p61, %p62
    %s65 = sadd.s32 %s64, 1
    %p68 = scmp.eq.s32.totalorder %s9, 1
    %p69 = scmp.ne.s32.totalorder %s64, %s66
    %p70 = scmp.eq.s32.totalorder %s9, 0
    %p71 = por %p69, %p70
    %p72 = scmp.ne.s32.totalorder %s64, %s66
    %p73 = scmp.eq.s32.totalorder %s14, 1
    %p74 = por %p72, %p73
    %p75 = scmp.ne.s32.totalorder %s66, %s67
    %p76 = scmp.eq.s32.totalorder %s14, 0
    %p77 = por %p75, %p76
    %p78 = scmp.ne.s32.totalorder %s66, %s67
    %p79 = scmp.eq.s32.totalorder %s15, 1
    %p80 = por %p78, %p79
    %p82 = scmp.ne.s32.totalorder %s67, %s81
    %p83 = scmp.eq.s32.totalorder %s15, 0
    %p84 = por %p82, %p83
    %s85 = ssub.s32 %s9, %s16
    %p86 = scmp.eq.s32.totalorder %s85, 0
    %s88 = sadd.s32 %s87, 1
    %s89 = scalar_select %p86, %s87, %s88
    %p92 = pneg %p86
    %p93 = scmp.eq.s32.totalorder %s9, 1
    %p94 = por %p92, %p93
    %p95 = scmp.ne.s32.totalorder %s87, %s90
    %p96 = scmp.eq.s32.totalorder %s9, 0
    %p97 = por %p95, %p96
    %p98 = scmp.ne.s32.totalorder %s87, %s90
    %p99 = scmp.eq.s32.totalorder %s14, 1
    %p100 = por %p98, %p99
    %p101 = scmp.ne.s32.totalorder %s90, %s91
    %p102 = scmp.eq.s32.totalorder %s14, 0
    %p103 = por %p101, %p102
    %p104 = scmp.ne.s32.totalorder %s90, %s91
    %p105 = scmp.eq.s32.totalorder %s15, 1
    %p106 = por %p104, %p105
    %p108 = scmp.ne.s32.totalorder %s91, %s107
    %p109 = scmp.eq.s32.totalorder %s15, 0
    %p110 = por %p108, %p109
    %p111 = scmp.le.s32.totalorder 1, %s9
    %p112 = scmp.lt.s32.totalorder %s9, 3
    %p113 = pnand %p111, %p112
    %p114 = pneg %p113
    // Predicated region
    $region9: #{bottleneck_forward.5} parent=5 // pred_check
      _
    $region10: #{bottleneck_forward.5} parent=5 // pred_check_branch
      %116 = sbr.rel (%p113) target = $region12
    $region11: #{bottleneck_forward.5} parent=5 // pred_region
      %s117 = ssub.s32 %s9, 1
      // Predicated region
      $region13: #{bottleneck_forward.5} parent=11 // pred_check
        %p118 = pneg %p56
      $region14: #{bottleneck_forward.5} parent=11 // pred_check_branch
        %120 = sbr.rel (%p118) target = $region16
      $region15: #{bottleneck_forward.5} parent=11 // pred_region
        _
      $region16: #{bottleneck_forward.5} parent=11 // pred_fallthru
        _
      // Predicated region
      $region17: #{bottleneck_forward.5} parent=11 // pred_check
        %p121 = pneg %p77
      $region18: #{bottleneck_forward.5} parent=11 // pred_check_branch
        %123 = sbr.rel (%p121) target = $region20
      $region19: #{bottleneck_forward.5} parent=11 // pred_region
        _
      $region20: #{bottleneck_forward.5} parent=11 // pred_fallthru
        _
    $region12: #{bottleneck_forward.5} parent=5 // pred_fallthru
      _
    %p124 = scmp.lt.s32.totalorder %s9, 2
    // Predicated region
    $region21: #{bottleneck_forward.5} parent=5 // pred_check
      %p125 = pneg %p124
    $region22: #{bottleneck_forward.5} parent=5 // pred_check_branch
      %127 = sbr.rel (%p125) target = $region24
    $region23: #{bottleneck_forward.5} parent=5 // pred_region
      // Predicated region
      $region25: #{bottleneck_forward.5} parent=23 // pred_check
        %p128 = pneg %p29
      $region26: #{bottleneck_forward.5} parent=23 // pred_check_branch
        %130 = sbr.rel (%p128) target = $region28
      $region27: #{bottleneck_forward.5} parent=23 // pred_region
        %p131 = scmp.lt.s32.totalorder %s9, 1
        %s132 = scalar_select %p131, %s9, 1
        %s133 = smul.addr %s132, 72
        %s134 = smul.addr %s133, 4
        %s135 = scalar_lea.vmem %s0, %s134
      $region28: #{bottleneck_forward.5} parent=23 // pred_fallthru
        _
    $region24: #{bottleneck_forward.5} parent=5 // pred_fallthru
      _
    %p136 = scmp.le.s32.totalorder 1, %s9
    %p137 = scmp.lt.s32.totalorder %s9, 3
    %p138 = pnand %p136, %p137
    %p139 = pneg %p138
    // Predicated region
    $region29: #{bottleneck_forward.5} parent=5 // pred_check
      _
    $region30: #{bottleneck_forward.5} parent=5 // pred_check_branch
      %141 = sbr.rel (%p138) target = $region32
    $region31: #{bottleneck_forward.5} parent=5 // pred_region
      %s142 = ssub.s32 %s9, 1
      %p143 = scmp.lt.s32.totalorder %s14, 1
      %s144 = scalar_select %p143, %s14, 1
      %s145 = smul.addr %s144, 72
      %s146 = smul.addr %s145, 4
      %s147 = scalar_lea.vmem %s0, %s146
      %p148 = pneg %p35
      %p149 = pneg %p32
      %p150 = pneg %p56
      %p151 = pneg %p53
      %p152 = pneg %p77
      %p153 = pneg %p74
      %p154 = pneg %p103
      %p155 = pneg %p100
      %p156 = scmp.lt.s32.totalorder %s14, 1
      %s157 = scalar_select %p156, %s14, 1
      %s158 = smul.addr %s157, 8
      %s159 = smul.addr %s158, 4
      %s160 = scalar_lea.vmem %s3, %s159
      %p161 = scmp.lt.s32.totalorder %s14, 1
      %s162 = scalar_select %p161, %s14, 1
      %s163 = smul.addr %s162, 72
      %s164 = smul.addr %s163, 4
      %s165 = scalar_lea.vmem %s0, %s164
      %p166 = scmp.lt.s32.totalorder %s14, 1
      %s167 = scalar_select %p166, %s14, 1
      %s168 = smul.addr %s167, 8
      %s169 = smul.addr %s168, 4
      %s170 = scalar_lea.vmem %s3, %s169
      %v172 = vld [vmem:[%s165] sm:$0xf]
      %v173 = vld [vmem:[%s165 + $0x8] sm:$0xf]
      %v174 = vld [vmem:[%s165 + $0x10] sm:$0xf]
      %v175 = vld [vmem:[%s165 + $0x18] sm:$0xf]
      %v176 = vld [vmem:[%s165 + $0x20] sm:$0xf]
      %v177 = vld [vmem:[%s165 + $0x28] sm:$0xf]
      %v178 = vld [vmem:[%s165 + $0x30] sm:$0xf]
      %v179 = vld [vmem:[%s165 + $0x38] sm:$0xf]
      %v180 = vld [vmem:[%s1] sm:$0xf]
      %v181 = vld [vmem:[%s1 + $0x4] sm:$0xf]
      %v182 = vld [vmem:[%s1 + $0x8] sm:$0xf]
      %v183 = vld [vmem:[%s1 + $0xc] sm:$0xf]
      %v184 = vld [vmem:[%s1 + $0x10] sm:$0xf]
      %v185 = vld [vmem:[%s1 + $0x14] sm:$0xf]
      %v186 = vld [vmem:[%s1 + $0x18] sm:$0xf]
      %v187 = vld [vmem:[%s1 + $0x1c] sm:$0xf]
      %v188 = vld [vmem:[%s1 + $0x20] sm:$0xf]
      %v189 = vld [vmem:[%s1 + $0x24] sm:$0xf]
      %v190 = vld [vmem:[%s1 + $0x28] sm:$0xf]
      %v191 = vld [vmem:[%s1 + $0x2c] sm:$0xf]
      %v192 = vld [vmem:[%s1 + $0x30] sm:$0xf]
      %v193 = vld [vmem:[%s1 + $0x34] sm:$0xf]
      %v194 = vld [vmem:[%s1 + $0x38] sm:$0xf]
      %v195 = vld [vmem:[%s1 + $0x3c] sm:$0xf]
      %s196 = scalar_lea.vmem %s165, 72
      %v197 = vld [vmem:[%s196] sm:$0xf]
      %v198 = vld [vmem:[%s196 + $0x8] sm:$0xf]
      %v199 = vld [vmem:[%s196 + $0x10] sm:$0xf]
      %v200 = vld [vmem:[%s196 + $0x18] sm:$0xf]
      %v201 = vld [vmem:[%s196 + $0x20] sm:$0xf]
      %v202 = vld [vmem:[%s196 + $0x28] sm:$0xf]
      %v203 = vld [vmem:[%s196 + $0x30] sm:$0xf]
      %v204 = vld [vmem:[%s196 + $0x38] sm:$0xf]
      %s205 = scalar_lea.vmem %s1, 64
      %v206 = vld [vmem:[%s205] sm:$0xf]
      %v207 = vld [vmem:[%s205 + $0x4] sm:$0xf]
      %v208 = vld [vmem:[%s205 + $0x8] sm:$0xf]
      %v209 = vld [vmem:[%s205 + $0xc] sm:$0xf]
      %v210 = vld [vmem:[%s205 + $0x10] sm:$0xf]
      %v211 = vld [vmem:[%s205 + $0x14] sm:$0xf]
      %v212 = vld [vmem:[%s205 + $0x18] sm:$0xf]
      %v213 = vld [vmem:[%s205 + $0x1c] sm:$0xf]
      %v214 = vld [vmem:[%s205 + $0x20] sm:$0xf]
      %v215 = vld [vmem:[%s205 + $0x24] sm:$0xf]
      %v216 = vld [vmem:[%s205 + $0x28] sm:$0xf]
      %v217 = vld [vmem:[%s205 + $0x2c] sm:$0xf]
      %v218 = vld [vmem:[%s205 + $0x30] sm:$0xf]
      %v219 = vld [vmem:[%s205 + $0x34] sm:$0xf]
      %v220 = vld [vmem:[%s205 + $0x38] sm:$0xf]
      %v221 = vld [vmem:[%s205 + $0x3c] sm:$0xf]
      %v230 = vunpack.c.l.b16 %v197
      %v231 = vunpack.c.l.b16 %v198
      %v232 = vunpack.c.l.b16 %v199
      %v233 = vunpack.c.l.b16 %v200
      %v234 = vunpack.c.l.b16 %v201
      %v235 = vunpack.c.l.b16 %v202
      %v236 = vunpack.c.l.b16 %v203
      %v237 = vunpack.c.l.b16 %v204
      %v238 = vpack.c.b16 %v231, %v230
      %v239 = vpack.c.b16 %v233, %v232
      %v240 = vpack.c.b16 %v235, %v234
      %v241 = vpack.c.b16 %v237, %v236
      %v262 = vunpack.c.l.b16 %v206
      %v263 = vunpack.c.l.b16 %v207
      %v264 = vunpack.c.l.b16 %v208
      %v265 = vunpack.c.l.b16 %v209
      %v266 = vunpack.c.l.b16 %v210
      %v267 = vunpack.c.l.b16 %v211
      %v268 = vunpack.c.l.b16 %v212
      %v269 = vunpack.c.l.b16 %v213
      %v270 = vunpack.c.l.b16 %v214
      %v271 = vunpack.c.l.b16 %v215
      %v272 = vunpack.c.l.b16 %v216
      %v273 = vunpack.c.l.b16 %v217
      %v274 = vunpack.c.l.b16 %v218
      %v275 = vunpack.c.l.b16 %v219
      %v276 = vunpack.c.l.b16 %v220
      %v277 = vunpack.c.l.b16 %v221
      %v278 = vpack.c.b16 %v263, %v262
      %v279 = vpack.c.b16 %v265, %v264
      %v280 = vpack.c.b16 %v267, %v266
      %v281 = vpack.c.b16 %v269, %v268
      %v282 = vpack.c.b16 %v271, %v270
      %v283 = vpack.c.b16 %v273, %v272
      %v284 = vpack.c.b16 %v275, %v274
      %v285 = vpack.c.b16 %v277, %v276
      %294 = vmatprep.subr.bf16.mxu0 0
      %295 = vmatpush1.bf16.msra.mxu0 %v278
      %296 = vmatprep.subr.bf16.mxu0 0
      %297 = vmatpush1.bf16.msra.mxu0 %v279
      %298 = vmatprep.subr.bf16.mxu0 0
      %299 = vmatpush1.bf16.msra.mxu0 %v280
      %300 = vmatprep.subr.bf16.mxu0 0
      %301 = vmatpush1.bf16.msra.mxu0 %v281
      %302 = vmatprep.subr.bf16.mxu0 0
      %303 = vmatpush1.bf16.msra.mxu0 %v282
      %304 = vmatprep.subr.bf16.mxu0 0
      %305 = vmatpush1.bf16.msra.mxu0 %v283
      %306 = vmatprep.subr.bf16.mxu0 0
      %307 = vmatpush1.bf16.msra.mxu0 %v284
      %308 = vmatprep.subr.bf16.mxu0 0
      %309 = vmatpush1.bf16.msra.mxu0 %v285
      %310 = vmatprep.subr.bf16.mxu0 0
      %311 = vmatpush1.bf16.msra.mxu0 0
      %312 = vmatprep.subr.bf16.mxu0 0
      %313 = vmatpush1.bf16.msra.mxu0 0
      %314 = vmatprep.subr.bf16.mxu0 0
      %315 = vmatpush1.bf16.msra.mxu0 0
      %316 = vmatprep.subr.bf16.mxu0 0
      %317 = vmatpush1.bf16.msra.mxu0 0
      %318 = vmatprep.subr.bf16.mxu0 0
      %319 = vmatpush1.bf16.msra.mxu0 0
      %320 = vmatprep.subr.bf16.mxu0 0
      %321 = vmatpush1.bf16.msra.mxu0 0
      %322 = vmatprep.subr.bf16.mxu0 0
      %323 = vmatpush1.bf16.msra.mxu0 0
      %324 = vmatprep.subr.bf16.mxu0 0
      %325 = vmatpush1.bf16.msra.mxu0 0
      %326 = vmatprep.mubr.bf16.mxu0 0
      %327 = vmatmul.mubr.bf16.gmra.mrb[0].mxu0 %v238
      %v328 = vpop.f32.mrb[0].mxu0
      %v329 = vadd.f32 0.0, %v328
      %v330 = vpop.f32.mrb[0].mxu0
      %v331 = vpop.f32.mrb[0].mxu0
      %v332 = vadd.f32 0.0, %v331
      %v333 = vpop.f32.mrb[0].mxu0
      %334 = vmatprep.mubr.bf16.mxu0 0
      %335 = vmatmul.mubr.bf16.gmra.mrb[0].mxu0 %v239
      %v336 = vpop.f32.mrb[0].mxu0
      %v337 = vadd.f32 0.0, %v336
      %v338 = vpop.f32.mrb[0].mxu0
      %v339 = vpop.f32.mrb[0].mxu0
      %v340 = vadd.f32 0.0, %v339
      %v341 = vpop.f32.mrb[0].mxu0
      %342 = vmatprep.mubr.bf16.mxu0 0
      %343 = vmatmul.mubr.bf16.gmra.mrb[0].mxu0 %v240
      %v344 = vpop.f32.mrb[0].mxu0
      %v345 = vadd.f32 0.0, %v344
      %v346 = vpop.f32.mrb[0].mxu0
      %v347 = vpop.f32.mrb[0].mxu0
      %v348 = vadd.f32 0.0, %v347
      %v349 = vpop.f32.mrb[0].mxu0
      %350 = vmatprep.mubr.bf16.mxu0 0
      %351 = vmatmul.mubr.bf16.gmra.mrb[0].mxu0 %v241
      %v352 = vpop.f32.mrb[0].mxu0
      %v353 = vadd.f32 0.0, %v352
      %v354 = vpop.f32.mrb[0].mxu0
      %v355 = vpop.f32.mrb[0].mxu0
      %v356 = vadd.f32 0.0, %v355
      %v357 = vpop.f32.mrb[0].mxu0
      %358 = vdwg.mxu0
      %v367 = vunpack.c.l.b16 %v172
      %v368 = vunpack.c.l.b16 %v173
      %v369 = vunpack.c.l.b16 %v174
      %v370 = vunpack.c.l.b16 %v175
      %v371 = vunpack.c.l.b16 %v176
      %v372 = vunpack.c.l.b16 %v177
      %v373 = vunpack.c.l.b16 %v178
      %v374 = vunpack.c.l.b16 %v179
      %v375 = vpack.c.b16 %v368, %v367
      %v376 = vpack.c.b16 %v370, %v369
      %v377 = vpack.c.b16 %v372, %v371
      %v378 = vpack.c.b16 %v374, %v373
      %v399 = vunpack.c.l.b16 %v180
      %v400 = vunpack.c.l.b16 %v181
      %v401 = vunpack.c.l.b16 %v182
      %v402 = vunpack.c.l.b16 %v183
      %v403 = vunpack.c.l.b16 %v184
      %v404 = vunpack.c.l.b16 %v185
      %v405 = vunpack.c.l.b16 %v186
      %v406 = vunpack.c.l.b16 %v187
      %v407 = vunpack.c.l.b16 %v188
      %v408 = vunpack.c.l.b16 %v189
      %v409 = vunpack.c.l.b16 %v190
      %v410 = vunpack.c.l.b16 %v191
      %v411 = vunpack.c.l.b16 %v192
      %v412 = vunpack.c.l.b16 %v193
      %v413 = vunpack.c.l.b16 %v194
      %v414 = vunpack.c.l.b16 %v195
      %v415 = vpack.c.b16 %v400, %v399
      %v416 = vpack.c.b16 %v402, %v401
      %v417 = vpack.c.b16 %v404, %v403
      %v418 = vpack.c.b16 %v406, %v405
      %v419 = vpack.c.b16 %v408, %v407
      %v420 = vpack.c.b16 %v410, %v409
      %v421 = vpack.c.b16 %v412, %v411
      %v422 = vpack.c.b16 %v414, %v413
      %431 = vmatprep.subr.bf16.mxu0 0
      %432 = vmatpush1.bf16.msra.mxu0 %v415
      %433 = vmatprep.subr.bf16.mxu0 0
      %434 = vmatpush1.bf16.msra.mxu0 %v416
      %435 = vmatprep.subr.bf16.mxu0 0
      %436 = vmatpush1.bf16.msra.mxu0 %v417
      %437 = vmatprep.subr.bf16.mxu0 0
      %438 = vmatpush1.bf16.msra.mxu0 %v418
      %439 = vmatprep.subr.bf16.mxu0 0
      %440 = vmatpush1.bf16.msra.mxu0 %v419
      %441 = vmatprep.subr.bf16.mxu0 0
      %442 = vmatpush1.bf16.msra.mxu0 %v420
      %443 = vmatprep.subr.bf16.mxu0 0
      %444 = vmatpush1.bf16.msra.mxu0 %v421
      %445 = vmatprep.subr.bf16.mxu0 0
      %446 = vmatpush1.bf16.msra.mxu0 %v422
      %447 = vmatprep.subr.bf16.mxu0 0
      %448 = vmatpush1.bf16.msra.mxu0 0
      %449 = vmatprep.subr.bf16.mxu0 0
      %450 = vmatpush1.bf16.msra.mxu0 0
      %451 = vmatprep.subr.bf16.mxu0 0
      %452 = vmatpush1.bf16.msra.mxu0 0
      %453 = vmatprep.subr.bf16.mxu0 0
      %454 = vmatpush1.bf16.msra.mxu0 0
      %455 = vmatprep.subr.bf16.mxu0 0
      %456 = vmatpush1.bf16.msra.mxu0 0
      %457 = vmatprep.subr.bf16.mxu0 0
      %458 = vmatpush1.bf16.msra.mxu0 0
      %459 = vmatprep.subr.bf16.mxu0 0
      %460 = vmatpush1.bf16.msra.mxu0 0
      %461 = vmatprep.subr.bf16.mxu0 0
      %462 = vmatpush1.bf16.msra.mxu0 0
      %463 = vmatprep.mubr.bf16.mxu0 0
      %464 = vmatmul.mubr.bf16.gmra.mrb[0].mxu0 %v375
      %v465 = vpop.f32.mrb[0].mxu0
      %v466 = vadd.f32 %v329, %v465
      %v467 = vpop.f32.mrb[0].mxu0
      %v468 = vpop.f32.mrb[0].mxu0
      %v469 = vadd.f32 %v332, %v468
      %v470 = vpop.f32.mrb[0].mxu0
      %471 = vmatprep.mubr.bf16.mxu0 0
      %472 = vmatmul.mubr.bf16.gmra.mrb[0].mxu0 %v376
      %v473 = vpop.f32.mrb[0].mxu0
      %v474 = vadd.f32 %v337, %v473
      %v475 = vpop.f32.mrb[0].mxu0
      %v476 = vpop.f32.mrb[0].mxu0
      %v477 = vadd.f32 %v340, %v476
      %v478 = vpop.f32.mrb[0].mxu0
      %479 = vmatprep.mubr.bf16.mxu0 0
      %480 = vmatmul.mubr.bf16.gmra.mrb[0].mxu0 %v377
      %v481 = vpop.f32.mrb[0].mxu0
      %v482 = vadd.f32 %v345, %v481
      %v483 = vpop.f32.mrb[0].mxu0
      %v484 = vpop.f32.mrb[0].mxu0
      %v485 = vadd.f32 %v348, %v484
      %v486 = vpop.f32.mrb[0].mxu0
      %487 = vmatprep.mubr.bf16.mxu0 0
      %488 = vmatmul.mubr.bf16.gmra.mrb[0].mxu0 %v378
      %v489 = vpop.f32.mrb[0].mxu0
      %v490 = vadd.f32 %v353, %v489
      %v491 = vpop.f32.mrb[0].mxu0
      %v492 = vpop.f32.mrb[0].mxu0
      %v493 = vadd.f32 %v356, %v492
      %v494 = vpop.f32.mrb[0].mxu0
      %495 = vdwg.mxu0
      %v496 = vld [vmem:[%s165] sm:$0xf]
      %v497 = vld [vmem:[%s165 + $0x4] sm:$0x1]
      %v498 = vld [vmem:[%s165 + $0x8] sm:$0xf]
      %v499 = vld [vmem:[%s165 + $0xc] sm:$0x1]
      %v500 = vld [vmem:[%s165 + $0x10] sm:$0xf]
      %v501 = vld [vmem:[%s165 + $0x14] sm:$0x1]
      %v502 = vld [vmem:[%s165 + $0x18] sm:$0xf]
      %v503 = vld [vmem:[%s165 + $0x1c] sm:$0x1]
      %v504 = vld [vmem:[%s165 + $0x20] sm:$0xf]
      %v505 = vld [vmem:[%s165 + $0x24] sm:$0x1]
      %v506 = vld [vmem:[%s165 + $0x28] sm:$0xf]
      %v507 = vld [vmem:[%s165 + $0x2c] sm:$0x1]
      %v508 = vld [vmem:[%s165 + $0x30] sm:$0xf]
      %v509 = vld [vmem:[%s165 + $0x34] sm:$0x1]
      %v510 = vld [vmem:[%s165 + $0x38] sm:$0xf]
      %v511 = vld [vmem:[%s165 + $0x3c] sm:$0x1]
      %vm512 = vsmask.f32 3328
      %vm513 = vsmask.f32 7440
      %vm514 = vmor %vm512, %vm513
      %v516 = vshrl.u32 %v496, 16
      %v518 = vrot.slane %v516, 4
      %v519 = vshll.u32 %v496, 16
      %v521 = vrot.slane %v519, 5
      %v522 = vor.u32 %v518, %v521
      %v523 = vrot.slane %v522, 4
      %v525 = vshll.u32 %v497, 16
      %v527 = vrot.slane %v525, 5
      %v528 = vsel %vm514, %v523, %v527
      %v530 = vshrl.u32 %v498, 16
      %v532 = vrot.slane %v530, 4
      %v533 = vshll.u32 %v498, 16
      %v535 = vrot.slane %v533, 5
      %v536 = vor.u32 %v532, %v535
      %v537 = vrot.slane %v536, 4
      %v539 = vshll.u32 %v499, 16
      %v541 = vrot.slane %v539, 5
      %v542 = vsel %vm514, %v537, %v541
      %v544 = vshrl.u32 %v500, 16
      %v546 = vrot.slane %v544, 4
      %v547 = vshll.u32 %v500, 16
      %v549 = vrot.slane %v547, 5
      %v550 = vor.u32 %v546, %v549
      %v551 = vrot.slane %v550, 4
      %v553 = vshll.u32 %v501, 16
      %v555 = vrot.slane %v553, 5
      %v556 = vsel %vm514, %v551, %v555
      %v558 = vshrl.u32 %v502, 16
      %v560 = vrot.slane %v558, 4
      %v561 = vshll.u32 %v502, 16
      %v563 = vrot.slane %v561, 5
      %v564 = vor.u32 %v560, %v563
      %v565 = vrot.slane %v564, 4
      %v567 = vshll.u32 %v503, 16
      %v569 = vrot.slane %v567, 5
      %v570 = vsel %vm514, %v565, %v569
      %v572 = vshrl.u32 %v504, 16
      %v574 = vrot.slane %v572, 4
      %v575 = vshll.u32 %v504, 16
      %v577 = vrot.slane %v575, 5
      %v578 = vor.u32 %v574, %v577
      %v579 = vrot.slane %v578, 4
      %v581 = vshll.u32 %v505, 16
      %v583 = vrot.slane %v581, 5
      %v584 = vsel %vm514, %v579, %v583
      %v586 = vshrl.u32 %v506, 16
      %v588 = vrot.slane %v586, 4
      %v589 = vshll.u32 %v506, 16
      %v591 = vrot.slane %v589, 5
      %v592 = vor.u32 %v588, %v591
      %v593 = vrot.slane %v592, 4
      %v595 = vshll.u32 %v507, 16
      %v597 = vrot.slane %v595, 5
      %v598 = vsel %vm514, %v593, %v597
      %v600 = vshrl.u32 %v508, 16
      %v602 = vrot.slane %v600, 4
      %v603 = vshll.u32 %v508, 16
      %v605 = vrot.slane %v603, 5
      %v606 = vor.u32 %v602, %v605
      %v607 = vrot.slane %v606, 4
      %v609 = vshll.u32 %v509, 16
      %v611 = vrot.slane %v609, 5
      %v612 = vsel %vm514, %v607, %v611
      %v614 = vshrl.u32 %v510, 16
      %v616 = vrot.slane %v614, 4
      %v617 = vshll.u32 %v510, 16
      %v619 = vrot.slane %v617, 5
      %v620 = vor.u32 %v616, %v619
      %v621 = vrot.slane %v620, 4
      %v623 = vshll.u32 %v511, 16
      %v625 = vrot.slane %v623, 5
      %v626 = vsel %vm514, %v621, %v625
      %s627 = scalar_lea.vmem %s1, 128
      %v628 = vld [vmem:[%s627] sm:$0xf]
      %v629 = vld [vmem:[%s627 + $0x4] sm:$0xf]
      %v630 = vld [vmem:[%s627 + $0x8] sm:$0xf]
      %v631 = vld [vmem:[%s627 + $0xc] sm:$0xf]
      %v632 = vld [vmem:[%s627 + $0x10] sm:$0xf]
      %v633 = vld [vmem:[%s627 + $0x14] sm:$0xf]
      %v634 = vld [vmem:[%s627 + $0x18] sm:$0xf]
      %v635 = vld [vmem:[%s627 + $0x1c] sm:$0xf]
      %v636 = vld [vmem:[%s627 + $0x20] sm:$0xf]
      %v637 = vld [vmem:[%s627 + $0x24] sm:$0xf]
      %v638 = vld [vmem:[%s627 + $0x28] sm:$0xf]
      %v639 = vld [vmem:[%s627 + $0x2c] sm:$0xf]
      %v640 = vld [vmem:[%s627 + $0x30] sm:$0xf]
      %v641 = vld [vmem:[%s627 + $0x34] sm:$0xf]
      %v642 = vld [vmem:[%s627 + $0x38] sm:$0xf]
      %v643 = vld [vmem:[%s627 + $0x3c] sm:$0xf]
      %v644 = vunpack.c.l.b16 %v528
      %v645 = vunpack.c.l.b16 %v542
      %v646 = vunpack.c.l.b16 %v556
      %v647 = vunpack.c.l.b16 %v570
      %v648 = vunpack.c.l.b16 %v584
      %v649 = vunpack.c.l.b16 %v598
      %v650 = vunpack.c.l.b16 %v612
      %v651 = vunpack.c.l.b16 %v626
      %v652 = vpack.c.b16 %v645, %v644
      %v653 = vpack.c.b16 %v647, %v646
      %v654 = vpack.c.b16 %v649, %v648
      %v655 = vpack.c.b16 %v651, %v650
      %v676 = vunpack.c.l.b16 %v628
      %v677 = vunpack.c.l.b16 %v629
      %v678 = vunpack.c.l.b16 %v630
      %v679 = vunpack.c.l.b16 %v631
      %v680 = vunpack.c.l.b16 %v632
      %v681 = vunpack.c.l.b16 %v633
      %v682 = vunpack.c.l.b16 %v634
      %v683 = vunpack.c.l.b16 %v635
      %v684 = vunpack.c.l.b16 %v636
      %v685 = vunpack.c.l.b16 %v637
      %v686 = vunpack.c.l.b16 %v638
      %v687 = vunpack.c.l.b16 %v639
      %v688 = vunpack.c.l.b16 %v640
      %v689 = vunpack.c.l.b16 %v641
      %v690 = vunpack.c.l.b16 %v642
      %v691 = vunpack.c.l.b16 %v643
      %v692 = vpack.c.b16 %v677, %v676
      %v693 = vpack.c.b16 %v679, %v678
      %v694 = vpack.c.b16 %v681, %v680
      %v695 = vpack.c.b16 %v683, %v682
      %v696 = vpack.c.b16 %v685, %v684
      %v697 = vpack.c.b16 %v687, %v686
      %v698 = vpack.c.b16 %v689, %v688
      %v699 = vpack.c.b16 %v691, %v690
      %708 = vmatprep.subr.bf16.mxu0 0
      %709 = vmatpush1.bf16.msra.mxu0 %v692
      %710 = vmatprep.subr.bf16.mxu0 0
      %711 = vmatpush1.bf16.msra.mxu0 %v693
      %712 = vmatprep.subr.bf16.mxu0 0
      %713 = vmatpush1.bf16.msra.mxu0 %v694
      %714 = vmatprep.subr.bf16.mxu0 0
      %715 = vmatpush1.bf16.msra.mxu0 %v695
      %716 = vmatprep.subr.bf16.mxu0 0
      %717 = vmatpush1.bf16.msra.mxu0 %v696
      %718 = vmatprep.subr.bf16.mxu0 0
      %719 = vmatpush1.bf16.msra.mxu0 %v697
      %720 = vmatprep.subr.bf16.mxu0 0
      %721 = vmatpush1.bf16.msra.mxu0 %v698
      %722 = vmatprep.subr.bf16.mxu0 0
      %723 = vmatpush1.bf16.msra.mxu0 %v699
      %724 = vmatprep.subr.bf16.mxu0 0
      %725 = vmatpush1.bf16.msra.mxu0 0
      %726 = vmatprep.subr.bf16.mxu0 0
      %727 = vmatpush1.bf16.msra.mxu0 0
      %728 = vmatprep.subr.bf16.mxu0 0
      %729 = vmatpush1.bf16.msra.mxu0 0
      %730 = vmatprep.subr.bf16.mxu0 0
      %731 = vmatpush1.bf16.msra.mxu0 0
      %732 = vmatprep.subr.bf16.mxu0 0
      %733 = vmatpush1.bf16.msra.mxu0 0
      %734 = vmatprep.subr.bf16.mxu0 0
      %735 = vmatpush1.bf16.msra.mxu0 0
      %736 = vmatprep.subr.bf16.mxu0 0
      %737 = vmatpush1.bf16.msra.mxu0 0
      %738 = vmatprep.subr.bf16.mxu0 0
      %739 = vmatpush1.bf16.msra.mxu0 0
      %740 = vmatprep.mubr.bf16.mxu0 0
      %741 = vmatmul.mubr.bf16.gmra.mrb[0].mxu0 %v652
      %v742 = vpop.f32.mrb[0].mxu0
      %v743 = vadd.f32 0.0, %v742
      %v744 = vpop.f32.mrb[0].mxu0
      %v745 = vpop.f32.mrb[0].mxu0
      %v746 = vadd.f32 0.0, %v745
      %v747 = vpop.f32.mrb[0].mxu0
      %748 = vmatprep.mubr.bf16.mxu0 0
      %749 = vmatmul.mubr.bf16.gmra.mrb[0].mxu0 %v653
      %v750 = vpop.f32.mrb[0].mxu0
      %v751 = vadd.f32 0.0, %v750
      %v752 = vpop.f32.mrb[0].mxu0
      %v753 = vpop.f32.mrb[0].mxu0
      %v754 = vadd.f32 0.0, %v753
      %v755 = vpop.f32.mrb[0].mxu0
      %756 = vmatprep.mubr.bf16.mxu0 0
      %757 = vmatmul.mubr.bf16.gmra.mrb[0].mxu0 %v654
      %v758 = vpop.f32.mrb[0].mxu0
      %v759 = vadd.f32 0.0, %v758
      %v760 = vpop.f32.mrb[0].mxu0
      %v761 = vpop.f32.mrb[0].mxu0
      %v762 = vadd.f32 0.0, %v761
      %v763 = vpop.f32.mrb[0].mxu0
      %764 = vmatprep.mubr.bf16.mxu0 0
      %765 = vmatmul.mubr.bf16.gmra.mrb[0].mxu0 %v655
      %v766 = vpop.f32.mrb[0].mxu0
      %v767 = vadd.f32 0.0, %v766
      %v768 = vpop.f32.mrb[0].mxu0
      %v769 = vpop.f32.mrb[0].mxu0
      %v770 = vadd.f32 0.0, %v769
      %v771 = vpop.f32.mrb[0].mxu0
      %772 = vdwg.mxu0
      %v773 = vadd.f32 %v466, %v743
      %v774 = vadd.f32 %v469, %v746
      %v775 = vadd.f32 %v474, %v751
      %v776 = vadd.f32 %v477, %v754
      %v777 = vadd.f32 %v482, %v759
      %v778 = vadd.f32 %v485, %v762
      %v779 = vadd.f32 %v490, %v767
      %v780 = vadd.f32 %v493, %v770
      %s781 = scalar_lea.vmem %s165, 144
      %v782 = vld [vmem:[%s781] sm:$0xf]
      %v783 = vld [vmem:[%s781 + $0x8] sm:$0xf]
      %v784 = vld [vmem:[%s781 + $0x10] sm:$0xf]
      %v785 = vld [vmem:[%s781 + $0x18] sm:$0xf]
      %v786 = vld [vmem:[%s781 + $0x20] sm:$0xf]
      %v787 = vld [vmem:[%s781 + $0x28] sm:$0xf]
      %v788 = vld [vmem:[%s781 + $0x30] sm:$0xf]
      %v789 = vld [vmem:[%s781 + $0x38] sm:$0xf]
      %s790 = scalar_lea.vmem %s1, 192
      %v791 = vld [vmem:[%s790] sm:$0xf]
      %v792 = vld [vmem:[%s790 + $0x4] sm:$0xf]
      %v793 = vld [vmem:[%s790 + $0x8] sm:$0xf]
      %v794 = vld [vmem:[%s790 + $0xc] sm:$0xf]
      %v795 = vld [vmem:[%s790 + $0x10] sm:$0xf]
      %v796 = vld [vmem:[%s790 + $0x14] sm:$0xf]
      %v797 = vld [vmem:[%s790 + $0x18] sm:$0xf]
      %v798 = vld [vmem:[%s790 + $0x1c] sm:$0xf]
      %v799 = vld [vmem:[%s790 + $0x20] sm:$0xf]
      %v800 = vld [vmem:[%s790 + $0x24] sm:$0xf]
      %v801 = vld [vmem:[%s790 + $0x28] sm:$0xf]
      %v802 = vld [vmem:[%s790 + $0x2c] sm:$0xf]
      %v803 = vld [vmem:[%s790 + $0x30] sm:$0xf]
      %v804 = vld [vmem:[%s790 + $0x34] sm:$0xf]
      %v805 = vld [vmem:[%s790 + $0x38] sm:$0xf]
      %v806 = vld [vmem:[%s790 + $0x3c] sm:$0xf]
      %v815 = vunpack.c.l.b16 %v782
      %v816 = vunpack.c.l.b16 %v783
      %v817 = vunpack.c.l.b16 %v784
      %v818 = vunpack.c.l.b16 %v785
      %v819 = vunpack.c.l.b16 %v786
      %v820 = vunpack.c.l.b16 %v787
      %v821 = vunpack.c.l.b16 %v788
      %v822 = vunpack.c.l.b16 %v789
      %v823 = vpack.c.b16 %v816, %v815
      %v824 = vpack.c.b16 %v818, %v817
      %v825 = vpack.c.b16 %v820, %v819
      %v826 = vpack.c.b16 %v822, %v821
      %v847 = vunpack.c.l.b16 %v791
      %v848 = vunpack.c.l.b16 %v792
      %v849 = vunpack.c.l.b16 %v793
      %v850 = vunpack.c.l.b16 %v794
      %v851 = vunpack.c.l.b16 %v795
      %v852 = vunpack.c.l.b16 %v796
      %v853 = vunpack.c.l.b16 %v797
      %v854 = vunpack.c.l.b16 %v798
      %v855 = vunpack.c.l.b16 %v799
      %v856 = vunpack.c.l.b16 %v800
      %v857 = vunpack.c.l.b16 %v801
      %v858 = vunpack.c.l.b16 %v802
      %v859 = vunpack.c.l.b16 %v803
      %v860 = vunpack.c.l.b16 %v804
      %v861 = vunpack.c.l.b16 %v805
      %v862 = vunpack.c.l.b16 %v806
      %v863 = vpack.c.b16 %v848, %v847
      %v864 = vpack.c.b16 %v850, %v849
      %v865 = vpack.c.b16 %v852, %v851
      %v866 = vpack.c.b16 %v854, %v853
      %v867 = vpack.c.b16 %v856, %v855
      %v868 = vpack.c.b16 %v858, %v857
      %v869 = vpack.c.b16 %v860, %v859
      %v870 = vpack.c.b16 %v862, %v861
      %879 = vmatprep.subr.bf16.mxu0 0
      %880 = vmatpush1.bf16.msra.mxu0 %v863
      %881 = vmatprep.subr.bf16.mxu0 0
      %882 = vmatpush1.bf16.msra.mxu0 %v864
      %883 = vmatprep.subr.bf16.mxu0 0
      %884 = vmatpush1.bf16.msra.mxu0 %v865
      %885 = vmatprep.subr.bf16.mxu0 0
      %886 = vmatpush1.bf16.msra.mxu0 %v866
      %887 = vmatprep.subr.bf16.mxu0 0
      %888 = vmatpush1.bf16.msra.mxu0 %v867
      %889 = vmatprep.subr.bf16.mxu0 0
      %890 = vmatpush1.bf16.msra.mxu0 %v868
      %891 = vmatprep.subr.bf16.mxu0 0
      %892 = vmatpush1.bf16.msra.mxu0 %v869
      %893 = vmatprep.subr.bf16.mxu0 0
      %894 = vmatpush1.bf16.msra.mxu0 %v870
      %895 = vmatprep.subr.bf16.mxu0 0
      %896 = vmatpush1.bf16.msra.mxu0 0
      %897 = vmatprep.subr.bf16.mxu0 0
      %898 = vmatpush1.bf16.msra.mxu0 0
      %899 = vmatprep.subr.bf16.mxu0 0
      %900 = vmatpush1.bf16.msra.mxu0 0
      %901 = vmatprep.subr.bf16.mxu0 0
      %902 = vmatpush1.bf16.msra.mxu0 0
      %903 = vmatprep.subr.bf16.mxu0 0
      %904 = vmatpush1.bf16.msra.mxu0 0
      %905 = vmatprep.subr.bf16.mxu0 0
      %906 = vmatpush1.bf16.msra.mxu0 0
      %907 = vmatprep.subr.bf16.mxu0 0
      %908 = vmatpush1.bf16.msra.mxu0 0
      %909 = vmatprep.subr.bf16.mxu0 0
      %910 = vmatpush1.bf16.msra.mxu0 0
      %911 = vmatprep.mubr.bf16.mxu0 0
      %912 = vmatmul.mubr.bf16.gmra.mrb[0].mxu0 %v823
      %v913 = vpop.f32.mrb[0].mxu0
      %v914 = vadd.f32 0.0, %v913
      %v915 = vpop.f32.mrb[0].mxu0
      %v916 = vpop.f32.mrb[0].mxu0
      %v917 = vadd.f32 0.0, %v916
      %v918 = vpop.f32.mrb[0].mxu0
      %919 = vmatprep.mubr.bf16.mxu0 0
      %920 = vmatmul.mubr.bf16.gmra.mrb[0].mxu0 %v824
      %v921 = vpop.f32.mrb[0].mxu0
      %v922 = vadd.f32 0.0, %v921
      %v923 = vpop.f32.mrb[0].mxu0
      %v924 = vpop.f32.mrb[0].mxu0
      %v925 = vadd.f32 0.0, %v924
      %v926 = vpop.f32.mrb[0].mxu0
      %927 = vmatprep.mubr.bf16.mxu0 0
      %928 = vmatmul.mubr.bf16.gmra.mrb[0].mxu0 %v825
      %v929 = vpop.f32.mrb[0].mxu0
      %v930 = vadd.f32 0.0, %v929
      %v931 = vpop.f32.mrb[0].mxu0
      %v932 = vpop.f32.mrb[0].mxu0
      %v933 = vadd.f32 0.0, %v932
      %v934 = vpop.f32.mrb[0].mxu0
      %935 = vmatprep.mubr.bf16.mxu0 0
      %936 = vmatmul.mubr.bf16.gmra.mrb[0].mxu0 %v826
      %v937 = vpop.f32.mrb[0].mxu0
      %v938 = vadd.f32 0.0, %v937
      %v939 = vpop.f32.mrb[0].mxu0
      %v940 = vpop.f32.mrb[0].mxu0
      %v941 = vadd.f32 0.0, %v940
      %v942 = vpop.f32.mrb[0].mxu0
      %943 = vdwg.mxu0
      %v944 = vadd.f32 %v773, %v914
      %v945 = vadd.f32 %v774, %v917
      %v946 = vadd.f32 %v775, %v922
      %v947 = vadd.f32 %v776, %v925
      %v948 = vadd.f32 %v777, %v930
      %v949 = vadd.f32 %v778, %v933
      %v950 = vadd.f32 %v779, %v938
      %v951 = vadd.f32 %v780, %v941
      %s952 = scalar_lea.vmem %s165, 216
      %v953 = vld [vmem:[%s952] sm:$0xf]
      %v954 = vld [vmem:[%s952 + $0x8] sm:$0xf]
      %v955 = vld [vmem:[%s952 + $0x10] sm:$0xf]
      %v956 = vld [vmem:[%s952 + $0x18] sm:$0xf]
      %v957 = vld [vmem:[%s952 + $0x20] sm:$0xf]
      %v958 = vld [vmem:[%s952 + $0x28] sm:$0xf]
      %v959 = vld [vmem:[%s952 + $0x30] sm:$0xf]
      %v960 = vld [vmem:[%s952 + $0x38] sm:$0xf]
      %s961 = scalar_lea.vmem %s1, 256
      %v962 = vld [vmem:[%s961] sm:$0xf]
      %v963 = vld [vmem:[%s961 + $0x4] sm:$0xf]
      %v964 = vld [vmem:[%s961 + $0x8] sm:$0xf]
      %v965 = vld [vmem:[%s961 + $0xc] sm:$0xf]
      %v966 = vld [vmem:[%s961 + $0x10] sm:$0xf]
      %v967 = vld [vmem:[%s961 + $0x14] sm:$0xf]
      %v968 = vld [vmem:[%s961 + $0x18] sm:$0xf]
      %v969 = vld [vmem:[%s961 + $0x1c] sm:$0xf]
      %v970 = vld [vmem:[%s961 + $0x20] sm:$0xf]
      %v971 = vld [vmem:[%s961 + $0x24] sm:$0xf]
      %v972 = vld [vmem:[%s961 + $0x28] sm:$0xf]
      %v973 = vld [vmem:[%s961 + $0x2c] sm:$0xf]
      %v974 = vld [vmem:[%s961 + $0x30] sm:$0xf]
      %v975 = vld [vmem:[%s961 + $0x34] sm:$0xf]
      %v976 = vld [vmem:[%s961 + $0x38] sm:$0xf]
      %v977 = vld [vmem:[%s961 + $0x3c] sm:$0xf]
      %v986 = vunpack.c.l.b16 %v953
      %v987 = vunpack.c.l.b16 %v954
      %v988 = vunpack.c.l.b16 %v955
      %v989 = vunpack.c.l.b16 %v956
      %v990 = vunpack.c.l.b16 %v957
      %v991 = vunpack.c.l.b16 %v958
      %v992 = vunpack.c.l.b16 %v959
      %v993 = vunpack.c.l.b16 %v960
      %v994 = vpack.c.b16 %v987, %v986
      %v995 = vpack.c.b16 %v989, %v988
      %v996 = vpack.c.b16 %v991, %v990
      %v997 = vpack.c.b16 %v993, %v992
      %v1018 = vunpack.c.l.b16 %v962
      %v1019 = vunpack.c.l.b16 %v963
      %v1020 = vunpack.c.l.b16 %v964
      %v1021 = vunpack.c.l.b16 %v965
      %v1022 = vunpack.c.l.b16 %v966
      %v1023 = vunpack.c.l.b16 %v967
      %v1024 = vunpack.c.l.b16 %v968
      %v1025 = vunpack.c.l.b16 %v969
      %v1026 = vunpack.c.l.b16 %v970
      %v1027 = vunpack.c.l.b16 %v971
      %v1028 = vunpack.c.l.b16 %v972
      %v1029 = vunpack.c.l.b16 %v973
      %v1030 = vunpack.c.l.b16 %v974
      %v1031 = vunpack.c.l.b16 %v975
      %v1032 = vunpack.c.l.b16 %v976
      %v1033 = vunpack.c.l.b16 %v977
      %v1034 = vpack.c.b16 %v1019, %v1018
      %v1035 = vpack.c.b16 %v1021, %v1020
      %v1036 = vpack.c.b16 %v1023, %v1022
      %v1037 = vpack.c.b16 %v1025, %v1024
      %v1038 = vpack.c.b16 %v1027, %v1026
      %v1039 = vpack.c.b16 %v1029, %v1028
      %v1040 = vpack.c.b16 %v1031, %v1030
      %v1041 = vpack.c.b16 %v1033, %v1032
      %1050 = vmatprep.subr.bf16.mxu0 0
      %1051 = vmatpush1.bf16.msra.mxu0 %v1034
      %1052 = vmatprep.subr.bf16.mxu0 0
      %1053 = vmatpush1.bf16.msra.mxu0 %v1035
      %1054 = vmatprep.subr.bf16.mxu0 0
      %1055 = vmatpush1.bf16.msra.mxu0 %v1036
      %1056 = vmatprep.subr.bf16.mxu0 0
      %1057 = vmatpush1.bf16.msra.mxu0 %v1037
      %1058 = vmatprep.subr.bf16.mxu0 0
      %1059 = vmatpush1.bf16.msra.mxu0 %v1038
      %1060 = vmatprep.subr.bf16.mxu0 0
      %1061 = vmatpush1.bf16.msra.mxu0 %v1039
      %1062 = vmatprep.subr.bf16.mxu0 0
      %1063 = vmatpush1.bf16.msra.mxu0 %v1040
      %1064 = vmatprep.subr.bf16.mxu0 0
      %1065 = vmatpush1.bf16.msra.mxu0 %v1041
      %1066 = vmatprep.subr.bf16.mxu0 0
      %1067 = vmatpush1.bf16.msra.mxu0 0
      %1068 = vmatprep.subr.bf16.mxu0 0
      %1069 = vmatpush1.bf16.msra.mxu0 0
      %1070 = vmatprep.subr.bf16.mxu0 0
      %1071 = vmatpush1.bf16.msra.mxu0 0
      %1072 = vmatprep.subr.bf16.mxu0 0
      %1073 = vmatpush1.bf16.msra.mxu0 0
      %1074 = vmatprep.subr.bf16.mxu0 0
      %1075 = vmatpush1.bf16.msra.mxu0 0
      %1076 = vmatprep.subr.bf16.mxu0 0
      %1077 = vmatpush1.bf16.msra.mxu0 0
      %1078 = vmatprep.subr.bf16.mxu0 0
      %1079 = vmatpush1.bf16.msra.mxu0 0
      %1080 = vmatprep.subr.bf16.mxu0 0
      %1081 = vmatpush1.bf16.msra.mxu0 0
      %1082 = vmatprep.mubr.bf16.mxu0 0
      %1083 = vmatmul.mubr.bf16.gmra.mrb[0].mxu0 %v994
      %v1084 = vpop.f32.mrb[0].mxu0
      %v1085 = vadd.f32 0.0, %v1084
      %v1086 = vpop.f32.mrb[0].mxu0
      %v1087 = vpop.f32.mrb[0].mxu0
      %v1088 = vadd.f32 0.0, %v1087
      %v1089 = vpop.f32.mrb[0].mxu0
      %1090 = vmatprep.mubr.bf16.mxu0 0
      %1091 = vmatmul.mubr.bf16.gmra.mrb[0].mxu0 %v995
      %v1092 = vpop.f32.mrb[0].mxu0
      %v1093 = vadd.f32 0.0, %v1092
      %v1094 = vpop.f32.mrb[0].mxu0
      %v1095 = vpop.f32.mrb[0].mxu0
      %v1096 = vadd.f32 0.0, %v1095
      %v1097 = vpop.f32.mrb[0].mxu0
      %1098 = vmatprep.mubr.bf16.mxu0 0
      %1099 = vmatmul.mubr.bf16.gmra.mrb[0].mxu0 %v996
      %v1100 = vpop.f32.mrb[0].mxu0
      %v1101 = vadd.f32 0.0, %v1100
      %v1102 = vpop.f32.mrb[0].mxu0
      %v1103 = vpop.f32.mrb[0].mxu0
      %v1104 = vadd.f32 0.0, %v1103
      %v1105 = vpop.f32.mrb[0].mxu0
      %1106 = vmatprep.mubr.bf16.mxu0 0
      %1107 = vmatmul.mubr.bf16.gmra.mrb[0].mxu0 %v997
      %v1108 = vpop.f32.mrb[0].mxu0
      %v1109 = vadd.f32 0.0, %v1108
      %v1110 = vpop.f32.mrb[0].mxu0
      %v1111 = vpop.f32.mrb[0].mxu0
      %v1112 = vadd.f32 0.0, %v1111
      %v1113 = vpop.f32.mrb[0].mxu0
      %1114 = vdwg.mxu0
      %v1115 = vadd.f32 %v944, %v1085
      %v1116 = vadd.f32 %v945, %v1088
      %v1117 = vadd.f32 %v946, %v1093
      %v1118 = vadd.f32 %v947, %v1096
      %v1119 = vadd.f32 %v948, %v1101
      %v1120 = vadd.f32 %v949, %v1104
      %v1121 = vadd.f32 %v950, %v1109
      %v1122 = vadd.f32 %v951, %v1112
      %v1123 = vld [vmem:[%s781] sm:$0xf]
      %v1124 = vld [vmem:[%s781 + $0x4] sm:$0x1]
      %v1125 = vld [vmem:[%s781 + $0x8] sm:$0xf]
      %v1126 = vld [vmem:[%s781 + $0xc] sm:$0x1]
      %v1127 = vld [vmem:[%s781 + $0x10] sm:$0xf]
      %v1128 = vld [vmem:[%s781 + $0x14] sm:$0x1]
      %v1129 = vld [vmem:[%s781 + $0x18] sm:$0xf]
      %v1130 = vld [vmem:[%s781 + $0x1c] sm:$0x1]
      %v1131 = vld [vmem:[%s781 + $0x20] sm:$0xf]
      %v1132 = vld [vmem:[%s781 + $0x24] sm:$0x1]
      %v1133 = vld [vmem:[%s781 + $0x28] sm:$0xf]
      %v1134 = vld [vmem:[%s781 + $0x2c] sm:$0x1]
      %v1135 = vld [vmem:[%s781 + $0x30] sm:$0xf]
      %v1136 = vld [vmem:[%s781 + $0x34] sm:$0x1]
      %v1137 = vld [vmem:[%s781 + $0x38] sm:$0xf]
      %v1138 = vld [vmem:[%s781 + $0x3c] sm:$0x1]
      %v1140 = vshrl.u32 %v1123, 16
      %v1142 = vrot.slane %v1140, 4
      %v1143 = vshll.u32 %v1123, 16
      %v1145 = vrot.slane %v1143, 5
      %v1146 = vor.u32 %v1142, %v1145
      %v1147 = vrot.slane %v1146, 4
      %v1149 = vshll.u32 %v1124, 16
      %v1151 = vrot.slane %v1149, 5
      %v1152 = vsel %vm514, %v1147, %v1151
      %v1154 = vshrl.u32 %v1125, 16
      %v1156 = vrot.slane %v1154, 4
      %v1157 = vshll.u32 %v1125, 16
      %v1159 = vrot.slane %v1157, 5
      %v1160 = vor.u32 %v1156, %v1159
      %v1161 = vrot.slane %v1160, 4
      %v1163 = vshll.u32 %v1126, 16
      %v1165 = vrot.slane %v1163, 5
      %v1166 = vsel %vm514, %v1161, %v1165
      %v1168 = vshrl.u32 %v1127, 16
      %v1170 = vrot.slane %v1168, 4
      %v1171 = vshll.u32 %v1127, 16
      %v1173 = vrot.slane %v1171, 5
      %v1174 = vor.u32 %v1170, %v1173
      %v1175 = vrot.slane %v1174, 4
      %v1177 = vshll.u32 %v1128, 16
      %v1179 = vrot.slane %v1177, 5
      %v1180 = vsel %vm514, %v1175, %v1179
      %v1182 = vshrl.u32 %v1129, 16
      %v1184 = vrot.slane %v1182, 4
      %v1185 = vshll.u32 %v1129, 16
      %v1187 = vrot.slane %v1185, 5
      %v1188 = vor.u32 %v1184, %v1187
      %v1189 = vrot.slane %v1188, 4
      %v1191 = vshll.u32 %v1130, 16
      %v1193 = vrot.slane %v1191, 5
      %v1194 = vsel %vm514, %v1189, %v1193
      %v1196 = vshrl.u32 %v1131, 16
      %v1198 = vrot.slane %v1196, 4
      %v1199 = vshll.u32 %v1131, 16
      %v1201 = vrot.slane %v1199, 5
      %v1202 = vor.u32 %v1198, %v1201
      %v1203 = vrot.slane %v1202, 4
      %v1205 = vshll.u32 %v1132, 16
      %v1207 = vrot.slane %v1205, 5
      %v1208 = vsel %vm514, %v1203, %v1207
      %v1210 = vshrl.u32 %v1133, 16
      %v1212 = vrot.slane %v1210, 4
      %v1213 = vshll.u32 %v1133, 16
      %v1215 = vrot.slane %v1213, 5
      %v1216 = vor.u32 %v1212, %v1215
      %v1217 = vrot.slane %v1216, 4
      %v1219 = vshll.u32 %v1134, 16
      %v1221 = vrot.slane %v1219, 5
      %v1222 = vsel %vm514, %v1217, %v1221
      %v1224 = vshrl.u32 %v1135, 16
      %v1226 = vrot.slane %v1224, 4
      %v1227 = vshll.u32 %v1135, 16
      %v1229 = vrot.slane %v1227, 5
      %v1230 = vor.u32 %v1226, %v1229
      %v1231 = vrot.slane %v1230, 4
      %v1233 = vshll.u32 %v1136, 16
      %v1235 = vrot.slane %v1233, 5
      %v1236 = vsel %vm514, %v1231, %v1235
      %v1238 = vshrl.u32 %v1137, 16
      %v1240 = vrot.slane %v1238, 4
      %v1241 = vshll.u32 %v1137, 16
      %v1243 = vrot.slane %v1241, 5
      %v1244 = vor.u32 %v1240, %v1243
      %v1245 = vrot.slane %v1244, 4
      %v1247 = vshll.u32 %v1138, 16
      %v1249 = vrot.slane %v1247, 5
      %v1250 = vsel %vm514, %v1245, %v1249
      %s1251 = scalar_lea.vmem %s1, 320
      %v1252 = vld [vmem:[%s1251] sm:$0xf]
      %v1253 = vld [vmem:[%s1251 + $0x4] sm:$0xf]
      %v1254 = vld [vmem:[%s1251 + $0x8] sm:$0xf]
      %v1255 = vld [vmem:[%s1251 + $0xc] sm:$0xf]
      %v1256 = vld [vmem:[%s1251 + $0x10] sm:$0xf]
      %v1257 = vld [vmem:[%s1251 + $0x14] sm:$0xf]
      %v1258 = vld [vmem:[%s1251 + $0x18] sm:$0xf]
      %v1259 = vld [vmem:[%s1251 + $0x1c] sm:$0xf]
      %v1260 = vld [vmem:[%s1251 + $0x20] sm:$0xf]
      %v1261 = vld [vmem:[%s1251 + $0x24] sm:$0xf]
      %v1262 = vld [vmem:[%s1251 + $0x28] sm:$0xf]
      %v1263 = vld [vmem:[%s1251 + $0x2c] sm:$0xf]
      %v1264 = vld [vmem:[%s1251 + $0x30] sm:$0xf]
      %v1265 = vld [vmem:[%s1251 + $0x34] sm:$0xf]
      %v1266 = vld [vmem:[%s1251 + $0x38] sm:$0xf]
      %v1267 = vld [vmem:[%s1251 + $0x3c] sm:$0xf]
      %v1268 = vunpack.c.l.b16 %v1152
      %v1269 = vunpack.c.l.b16 %v1166
      %v1270 = vunpack.c.l.b16 %v1180
      %v1271 = vunpack.c.l.b16 %v1194
      %v1272 = vunpack.c.l.b16 %v1208
      %v1273 = vunpack.c.l.b16 %v1222
      %v1274 = vunpack.c.l.b16 %v1236
      %v1275 = vunpack.c.l.b16 %v1250
      %v1276 = vpack.c.b16 %v1269, %v1268
      %v1277 = vpack.c.b16 %v1271, %v1270
      %v1278 = vpack.c.b16 %v1273, %v1272
      %v1279 = vpack.c.b16 %v1275, %v1274
      %v1300 = vunpack.c.l.b16 %v1252
      %v1301 = vunpack.c.l.b16 %v1253
      %v1302 = vunpack.c.l.b16 %v1254
      %v1303 = vunpack.c.l.b16 %v1255
      %v1304 = vunpack.c.l.b16 %v1256
      %v1305 = vunpack.c.l.b16 %v1257
      %v1306 = vunpack.c.l.b16 %v1258
      %v1307 = vunpack.c.l.b16 %v1259
      %v1308 = vunpack.c.l.b16 %v1260
      %v1309 = vunpack.c.l.b16 %v1261
      %v1310 = vunpack.c.l.b16 %v1262
      %v1311 = vunpack.c.l.b16 %v1263
      %v1312 = vunpack.c.l.b16 %v1264
      %v1313 = vunpack.c.l.b16 %v1265
      %v1314 = vunpack.c.l.b16 %v1266
      %v1315 = vunpack.c.l.b16 %v1267
      %v1316 = vpack.c.b16 %v1301, %v1300
      %v1317 = vpack.c.b16 %v1303, %v1302
      %v1318 = vpack.c.b16 %v1305, %v1304
      %v1319 = vpack.c.b16 %v1307, %v1306
      %v1320 = vpack.c.b16 %v1309, %v1308
      %v1321 = vpack.c.b16 %v1311, %v1310
      %v1322 = vpack.c.b16 %v1313, %v1312
      %v1323 = vpack.c.b16 %v1315, %v1314
      %1332 = vmatprep.subr.bf16.mxu0 0
      %1333 = vmatpush1.bf16.msra.mxu0 %v1316
      %1334 = vmatprep.subr.bf16.mxu0 0
      %1335 = vmatpush1.bf16.msra.mxu0 %v1317
      %1336 = vmatprep.subr.bf16.mxu0 0
      %1337 = vmatpush1.bf16.msra.mxu0 %v1318
      %1338 = vmatprep.subr.bf16.mxu0 0
      %1339 = vmatpush1.bf16.msra.mxu0 %v1319
      %1340 = vmatprep.subr.bf16.mxu0 0
      %1341 = vmatpush1.bf16.msra.mxu0 %v1320
      %1342 = vmatprep.subr.bf16.mxu0 0
      %1343 = vmatpush1.bf16.msra.mxu0 %v1321
      %1344 = vmatprep.subr.bf16.mxu0 0
      %1345 = vmatpush1.bf16.msra.mxu0 %v1322
      %1346 = vmatprep.subr.bf16.mxu0 0
      %1347 = vmatpush1.bf16.msra.mxu0 %v1323
      %1348 = vmatprep.subr.bf16.mxu0 0
      %1349 = vmatpush1.bf16.msra.mxu0 0
      %1350 = vmatprep.subr.bf16.mxu0 0
      %1351 = vmatpush1.bf16.msra.mxu0 0
      %1352 = vmatprep.subr.bf16.mxu0 0
      %1353 = vmatpush1.bf16.msra.mxu0 0
      %1354 = vmatprep.subr.bf16.mxu0 0
      %1355 = vmatpush1.bf16.msra.mxu0 0
      %1356 = vmatprep.subr.bf16.mxu0 0
      %1357 = vmatpush1.bf16.msra.mxu0 0
      %1358 = vmatprep.subr.bf16.mxu0 0
      %1359 = vmatpush1.bf16.msra.mxu0 0
      %1360 = vmatprep.subr.bf16.mxu0 0
      %1361 = vmatpush1.bf16.msra.mxu0 0
      %1362 = vmatprep.subr.bf16.mxu0 0
      %1363 = vmatpush1.bf16.msra.mxu0 0
      %1364 = vmatprep.mubr.bf16.mxu0 0
      %1365 = vmatmul.mubr.bf16.gmra.mrb[0].mxu0 %v1276
      %v1366 = vpop.f32.mrb[0].mxu0
      %v1367 = vadd.f32 0.0, %v1366
      %v1368 = vpop.f32.mrb[0].mxu0
      %v1369 = vpop.f32.mrb[0].mxu0
      %v1370 = vadd.f32 0.0, %v1369
      %v1371 = vpop.f32.mrb[0].mxu0
      %1372 = vmatprep.mubr.bf16.mxu0 0
      %1373 = vmatmul.mubr.bf16.gmra.mrb[0].mxu0 %v1277
      %v1374 = vpop.f32.mrb[0].mxu0
      %v1375 = vadd.f32 0.0, %v1374
      %v1376 = vpop.f32.mrb[0].mxu0
      %v1377 = vpop.f32.mrb[0].mxu0
      %v1378 = vadd.f32 0.0, %v1377
      %v1379 = vpop.f32.mrb[0].mxu0
      %1380 = vmatprep.mubr.bf16.mxu0 0
      %1381 = vmatmul.mubr.bf16.gmra.mrb[0].mxu0 %v1278
      %v1382 = vpop.f32.mrb[0].mxu0
      %v1383 = vadd.f32 0.0, %v1382
      %v1384 = vpop.f32.mrb[0].mxu0
      %v1385 = vpop.f32.mrb[0].mxu0
      %v1386 = vadd.f32 0.0, %v1385
      %v1387 = vpop.f32.mrb[0].mxu0
      %1388 = vmatprep.mubr.bf16.mxu0 0
      %1389 = vmatmul.mubr.bf16.gmra.mrb[0].mxu0 %v1279
      %v1390 = vpop.f32.mrb[0].mxu0
      %v1391 = vadd.f32 0.0, %v1390
      %v1392 = vpop.f32.mrb[0].mxu0
      %v1393 = vpop.f32.mrb[0].mxu0
      %v1394 = vadd.f32 0.0, %v1393
      %v1395 = vpop.f32.mrb[0].mxu0
      %1396 = vdwg.mxu0
      %v1397 = vadd.f32 %v1115, %v1367
      %v1398 = vadd.f32 %v1116, %v1370
      %v1399 = vadd.f32 %v1117, %v1375
      %v1400 = vadd.f32 %v1118, %v1378
      %v1401 = vadd.f32 %v1119, %v1383
      %v1402 = vadd.f32 %v1120, %v1386
      %v1403 = vadd.f32 %v1121, %v1391
      %v1404 = vadd.f32 %v1122, %v1394
      %s1405 = scalar_lea.vmem %s165, 8
      %v1406 = vld [vmem:[%s1405] sm:$0xf]
      %v1407 = vld [vmem:[%s1405 + $0x8] sm:$0xf]
      %v1408 = vld [vmem:[%s1405 + $0x10] sm:$0xf]
      %v1409 = vld [vmem:[%s1405 + $0x18] sm:$0xf]
      %v1410 = vld [vmem:[%s1405 + $0x20] sm:$0xf]
      %v1411 = vld [vmem:[%s1405 + $0x28] sm:$0xf]
      %v1412 = vld [vmem:[%s1405 + $0x30] sm:$0xf]
      %v1413 = vld [vmem:[%s1405 + $0x38] sm:$0xf]
      %s1414 = scalar_lea.vmem %s1, 384
      %v1415 = vld [vmem:[%s1414] sm:$0xf]
      %v1416 = vld [vmem:[%s1414 + $0x4] sm:$0xf]
      %v1417 = vld [vmem:[%s1414 + $0x8] sm:$0xf]
      %v1418 = vld [vmem:[%s1414 + $0xc] sm:$0xf]
      %v1419 = vld [vmem:[%s1414 + $0x10] sm:$0xf]
      %v1420 = vld [vmem:[%s1414 + $0x14] sm:$0xf]
      %v1421 = vld [vmem:[%s1414 + $0x18] sm:$0xf]
      %v1422 = vld [vmem:[%s1414 + $0x1c] sm:$0xf]
      %v1423 = vld [vmem:[%s1414 + $0x20] sm:$0xf]
      %v1424 = vld [vmem:[%s1414 + $0x24] sm:$0xf]
      %v1425 = vld [vmem:[%s1414 + $0x28] sm:$0xf]
      %v1426 = vld [vmem:[%s1414 + $0x2c] sm:$0xf]
      %v1427 = vld [vmem:[%s1414 + $0x30] sm:$0xf]
      %v1428 = vld [vmem:[%s1414 + $0x34] sm:$0xf]
      %v1429 = vld [vmem:[%s1414 + $0x38] sm:$0xf]
      %v1430 = vld [vmem:[%s1414 + $0x3c] sm:$0xf]
      %v1439 = vunpack.c.l.b16 %v1406
      %v1440 = vunpack.c.l.b16 %v1407
      %v1441 = vunpack.c.l.b16 %v1408
      %v1442 = vunpack.c.l.b16 %v1409
      %v1443 = vunpack.c.l.b16 %v1410
      %v1444 = vunpack.c.l.b16 %v1411
      %v1445 = vunpack.c.l.b16 %v1412
      %v1446 = vunpack.c.l.b16 %v1413
      %v1447 = vpack.c.b16 %v1440, %v1439
      %v1448 = vpack.c.b16 %v1442, %v1441
      %v1449 = vpack.c.b16 %v1444, %v1443
      %v1450 = vpack.c.b16 %v1446, %v1445
      %v1471 = vunpack.c.l.b16 %v1415
      %v1472 = vunpack.c.l.b16 %v1416
      %v1473 = vunpack.c.l.b16 %v1417
      %v1474 = vunpack.c.l.b16 %v1418
      %v1475 = vunpack.c.l.b16 %v1419
      %v1476 = vunpack.c.l.b16 %v1420
      %v1477 = vunpack.c.l.b16 %v1421
      %v1478 = vunpack.c.l.b16 %v1422
      %v1479 = vunpack.c.l.b16 %v1423
      %v1480 = vunpack.c.l.b16 %v1424
      %v1481 = vunpack.c.l.b16 %v1425
      %v1482 = vunpack.c.l.b16 %v1426
      %v1483 = vunpack.c.l.b16 %v1427
      %v1484 = vunpack.c.l.b16 %v1428
      %v1485 = vunpack.c.l.b16 %v1429
      %v1486 = vunpack.c.l.b16 %v1430
      %v1487 = vpack.c.b16 %v1472, %v1471
      %v1488 = vpack.c.b16 %v1474, %v1473
      %v1489 = vpack.c.b16 %v1476, %v1475
      %v1490 = vpack.c.b16 %v1478, %v1477
      %v1491 = vpack.c.b16 %v1480, %v1479
      %v1492 = vpack.c.b16 %v1482, %v1481
      %v1493 = vpack.c.b16 %v1484, %v1483
      %v1494 = vpack.c.b16 %v1486, %v1485
      %1503 = vmatprep.subr.bf16.mxu0 0
      %1504 = vmatpush1.bf16.msra.mxu0 %v1487
      %1505 = vmatprep.subr.bf16.mxu0 0
      %1506 = vmatpush1.bf16.msra.mxu0 %v1488
      %1507 = vmatprep.subr.bf16.mxu0 0
      %1508 = vmatpush1.bf16.msra.mxu0 %v1489
      %1509 = vmatprep.subr.bf16.mxu0 0
      %1510 = vmatpush1.bf16.msra.mxu0 %v1490
      %1511 = vmatprep.subr.bf16.mxu0 0
      %1512 = vmatpush1.bf16.msra.mxu0 %v1491
      %1513 = vmatprep.subr.bf16.mxu0 0
      %1514 = vmatpush1.bf16.msra.mxu0 %v1492
      %1515 = vmatprep.subr.bf16.mxu0 0
      %1516 = vmatpush1.bf16.msra.mxu0 %v1493
      %1517 = vmatprep.subr.bf16.mxu0 0
      %1518 = vmatpush1.bf16.msra.mxu0 %v1494
      %1519 = vmatprep.subr.bf16.mxu0 0
      %1520 = vmatpush1.bf16.msra.mxu0 0
      %1521 = vmatprep.subr.bf16.mxu0 0
      %1522 = vmatpush1.bf16.msra.mxu0 0
      %1523 = vmatprep.subr.bf16.mxu0 0
      %1524 = vmatpush1.bf16.msra.mxu0 0
      %1525 = vmatprep.subr.bf16.mxu0 0
      %1526 = vmatpush1.bf16.msra.mxu0 0
      %1527 = vmatprep.subr.bf16.mxu0 0
      %1528 = vmatpush1.bf16.msra.mxu0 0
      %1529 = vmatprep.subr.bf16.mxu0 0
      %1530 = vmatpush1.bf16.msra.mxu0 0
      %1531 = vmatprep.subr.bf16.mxu0 0
      %1532 = vmatpush1.bf16.msra.mxu0 0
      %1533 = vmatprep.subr.bf16.mxu0 0
      %1534 = vmatpush1.bf16.msra.mxu0 0
      %1535 = vmatprep.mubr.bf16.mxu0 0
      %1536 = vmatmul.mubr.bf16.gmra.mrb[0].mxu0 %v1447
      %v1537 = vpop.f32.mrb[0].mxu0
      %v1538 = vadd.f32 0.0, %v1537
      %v1539 = vpop.f32.mrb[0].mxu0
      %v1540 = vpop.f32.mrb[0].mxu0
      %v1541 = vadd.f32 0.0, %v1540
      %v1542 = vpop.f32.mrb[0].mxu0
      %1543 = vmatprep.mubr.bf16.mxu0 0
      %1544 = vmatmul.mubr.bf16.gmra.mrb[0].mxu0 %v1448
      %v1545 = vpop.f32.mrb[0].mxu0
      %v1546 = vadd.f32 0.0, %v1545
      %v1547 = vpop.f32.mrb[0].mxu0
      %v1548 = vpop.f32.mrb[0].mxu0
      %v1549 = vadd.f32 0.0, %v1548
      %v1550 = vpop.f32.mrb[0].mxu0
      %1551 = vmatprep.mubr.bf16.mxu0 0
      %1552 = vmatmul.mubr.bf16.gmra.mrb[0].mxu0 %v1449
      %v1553 = vpop.f32.mrb[0].mxu0
      %v1554 = vadd.f32 0.0, %v1553
      %v1555 = vpop.f32.mrb[0].mxu0
      %v1556 = vpop.f32.mrb[0].mxu0
      %v1557 = vadd.f32 0.0, %v1556
      %v1558 = vpop.f32.mrb[0].mxu0
      %1559 = vmatprep.mubr.bf16.mxu0 0
      %1560 = vmatmul.mubr.bf16.gmra.mrb[0].mxu0 %v1450
      %v1561 = vpop.f32.mrb[0].mxu0
      %v1562 = vadd.f32 0.0, %v1561
      %v1563 = vpop.f32.mrb[0].mxu0
      %v1564 = vpop.f32.mrb[0].mxu0
      %v1565 = vadd.f32 0.0, %v1564
      %v1566 = vpop.f32.mrb[0].mxu0
      %1567 = vdwg.mxu0
      %v1568 = vadd.f32 %v1397, %v1538
      %v1569 = vadd.f32 %v1398, %v1541
      %v1570 = vadd.f32 %v1399, %v1546
      %v1571 = vadd.f32 %v1400, %v1549
      %v1572 = vadd.f32 %v1401, %v1554
      %v1573 = vadd.f32 %v1402, %v1557
      %v1574 = vadd.f32 %v1403, %v1562
      %v1575 = vadd.f32 %v1404, %v1565
      %s1576 = scalar_lea.vmem %s165, 80
      %v1577 = vld [vmem:[%s1576] sm:$0xf]
      %v1578 = vld [vmem:[%s1576 + $0x8] sm:$0xf]
      %v1579 = vld [vmem:[%s1576 + $0x10] sm:$0xf]
      %v1580 = vld [vmem:[%s1576 + $0x18] sm:$0xf]
      %v1581 = vld [vmem:[%s1576 + $0x20] sm:$0xf]
      %v1582 = vld [vmem:[%s1576 + $0x28] sm:$0xf]
      %v1583 = vld [vmem:[%s1576 + $0x30] sm:$0xf]
      %v1584 = vld [vmem:[%s1576 + $0x38] sm:$0xf]
      %s1585 = scalar_lea.vmem %s1, 448
      %v1586 = vld [vmem:[%s1585] sm:$0xf]
      %v1587 = vld [vmem:[%s1585 + $0x4] sm:$0xf]
      %v1588 = vld [vmem:[%s1585 + $0x8] sm:$0xf]
      %v1589 = vld [vmem:[%s1585 + $0xc] sm:$0xf]
      %v1590 = vld [vmem:[%s1585 + $0x10] sm:$0xf]
      %v1591 = vld [vmem:[%s1585 + $0x14] sm:$0xf]
      %v1592 = vld [vmem:[%s1585 + $0x18] sm:$0xf]
      %v1593 = vld [vmem:[%s1585 + $0x1c] sm:$0xf]
      %v1594 = vld [vmem:[%s1585 + $0x20] sm:$0xf]
      %v1595 = vld [vmem:[%s1585 + $0x24] sm:$0xf]
      %v1596 = vld [vmem:[%s1585 + $0x28] sm:$0xf]
      %v1597 = vld [vmem:[%s1585 + $0x2c] sm:$0xf]
      %v1598 = vld [vmem:[%s1585 + $0x30] sm:$0xf]
      %v1599 = vld [vmem:[%s1585 + $0x34] sm:$0xf]
      %v1600 = vld [vmem:[%s1585 + $0x38] sm:$0xf]
      %v1601 = vld [vmem:[%s1585 + $0x3c] sm:$0xf]
      %v1610 = vunpack.c.l.b16 %v1577
      %v1611 = vunpack.c.l.b16 %v1578
      %v1612 = vunpack.c.l.b16 %v1579
      %v1613 = vunpack.c.l.b16 %v1580
      %v1614 = vunpack.c.l.b16 %v1581
      %v1615 = vunpack.c.l.b16 %v1582
      %v1616 = vunpack.c.l.b16 %v1583
      %v1617 = vunpack.c.l.b16 %v1584
      %v1618 = vpack.c.b16 %v1611, %v1610
      %v1619 = vpack.c.b16 %v1613, %v1612
      %v1620 = vpack.c.b16 %v1615, %v1614
      %v1621 = vpack.c.b16 %v1617, %v1616
      %v1642 = vunpack.c.l.b16 %v1586
      %v1643 = vunpack.c.l.b16 %v1587
      %v1644 = vunpack.c.l.b16 %v1588
      %v1645 = vunpack.c.l.b16 %v1589
      %v1646 = vunpack.c.l.b16 %v1590
      %v1647 = vunpack.c.l.b16 %v1591
      %v1648 = vunpack.c.l.b16 %v1592
      %v1649 = vunpack.c.l.b16 %v1593
      %v1650 = vunpack.c.l.b16 %v1594
      %v1651 = vunpack.c.l.b16 %v1595
      %v1652 = vunpack.c.l.b16 %v1596
      %v1653 = vunpack.c.l.b16 %v1597
      %v1654 = vunpack.c.l.b16 %v1598
      %v1655 = vunpack.c.l.b16 %v1599
      %v1656 = vunpack.c.l.b16 %v1600
      %v1657 = vunpack.c.l.b16 %v1601
      %v1658 = vpack.c.b16 %v1643, %v1642
      %v1659 = vpack.c.b16 %v1645, %v1644
      %v1660 = vpack.c.b16 %v1647, %v1646
      %v1661 = vpack.c.b16 %v1649, %v1648
      %v1662 = vpack.c.b16 %v1651, %v1650
      %v1663 = vpack.c.b16 %v1653, %v1652
      %v1664 = vpack.c.b16 %v1655, %v1654
      %v1665 = vpack.c.b16 %v1657, %v1656
      %1674 = vmatprep.subr.bf16.mxu0 0
      %1675 = vmatpush1.bf16.msra.mxu0 %v1658
      %1676 = vmatprep.subr.bf16.mxu0 0
      %1677 = vmatpush1.bf16.msra.mxu0 %v1659
      %1678 = vmatprep.subr.bf16.mxu0 0
      %1679 = vmatpush1.bf16.msra.mxu0 %v1660
      %1680 = vmatprep.subr.bf16.mxu0 0
      %1681 = vmatpush1.bf16.msra.mxu0 %v1661
      %1682 = vmatprep.subr.bf16.mxu0 0
      %1683 = vmatpush1.bf16.msra.mxu0 %v1662
      %1684 = vmatprep.subr.bf16.mxu0 0
      %1685 = vmatpush1.bf16.msra.mxu0 %v1663
      %1686 = vmatprep.subr.bf16.mxu0 0
      %1687 = vmatpush1.bf16.msra.mxu0 %v1664
      %1688 = vmatprep.subr.bf16.mxu0 0
      %1689 = vmatpush1.bf16.msra.mxu0 %v1665
      %1690 = vmatprep.subr.bf16.mxu0 0
      %1691 = vmatpush1.bf16.msra.mxu0 0
      %1692 = vmatprep.subr.bf16.mxu0 0
      %1693 = vmatpush1.bf16.msra.mxu0 0
      %1694 = vmatprep.subr.bf16.mxu0 0
      %1695 = vmatpush1.bf16.msra.mxu0 0
      %1696 = vmatprep.subr.bf16.mxu0 0
      %1697 = vmatpush1.bf16.msra.mxu0 0
      %1698 = vmatprep.subr.bf16.mxu0 0
      %1699 = vmatpush1.bf16.msra.mxu0 0
      %1700 = vmatprep.subr.bf16.mxu0 0
      %1701 = vmatpush1.bf16.msra.mxu0 0
      %1702 = vmatprep.subr.bf16.mxu0 0
      %1703 = vmatpush1.bf16.msra.mxu0 0
      %1704 = vmatprep.subr.bf16.mxu0 0
      %1705 = vmatpush1.bf16.msra.mxu0 0
      %1706 = vmatprep.mubr.bf16.mxu0 0
      %1707 = vmatmul.mubr.bf16.gmra.mrb[0].mxu0 %v1618
      %v1708 = vpop.f32.mrb[0].mxu0
      %v1709 = vadd.f32 0.0, %v1708
      %v1710 = vpop.f32.mrb[0].mxu0
      %v1711 = vpop.f32.mrb[0].mxu0
      %v1712 = vadd.f32 0.0, %v1711
      %v1713 = vpop.f32.mrb[0].mxu0
      %1714 = vmatprep.mubr.bf16.mxu0 0
      %1715 = vmatmul.mubr.bf16.gmra.mrb[0].mxu0 %v1619
      %v1716 = vpop.f32.mrb[0].mxu0
      %v1717 = vadd.f32 0.0, %v1716
      %v1718 = vpop.f32.mrb[0].mxu0
      %v1719 = vpop.f32.mrb[0].mxu0
      %v1720 = vadd.f32 0.0, %v1719
      %v1721 = vpop.f32.mrb[0].mxu0
      %1722 = vmatprep.mubr.bf16.mxu0 0
      %1723 = vmatmul.mubr.bf16.gmra.mrb[0].mxu0 %v1620
      %v1724 = vpop.f32.mrb[0].mxu0
      %v1725 = vadd.f32 0.0, %v1724
      %v1726 = vpop.f32.mrb[0].mxu0
      %v1727 = vpop.f32.mrb[0].mxu0
      %v1728 = vadd.f32 0.0, %v1727
      %v1729 = vpop.f32.mrb[0].mxu0
      %1730 = vmatprep.mubr.bf16.mxu0 0
      %1731 = vmatmul.mubr.bf16.gmra.mrb[0].mxu0 %v1621
      %v1732 = vpop.f32.mrb[0].mxu0
      %v1733 = vadd.f32 0.0, %v1732
      %v1734 = vpop.f32.mrb[0].mxu0
      %v1735 = vpop.f32.mrb[0].mxu0
      %v1736 = vadd.f32 0.0, %v1735
      %v1737 = vpop.f32.mrb[0].mxu0
      %1738 = vdwg.mxu0
      %v1739 = vadd.f32 %v1568, %v1709
      %v1740 = vadd.f32 %v1569, %v1712
      %v1741 = vadd.f32 %v1570, %v1717
      %v1742 = vadd.f32 %v1571, %v1720
      %v1743 = vadd.f32 %v1572, %v1725
      %v1744 = vadd.f32 %v1573, %v1728
      %v1745 = vadd.f32 %v1574, %v1733
      %v1746 = vadd.f32 %v1575, %v1736
      %v1747 = vld [vmem:[%s1405] sm:$0xf]
      %v1748 = vld [vmem:[%s1405 + $0x4] sm:$0x1]
      %v1749 = vld [vmem:[%s1405 + $0x8] sm:$0xf]
      %v1750 = vld [vmem:[%s1405 + $0xc] sm:$0x1]
      %v1751 = vld [vmem:[%s1405 + $0x10] sm:$0xf]
      %v1752 = vld [vmem:[%s1405 + $0x14] sm:$0x1]
      %v1753 = vld [vmem:[%s1405 + $0x18] sm:$0xf]
      %v1754 = vld [vmem:[%s1405 + $0x1c] sm:$0x1]
      %v1755 = vld [vmem:[%s1405 + $0x20] sm:$0xf]
      %v1756 = vld [vmem:[%s1405 + $0x24] sm:$0x1]
      %v1757 = vld [vmem:[%s1405 + $0x28] sm:$0xf]
      %v1758 = vld [vmem:[%s1405 + $0x2c] sm:$0x1]
      %v1759 = vld [vmem:[%s1405 + $0x30] sm:$0xf]
      %v1760 = vld [vmem:[%s1405 + $0x34] sm:$0x1]
      %v1761 = vld [vmem:[%s1405 + $0x38] sm:$0xf]
      %v1762 = vld [vmem:[%s1405 + $0x3c] sm:$0x1]
      %v1764 = vshrl.u32 %v1747, 16
      %v1766 = vrot.slane %v1764, 4
      %v1767 = vshll.u32 %v1747, 16
      %v1769 = vrot.slane %v1767, 5
      %v1770 = vor.u32 %v1766, %v1769
      %v1771 = vrot.slane %v1770, 4
      %v1773 = vshll.u32 %v1748, 16
      %v1775 = vrot.slane %v1773, 5
      %v1776 = vsel %vm514, %v1771, %v1775
      %v1778 = vshrl.u32 %v1749, 16
      %v1780 = vrot.slane %v1778, 4
      %v1781 = vshll.u32 %v1749, 16
      %v1783 = vrot.slane %v1781, 5
      %v1784 = vor.u32 %v1780, %v1783
      %v1785 = vrot.slane %v1784, 4
      %v1787 = vshll.u32 %v1750, 16
      %v1789 = vrot.slane %v1787, 5
      %v1790 = vsel %vm514, %v1785, %v1789
      %v1792 = vshrl.u32 %v1751, 16
      %v1794 = vrot.slane %v1792, 4
      %v1795 = vshll.u32 %v1751, 16
      %v1797 = vrot.slane %v1795, 5
      %v1798 = vor.u32 %v1794, %v1797
      %v1799 = vrot.slane %v1798, 4
      %v1801 = vshll.u32 %v1752, 16
      %v1803 = vrot.slane %v1801, 5
      %v1804 = vsel %vm514, %v1799, %v1803
      %v1806 = vshrl.u32 %v1753, 16
      %v1808 = vrot.slane %v1806, 4
      %v1809 = vshll.u32 %v1753, 16
      %v1811 = vrot.slane %v1809, 5
      %v1812 = vor.u32 %v1808, %v1811
      %v1813 = vrot.slane %v1812, 4
      %v1815 = vshll.u32 %v1754, 16
      %v1817 = vrot.slane %v1815, 5
      %v1818 = vsel %vm514, %v1813, %v1817
      %v1820 = vshrl.u32 %v1755, 16
      %v1822 = vrot.slane %v1820, 4
      %v1823 = vshll.u32 %v1755, 16
      %v1825 = vrot.slane %v1823, 5
      %v1826 = vor.u32 %v1822, %v1825
      %v1827 = vrot.slane %v1826, 4
      %v1829 = vshll.u32 %v1756, 16
      %v1831 = vrot.slane %v1829, 5
      %v1832 = vsel %vm514, %v1827, %v1831
      %v1834 = vshrl.u32 %v1757, 16
      %v1836 = vrot.slane %v1834, 4
      %v1837 = vshll.u32 %v1757, 16
      %v1839 = vrot.slane %v1837, 5
      %v1840 = vor.u32 %v1836, %v1839
      %v1841 = vrot.slane %v1840, 4
      %v1843 = vshll.u32 %v1758, 16
      %v1845 = vrot.slane %v1843, 5
      %v1846 = vsel %vm514, %v1841, %v1845
      %v1848 = vshrl.u32 %v1759, 16
      %v1850 = vrot.slane %v1848, 4
      %v1851 = vshll.u32 %v1759, 16
      %v1853 = vrot.slane %v1851, 5
      %v1854 = vor.u32 %v1850, %v1853
      %v1855 = vrot.slane %v1854, 4
      %v1857 = vshll.u32 %v1760, 16
      %v1859 = vrot.slane %v1857, 5
      %v1860 = vsel %vm514, %v1855, %v1859
      %v1862 = vshrl.u32 %v1761, 16
      %v1864 = vrot.slane %v1862, 4
      %v1865 = vshll.u32 %v1761, 16
      %v1867 = vrot.slane %v1865, 5
      %v1868 = vor.u32 %v1864, %v1867
      %v1869 = vrot.slane %v1868, 4
      %v1871 = vshll.u32 %v1762, 16
      %v1873 = vrot.slane %v1871, 5
      %v1874 = vsel %vm514, %v1869, %v1873
      %s1875 = scalar_lea.vmem %s1, 512
      %v1876 = vld [vmem:[%s1875] sm:$0xf]
      %v1877 = vld [vmem:[%s1875 + $0x4] sm:$0xf]
      %v1878 = vld [vmem:[%s1875 + $0x8] sm:$0xf]
      %v1879 = vld [vmem:[%s1875 + $0xc] sm:$0xf]
      %v1880 = vld [vmem:[%s1875 + $0x10] sm:$0xf]
      %v1881 = vld [vmem:[%s1875 + $0x14] sm:$0xf]
      %v1882 = vld [vmem:[%s1875 + $0x18] sm:$0xf]
      %v1883 = vld [vmem:[%s1875 + $0x1c] sm:$0xf]
      %v1884 = vld [vmem:[%s1875 + $0x20] sm:$0xf]
      %v1885 = vld [vmem:[%s1875 + $0x24] sm:$0xf]
      %v1886 = vld [vmem:[%s1875 + $0x28] sm:$0xf]
      %v1887 = vld [vmem:[%s1875 + $0x2c] sm:$0xf]
      %v1888 = vld [vmem:[%s1875 + $0x30] sm:$0xf]
      %v1889 = vld [vmem:[%s1875 + $0x34] sm:$0xf]
      %v1890 = vld [vmem:[%s1875 + $0x38] sm:$0xf]
      %v1891 = vld [vmem:[%s1875 + $0x3c] sm:$0xf]
      %v1892 = vunpack.c.l.b16 %v1776
      %v1893 = vunpack.c.l.b16 %v1790
      %v1894 = vunpack.c.l.b16 %v1804
      %v1895 = vunpack.c.l.b16 %v1818
      %v1896 = vunpack.c.l.b16 %v1832
      %v1897 = vunpack.c.l.b16 %v1846
      %v1898 = vunpack.c.l.b16 %v1860
      %v1899 = vunpack.c.l.b16 %v1874
      %v1900 = vpack.c.b16 %v1893, %v1892
      %v1901 = vpack.c.b16 %v1895, %v1894
      %v1902 = vpack.c.b16 %v1897, %v1896
      %v1903 = vpack.c.b16 %v1899, %v1898
      %v1924 = vunpack.c.l.b16 %v1876
      %v1925 = vunpack.c.l.b16 %v1877
      %v1926 = vunpack.c.l.b16 %v1878
      %v1927 = vunpack.c.l.b16 %v1879
      %v1928 = vunpack.c.l.b16 %v1880
      %v1929 = vunpack.c.l.b16 %v1881
      %v1930 = vunpack.c.l.b16 %v1882
      %v1931 = vunpack.c.l.b16 %v1883
      %v1932 = vunpack.c.l.b16 %v1884
      %v1933 = vunpack.c.l.b16 %v1885
      %v1934 = vunpack.c.l.b16 %v1886
      %v1935 = vunpack.c.l.b16 %v1887
      %v1936 = vunpack.c.l.b16 %v1888
      %v1937 = vunpack.c.l.b16 %v1889
      %v1938 = vunpack.c.l.b16 %v1890
      %v1939 = vunpack.c.l.b16 %v1891
      %v1940 = vpack.c.b16 %v1925, %v1924
      %v1941 = vpack.c.b16 %v1927, %v1926
      %v1942 = vpack.c.b16 %v1929, %v1928
      %v1943 = vpack.c.b16 %v1931, %v1930
      %v1944 = vpack.c.b16 %v1933, %v1932
      %v1945 = vpack.c.b16 %v1935, %v1934
      %v1946 = vpack.c.b16 %v1937, %v1936
      %v1947 = vpack.c.b16 %v1939, %v1938
      %1956 = vmatprep.subr.bf16.mxu0 0
      %1957 = vmatpush1.bf16.msra.mxu0 %v1940
      %1958 = vmatprep.subr.bf16.mxu0 0
      %1959 = vmatpush1.bf16.msra.mxu0 %v1941
      %1960 = vmatprep.subr.bf16.mxu0 0
      %1961 = vmatpush1.bf16.msra.mxu0 %v1942
      %1962 = vmatprep.subr.bf16.mxu0 0
      %1963 = vmatpush1.bf16.msra.mxu0 %v1943
      %1964 = vmatprep.subr.bf16.mxu0 0
      %1965 = vmatpush1.bf16.msra.mxu0 %v1944
      %1966 = vmatprep.subr.bf16.mxu0 0
      %1967 = vmatpush1.bf16.msra.mxu0 %v1945
      %1968 = vmatprep.subr.bf16.mxu0 0
      %1969 = vmatpush1.bf16.msra.mxu0 %v1946
      %1970 = vmatprep.subr.bf16.mxu0 0
      %1971 = vmatpush1.bf16.msra.mxu0 %v1947
      %1972 = vmatprep.subr.bf16.mxu0 0
      %1973 = vmatpush1.bf16.msra.mxu0 0
      %1974 = vmatprep.subr.bf16.mxu0 0
      %1975 = vmatpush1.bf16.msra.mxu0 0
      %1976 = vmatprep.subr.bf16.mxu0 0
      %1977 = vmatpush1.bf16.msra.mxu0 0
      %1978 = vmatprep.subr.bf16.mxu0 0
      %1979 = vmatpush1.bf16.msra.mxu0 0
      %1980 = vmatprep.subr.bf16.mxu0 0
      %1981 = vmatpush1.bf16.msra.mxu0 0
      %1982 = vmatprep.subr.bf16.mxu0 0
      %1983 = vmatpush1.bf16.msra.mxu0 0
      %1984 = vmatprep.subr.bf16.mxu0 0
      %1985 = vmatpush1.bf16.msra.mxu0 0
      %1986 = vmatprep.subr.bf16.mxu0 0
      %1987 = vmatpush1.bf16.msra.mxu0 0
      %1988 = vmatprep.mubr.bf16.mxu0 0
      %1989 = vmatmul.mubr.bf16.gmra.mrb[0].mxu0 %v1900
      %v1990 = vpop.f32.mrb[0].mxu0
      %v1991 = vadd.f32 0.0, %v1990
      %v1992 = vpop.f32.mrb[0].mxu0
      %v1993 = vpop.f32.mrb[0].mxu0
      %v1994 = vadd.f32 0.0, %v1993
      %v1995 = vpop.f32.mrb[0].mxu0
      %1996 = vmatprep.mubr.bf16.mxu0 0
      %1997 = vmatmul.mubr.bf16.gmra.mrb[0].mxu0 %v1901
      %v1998 = vpop.f32.mrb[0].mxu0
      %v1999 = vadd.f32 0.0, %v1998
      %v2000 = vpop.f32.mrb[0].mxu0
      %v2001 = vpop.f32.mrb[0].mxu0
      %v2002 = vadd.f32 0.0, %v2001
      %v2003 = vpop.f32.mrb[0].mxu0
      %2004 = vmatprep.mubr.bf16.mxu0 0
      %2005 = vmatmul.mubr.bf16.gmra.mrb[0].mxu0 %v1902
      %v2006 = vpop.f32.mrb[0].mxu0
      %v2007 = vadd.f32 0.0, %v2006
      %v2008 = vpop.f32.mrb[0].mxu0
      %v2009 = vpop.f32.mrb[0].mxu0
      %v2010 = vadd.f32 0.0, %v2009
      %v2011 = vpop.f32.mrb[0].mxu0
      %2012 = vmatprep.mubr.bf16.mxu0 0
      %2013 = vmatmul.mubr.bf16.gmra.mrb[0].mxu0 %v1903
      %v2014 = vpop.f32.mrb[0].mxu0
      %v2015 = vadd.f32 0.0, %v2014
      %v2016 = vpop.f32.mrb[0].mxu0
      %v2017 = vpop.f32.mrb[0].mxu0
      %v2018 = vadd.f32 0.0, %v2017
      %v2019 = vpop.f32.mrb[0].mxu0
      %2020 = vdwg.mxu0
      %v2021 = vadd.f32 %v1739, %v1991
      %v2022 = vadd.f32 %v1740, %v1994
      %v2023 = vadd.f32 %v1741, %v1999
      %v2024 = vadd.f32 %v1742, %v2002
      %v2025 = vadd.f32 %v1743, %v2007
      %v2026 = vadd.f32 %v1744, %v2010
      %v2027 = vadd.f32 %v1745, %v2015
      %v2028 = vadd.f32 %v1746, %v2018
      %v2029 = vld [vmem:[%s2] sm:$0x1]
      %v2031 = vlaneseq
      %v2032 = vshrl.u32 %v2031, 7
      %v2033 = vsub.s32 0, %v2032
      %v2034 = vrot.slane %v2029, %v2033
      %v2036 = vadd.f32 %v2021, %v2034
      %v2037 = vadd.f32 %v2022, %v2034
      %v2038 = vadd.f32 %v2023, %v2034
      %v2039 = vadd.f32 %v2024, %v2034
      %v2040 = vadd.f32 %v2025, %v2034
      %v2041 = vadd.f32 %v2026, %v2034
      %v2042 = vadd.f32 %v2027, %v2034
      %v2043 = vadd.f32 %v2028, %v2034
      %v2044 = vmax.f32 %v2036, 0.0
      %v2045 = vmax.f32 %v2037, 0.0
      %v2046 = vmax.f32 %v2038, 0.0
      %v2047 = vmax.f32 %v2039, 0.0
      %v2048 = vmax.f32 %v2040, 0.0
      %v2049 = vmax.f32 %v2041, 0.0
      %v2050 = vmax.f32 %v2042, 0.0
      %v2051 = vmax.f32 %v2043, 0.0
      %v2052 = vpack.c.bf16 %v2045, %v2044
      %v2053 = vpack.c.bf16 %v2047, %v2046
      %v2054 = vpack.c.bf16 %v2049, %v2048
      %v2055 = vpack.c.bf16 %v2051, %v2050
      %v2060 = vunpack.c.l.b16 %v2052
      %v2061 = vunpack.c.h.b16 %v2052
      %v2062 = vunpack.c.l.b16 %v2053
      %v2063 = vunpack.c.h.b16 %v2053
      %v2064 = vunpack.c.l.b16 %v2054
      %v2065 = vunpack.c.h.b16 %v2054
      %v2066 = vunpack.c.l.b16 %v2055
      %v2067 = vunpack.c.h.b16 %v2055
      %v2068 = vpack.c.b16 %v2060, %v2060
      %v2069 = vpack.c.b16 %v2061, %v2061
      %v2070 = vpack.c.b16 %v2062, %v2062
      %v2071 = vpack.c.b16 %v2063, %v2063
      %v2072 = vpack.c.b16 %v2064, %v2064
      %v2073 = vpack.c.b16 %v2065, %v2065
      %v2074 = vpack.c.b16 %v2066, %v2066
      %v2075 = vpack.c.b16 %v2067, %v2067
      %2084 = vst [vmem:[%s170] sm:$0xf] %v2068
      %2085 = vst [vmem:[%s170 + $0x4] sm:$0xf] %v2069
      %2086 = vst [vmem:[%s170 + $0x8] sm:$0xf] %v2070
      %2087 = vst [vmem:[%s170 + $0xc] sm:$0xf] %v2071
      %2088 = vst [vmem:[%s170 + $0x10] sm:$0xf] %v2072
      %2089 = vst [vmem:[%s170 + $0x14] sm:$0xf] %v2073
      %2090 = vst [vmem:[%s170 + $0x18] sm:$0xf] %v2074
      %2091 = vst [vmem:[%s170 + $0x1c] sm:$0xf] %v2075
      %p2092 = scmp.lt.s32.totalorder %s14, 1
      %s2093 = scalar_select %p2092, %s14, 1
      %s2094 = smul.addr %s2093, 8
      %s2095 = smul.addr %s2094, 4
      %s2096 = scalar_lea.vmem %s3, %s2095
      // Predicated region
      $region33: #{bottleneck_forward.5} parent=31 // pred_check
        %p2097 = pneg %p100
      $region34: #{bottleneck_forward.5} parent=31 // pred_check_branch
        %2099 = sbr.rel (%p2097) target = $region36
      $region35: #{bottleneck_forward.5} parent=31 // pred_region
        _
      $region36: #{bottleneck_forward.5} parent=31 // pred_fallthru
        _
    $region32: #{bottleneck_forward.5} parent=5 // pred_fallthru
      _
    %p2100 = scmp.le.s32.totalorder 2, %s9
    // Predicated region
    $region37: #{bottleneck_forward.5} parent=5 // pred_check
      %p2101 = pneg %p2100
    $region38: #{bottleneck_forward.5} parent=5 // pred_check_branch
      %2103 = sbr.rel (%p2101) target = $region40
    $region39: #{bottleneck_forward.5} parent=5 // pred_region
      %s2104 = ssub.s32 %s9, 2
      // Predicated region
      $region41: #{bottleneck_forward.5} parent=39 // pred_check
        %p2105 = pneg %p106
      $region42: #{bottleneck_forward.5} parent=39 // pred_check_branch
        %2107 = sbr.rel (%p2105) target = $region44
      $region43: #{bottleneck_forward.5} parent=39 // pred_region
        %p2108 = scmp.lt.s32.totalorder %s15, 1
        %s2109 = scalar_select %p2108, %s15, 1
        %s2110 = smul.addr %s2109, 8
        %s2111 = smul.addr %s2110, 4
        %s2112 = scalar_lea.vmem %s3, %s2111
      $region44: #{bottleneck_forward.5} parent=39 // pred_fallthru
        _
    $region40: #{bottleneck_forward.5} parent=5 // pred_fallthru
      _
  $region6: #{bottleneck_forward.5} parent=0 // loop_footer
    %s13 = sadd.s32 1, %s9
  $region7: #{bottleneck_forward.5} parent=0 // loop_footer_branch
    %8 = sbr.rel target = $region3
  $region8: #{bottleneck_forward.5} parent=0 // loop_exit
    _

// kernel: bottleneck_forward.6
$region0: #{bottleneck_forward.6}
  #allocation0 [shape = 'u32[]', space=smem, size = 0x4, offset = 0x4, fixed_abs, tag = 'smem constant byte address 0x4 - core index']
  #allocation1 [shape = 'u32[144,128]{1,0:T(1,128)}', space=vmem, size = 0x12000, scoped, tag = 'internal scratch']
  #allocation2 [shape = 'f32[128,128]{1,0:T(8,128)}', space=vmem, size = 0x10000, scoped, tag = 'scratch operand']
  %s0 = inlined_call_operand.vmem [shape: bf16[128,128], index: 0, kind: input, shape index: {}]
  %s1 = inlined_call_operand.vmem [shape: bf16[128,128], index: 1, kind: input, shape index: {}]
  %s2 = inlined_call_operand.vmem [shape: f32[1,128], index: 2, kind: input, shape index: {}]
  %s3 = inlined_call_operand.vmem [shape: f32[128,128], index: 3, kind: output, shape index: {}]
  %s4 = sld [smem:[#allocation0]]
  $region30: #{bottleneck_forward.6} parent=0
    _
  %s6 = ssub.s32 1, %s4
  %s7 = scalar_select 0, %s6, %s4
  // Predicated region
  $region2: #{bottleneck_forward.6} parent=0 // pred_check
    _
  $region3: #{bottleneck_forward.6} parent=0 // pred_check_branch
    %9 = sbr.rel (0) target = $region5
  $region4: #{bottleneck_forward.6} parent=0 // pred_region
    _
  $region5: #{bottleneck_forward.6} parent=0 // pred_fallthru
    _
  // Predicated region
  $region6: #{bottleneck_forward.6} parent=0 // pred_check
    _
  $region7: #{bottleneck_forward.6} parent=0 // pred_check_branch
    %11 = sbr.rel (0) target = $region9
  $region8: #{bottleneck_forward.6} parent=0 // pred_region
    _
  $region9: #{bottleneck_forward.6} parent=0 // pred_fallthru
    _
  // Predicated region
  $region10: #{bottleneck_forward.6} parent=0 // pred_check
    _
  $region11: #{bottleneck_forward.6} parent=0 // pred_check_branch
    %13 = sbr.rel (0) target = $region13
  $region12: #{bottleneck_forward.6} parent=0 // pred_region
    _
  $region13: #{bottleneck_forward.6} parent=0 // pred_fallthru
    _
  %p15 = scmp.eq.s32.totalorder 0, 0
  // Predicated region
  $region14: #{bottleneck_forward.6} parent=0 // pred_check
    %p16 = pneg %p15
  $region15: #{bottleneck_forward.6} parent=0 // pred_check_branch
    %18 = sbr.rel (%p16) target = $region17
  $region16: #{bottleneck_forward.6} parent=0 // pred_region
    %19 = vst [vmem:[#allocation2] sm:$0xff] 0.0
    %20 = vst [vmem:[#allocation2 + $0x8] sm:$0xff] 0.0
    %21 = vst [vmem:[#allocation2 + $0x10] sm:$0xff] 0.0
    %22 = vst [vmem:[#allocation2 + $0x18] sm:$0xff] 0.0
    %23 = vst [vmem:[#allocation2 + $0x20] sm:$0xff] 0.0
    %24 = vst [vmem:[#allocation2 + $0x28] sm:$0xff] 0.0
    %25 = vst [vmem:[#allocation2 + $0x30] sm:$0xff] 0.0
    %26 = vst [vmem:[#allocation2 + $0x38] sm:$0xff] 0.0
    %27 = vst [vmem:[#allocation2 + $0x40] sm:$0xff] 0.0
    %28 = vst [vmem:[#allocation2 + $0x48] sm:$0xff] 0.0
    %29 = vst [vmem:[#allocation2 + $0x50] sm:$0xff] 0.0
    %30 = vst [vmem:[#allocation2 + $0x58] sm:$0xff] 0.0
    %31 = vst [vmem:[#allocation2 + $0x60] sm:$0xff] 0.0
    %32 = vst [vmem:[#allocation2 + $0x68] sm:$0xff] 0.0
    %33 = vst [vmem:[#allocation2 + $0x70] sm:$0xff] 0.0
    %34 = vst [vmem:[#allocation2 + $0x78] sm:$0xff] 0.0
  $region17: #{bottleneck_forward.6} parent=0 // pred_fallthru
    _
  %v35 = vld [vmem:[#allocation2] sm:$0xff]
  %v36 = vld [vmem:[#allocation2 + $0x8] sm:$0xff]
  %v37 = vld [vmem:[#allocation2 + $0x10] sm:$0xff]
  %v38 = vld [vmem:[#allocation2 + $0x18] sm:$0xff]
  %v39 = vld [vmem:[#allocation2 + $0x20] sm:$0xff]
  %v40 = vld [vmem:[#allocation2 + $0x28] sm:$0xff]
  %v41 = vld [vmem:[#allocation2 + $0x30] sm:$0xff]
  %v42 = vld [vmem:[#allocation2 + $0x38] sm:$0xff]
  %v43 = vld [vmem:[#allocation2 + $0x40] sm:$0xff]
  %v44 = vld [vmem:[#allocation2 + $0x48] sm:$0xff]
  %v45 = vld [vmem:[#allocation2 + $0x50] sm:$0xff]
  %v46 = vld [vmem:[#allocation2 + $0x58] sm:$0xff]
  %v47 = vld [vmem:[#allocation2 + $0x60] sm:$0xff]
  %v48 = vld [vmem:[#allocation2 + $0x68] sm:$0xff]
  %v49 = vld [vmem:[#allocation2 + $0x70] sm:$0xff]
  %v50 = vld [vmem:[#allocation2 + $0x78] sm:$0xff]
  %v51 = vld [vmem:[%s0] sm:$0xf]
  %v52 = vld [vmem:[%s0 + $0x4] sm:$0xf]
  %v53 = vld [vmem:[%s0 + $0x8] sm:$0xf]
  %v54 = vld [vmem:[%s0 + $0xc] sm:$0xf]
  %v55 = vld [vmem:[%s0 + $0x10] sm:$0xf]
  %v56 = vld [vmem:[%s0 + $0x14] sm:$0xf]
  %v57 = vld [vmem:[%s0 + $0x18] sm:$0xf]
  %v58 = vld [vmem:[%s0 + $0x1c] sm:$0xf]
  %v59 = vld [vmem:[%s0 + $0x20] sm:$0xf]
  %v60 = vld [vmem:[%s0 + $0x24] sm:$0xf]
  %v61 = vld [vmem:[%s0 + $0x28] sm:$0xf]
  %v62 = vld [vmem:[%s0 + $0x2c] sm:$0xf]
  %v63 = vld [vmem:[%s0 + $0x30] sm:$0xf]
  %v64 = vld [vmem:[%s0 + $0x34] sm:$0xf]
  %v65 = vld [vmem:[%s0 + $0x38] sm:$0xf]
  %v66 = vld [vmem:[%s0 + $0x3c] sm:$0xf]
  %v67 = vld [vmem:[%s1] sm:$0xf]
  %v68 = vld [vmem:[%s1 + $0x4] sm:$0xf]
  %v69 = vld [vmem:[%s1 + $0x8] sm:$0xf]
  %v70 = vld [vmem:[%s1 + $0xc] sm:$0xf]
  %v71 = vld [vmem:[%s1 + $0x10] sm:$0xf]
  %v72 = vld [vmem:[%s1 + $0x14] sm:$0xf]
  %v73 = vld [vmem:[%s1 + $0x18] sm:$0xf]
  %v74 = vld [vmem:[%s1 + $0x1c] sm:$0xf]
  %v75 = vld [vmem:[%s1 + $0x20] sm:$0xf]
  %v76 = vld [vmem:[%s1 + $0x24] sm:$0xf]
  %v77 = vld [vmem:[%s1 + $0x28] sm:$0xf]
  %v78 = vld [vmem:[%s1 + $0x2c] sm:$0xf]
  %v79 = vld [vmem:[%s1 + $0x30] sm:$0xf]
  %v80 = vld [vmem:[%s1 + $0x34] sm:$0xf]
  %v81 = vld [vmem:[%s1 + $0x38] sm:$0xf]
  %v82 = vld [vmem:[%s1 + $0x3c] sm:$0xf]
  %v99 = vunpack.c.l.b16 %v51
  %v100 = vunpack.c.l.b16 %v52
  %v101 = vunpack.c.l.b16 %v53
  %v102 = vunpack.c.l.b16 %v54
  %v103 = vunpack.c.l.b16 %v55
  %v104 = vunpack.c.l.b16 %v56
  %v105 = vunpack.c.l.b16 %v57
  %v106 = vunpack.c.l.b16 %v58
  %v107 = vunpack.c.l.b16 %v59
  %v108 = vunpack.c.l.b16 %v60
  %v109 = vunpack.c.l.b16 %v61
  %v110 = vunpack.c.l.b16 %v62
  %v111 = vunpack.c.l.b16 %v63
  %v112 = vunpack.c.l.b16 %v64
  %v113 = vunpack.c.l.b16 %v65
  %v114 = vunpack.c.l.b16 %v66
  %v115 = vpack.c.b16 %v100, %v99
  %v116 = vpack.c.b16 %v102, %v101
  %v117 = vpack.c.b16 %v104, %v103
  %v118 = vpack.c.b16 %v106, %v105
  %v119 = vpack.c.b16 %v108, %v107
  %v120 = vpack.c.b16 %v110, %v109
  %v121 = vpack.c.b16 %v112, %v111
  %v122 = vpack.c.b16 %v114, %v113
  %v147 = vunpack.c.l.b16 %v67
  %v148 = vunpack.c.l.b16 %v68
  %v149 = vunpack.c.l.b16 %v69
  %v150 = vunpack.c.l.b16 %v70
  %v151 = vunpack.c.l.b16 %v71
  %v152 = vunpack.c.l.b16 %v72
  %v153 = vunpack.c.l.b16 %v73
  %v154 = vunpack.c.l.b16 %v74
  %v155 = vunpack.c.l.b16 %v75
  %v156 = vunpack.c.l.b16 %v76
  %v157 = vunpack.c.l.b16 %v77
  %v158 = vunpack.c.l.b16 %v78
  %v159 = vunpack.c.l.b16 %v79
  %v160 = vunpack.c.l.b16 %v80
  %v161 = vunpack.c.l.b16 %v81
  %v162 = vunpack.c.l.b16 %v82
  %v163 = vpack.c.b16 %v148, %v147
  %v164 = vpack.c.b16 %v150, %v149
  %v165 = vpack.c.b16 %v152, %v151
  %v166 = vpack.c.b16 %v154, %v153
  %v167 = vpack.c.b16 %v156, %v155
  %v168 = vpack.c.b16 %v158, %v157
  %v169 = vpack.c.b16 %v160, %v159
  %v170 = vpack.c.b16 %v162, %v161
  %179 = vmatprep.subr.bf16.mxu0 0
  %180 = vmatpush1.bf16.msra.mxu0 %v163
  %181 = vmatprep.subr.bf16.mxu0 0
  %182 = vmatpush1.bf16.msra.mxu0 %v164
  %183 = vmatprep.subr.bf16.mxu0 0
  %184 = vmatpush1.bf16.msra.mxu0 %v165
  %185 = vmatprep.subr.bf16.mxu0 0
  %186 = vmatpush1.bf16.msra.mxu0 %v166
  %187 = vmatprep.subr.bf16.mxu0 0
  %188 = vmatpush1.bf16.msra.mxu0 %v167
  %189 = vmatprep.subr.bf16.mxu0 0
  %190 = vmatpush1.bf16.msra.mxu0 %v168
  %191 = vmatprep.subr.bf16.mxu0 0
  %192 = vmatpush1.bf16.msra.mxu0 %v169
  %193 = vmatprep.subr.bf16.mxu0 0
  %194 = vmatpush1.bf16.msra.mxu0 %v170
  %195 = vmatprep.subr.bf16.mxu0 0
  %196 = vmatpush1.bf16.msra.mxu0 0
  %197 = vmatprep.subr.bf16.mxu0 0
  %198 = vmatpush1.bf16.msra.mxu0 0
  %199 = vmatprep.subr.bf16.mxu0 0
  %200 = vmatpush1.bf16.msra.mxu0 0
  %201 = vmatprep.subr.bf16.mxu0 0
  %202 = vmatpush1.bf16.msra.mxu0 0
  %203 = vmatprep.subr.bf16.mxu0 0
  %204 = vmatpush1.bf16.msra.mxu0 0
  %205 = vmatprep.subr.bf16.mxu0 0
  %206 = vmatpush1.bf16.msra.mxu0 0
  %207 = vmatprep.subr.bf16.mxu0 0
  %208 = vmatpush1.bf16.msra.mxu0 0
  %209 = vmatprep.subr.bf16.mxu0 0
  %210 = vmatpush1.bf16.msra.mxu0 0
  %211 = vmatprep.mubr.bf16.mxu0 0
  %212 = vmatmul.mubr.bf16.gmra.mrb[0].mxu0 %v115
  %v213 = vpop.f32.mrb[0].mxu0
  %v214 = vadd.f32 0.0, %v213
  %v215 = vpop.f32.mrb[0].mxu0
  %v216 = vpop.f32.mrb[0].mxu0
  %v217 = vadd.f32 0.0, %v216
  %v218 = vpop.f32.mrb[0].mxu0
  %219 = vmatprep.mubr.bf16.mxu0 0
  %220 = vmatmul.mubr.bf16.gmra.mrb[0].mxu0 %v116
  %v221 = vpop.f32.mrb[0].mxu0
  %v222 = vadd.f32 0.0, %v221
  %v223 = vpop.f32.mrb[0].mxu0
  %v224 = vpop.f32.mrb[0].mxu0
  %v225 = vadd.f32 0.0, %v224
  %v226 = vpop.f32.mrb[0].mxu0
  %227 = vmatprep.mubr.bf16.mxu0 0
  %228 = vmatmul.mubr.bf16.gmra.mrb[0].mxu0 %v117
  %v229 = vpop.f32.mrb[0].mxu0
  %v230 = vadd.f32 0.0, %v229
  %v231 = vpop.f32.mrb[0].mxu0
  %v232 = vpop.f32.mrb[0].mxu0
  %v233 = vadd.f32 0.0, %v232
  %v234 = vpop.f32.mrb[0].mxu0
  %235 = vmatprep.mubr.bf16.mxu0 0
  %236 = vmatmul.mubr.bf16.gmra.mrb[0].mxu0 %v118
  %v237 = vpop.f32.mrb[0].mxu0
  %v238 = vadd.f32 0.0, %v237
  %v239 = vpop.f32.mrb[0].mxu0
  %v240 = vpop.f32.mrb[0].mxu0
  %v241 = vadd.f32 0.0, %v240
  %v242 = vpop.f32.mrb[0].mxu0
  %243 = vmatprep.mubr.bf16.mxu0 0
  %244 = vmatmul.mubr.bf16.gmra.mrb[0].mxu0 %v119
  %v245 = vpop.f32.mrb[0].mxu0
  %v246 = vadd.f32 0.0, %v245
  %v247 = vpop.f32.mrb[0].mxu0
  %v248 = vpop.f32.mrb[0].mxu0
  %v249 = vadd.f32 0.0, %v248
  %v250 = vpop.f32.mrb[0].mxu0
  %251 = vmatprep.mubr.bf16.mxu0 0
  %252 = vmatmul.mubr.bf16.gmra.mrb[0].mxu0 %v120
  %v253 = vpop.f32.mrb[0].mxu0
  %v254 = vadd.f32 0.0, %v253
  %v255 = vpop.f32.mrb[0].mxu0
  %v256 = vpop.f32.mrb[0].mxu0
  %v257 = vadd.f32 0.0, %v256
  %v258 = vpop.f32.mrb[0].mxu0
  %259 = vmatprep.mubr.bf16.mxu0 0
  %260 = vmatmul.mubr.bf16.gmra.mrb[0].mxu0 %v121
  %v261 = vpop.f32.mrb[0].mxu0
  %v262 = vadd.f32 0.0, %v261
  %v263 = vpop.f32.mrb[0].mxu0
  %v264 = vpop.f32.mrb[0].mxu0
  %v265 = vadd.f32 0.0, %v264
  %v266 = vpop.f32.mrb[0].mxu0
  %267 = vmatprep.mubr.bf16.mxu0 0
  %268 = vmatmul.mubr.bf16.gmra.mrb[0].mxu0 %v122
  %v269 = vpop.f32.mrb[0].mxu0
  %v270 = vadd.f32 0.0, %v269
  %v271 = vpop.f32.mrb[0].mxu0
  %v272 = vpop.f32.mrb[0].mxu0
  %v273 = vadd.f32 0.0, %v272
  %v274 = vpop.f32.mrb[0].mxu0
  %275 = vdwg.mxu0
  %v276 = vadd.f32 %v35, %v214
  %v277 = vadd.f32 %v36, %v217
  %v278 = vadd.f32 %v37, %v222
  %v279 = vadd.f32 %v38, %v225
  %v280 = vadd.f32 %v39, %v230
  %v281 = vadd.f32 %v40, %v233
  %v282 = vadd.f32 %v41, %v238
  %v283 = vadd.f32 %v42, %v241
  %v284 = vadd.f32 %v43, %v246
  %v285 = vadd.f32 %v44, %v249
  %v286 = vadd.f32 %v45, %v254
  %v287 = vadd.f32 %v46, %v257
  %v288 = vadd.f32 %v47, %v262
  %v289 = vadd.f32 %v48, %v265
  %v290 = vadd.f32 %v49, %v270
  %v291 = vadd.f32 %v50, %v273
  %292 = vst [vmem:[#allocation2] sm:$0xff] %v276
  %293 = vst [vmem:[#allocation2 + $0x8] sm:$0xff] %v277
  %294 = vst [vmem:[#allocation2 + $0x10] sm:$0xff] %v278
  %295 = vst [vmem:[#allocation2 + $0x18] sm:$0xff] %v279
  %296 = vst [vmem:[#allocation2 + $0x20] sm:$0xff] %v280
  %297 = vst [vmem:[#allocation2 + $0x28] sm:$0xff] %v281
  %298 = vst [vmem:[#allocation2 + $0x30] sm:$0xff] %v282
  %299 = vst [vmem:[#allocation2 + $0x38] sm:$0xff] %v283
  %300 = vst [vmem:[#allocation2 + $0x40] sm:$0xff] %v284
  %301 = vst [vmem:[#allocation2 + $0x48] sm:$0xff] %v285
  %302 = vst [vmem:[#allocation2 + $0x50] sm:$0xff] %v286
  %303 = vst [vmem:[#allocation2 + $0x58] sm:$0xff] %v287
  %304 = vst [vmem:[#allocation2 + $0x60] sm:$0xff] %v288
  %305 = vst [vmem:[#allocation2 + $0x68] sm:$0xff] %v289
  %306 = vst [vmem:[#allocation2 + $0x70] sm:$0xff] %v290
  %307 = vst [vmem:[#allocation2 + $0x78] sm:$0xff] %v291
  // Predicated region
  $region18: #{bottleneck_forward.6} parent=0 // pred_check
    %p308 = pneg %p15
  $region19: #{bottleneck_forward.6} parent=0 // pred_check_branch
    %310 = sbr.rel (%p308) target = $region21
  $region20: #{bottleneck_forward.6} parent=0 // pred_region
    %v311 = vld [vmem:[#allocation2] sm:$0xff]
    %v312 = vld [vmem:[#allocation2 + $0x8] sm:$0xff]
    %v313 = vld [vmem:[#allocation2 + $0x10] sm:$0xff]
    %v314 = vld [vmem:[#allocation2 + $0x18] sm:$0xff]
    %v315 = vld [vmem:[#allocation2 + $0x20] sm:$0xff]
    %v316 = vld [vmem:[#allocation2 + $0x28] sm:$0xff]
    %v317 = vld [vmem:[#allocation2 + $0x30] sm:$0xff]
    %v318 = vld [vmem:[#allocation2 + $0x38] sm:$0xff]
    %v319 = vld [vmem:[#allocation2 + $0x40] sm:$0xff]
    %v320 = vld [vmem:[#allocation2 + $0x48] sm:$0xff]
    %v321 = vld [vmem:[#allocation2 + $0x50] sm:$0xff]
    %v322 = vld [vmem:[#allocation2 + $0x58] sm:$0xff]
    %v323 = vld [vmem:[#allocation2 + $0x60] sm:$0xff]
    %v324 = vld [vmem:[#allocation2 + $0x68] sm:$0xff]
    %v325 = vld [vmem:[#allocation2 + $0x70] sm:$0xff]
    %v326 = vld [vmem:[#allocation2 + $0x78] sm:$0xff]
    %v327 = vld [vmem:[%s2] sm:$0x1]
    %v329 = vlaneseq
    %v330 = vshrl.u32 %v329, 7
    %v331 = vsub.s32 0, %v330
    %v332 = vrot.slane %v327, %v331
    %v334 = vadd.f32 %v311, %v332
    %v335 = vadd.f32 %v312, %v332
    %v336 = vadd.f32 %v313, %v332
    %v337 = vadd.f32 %v314, %v332
    %v338 = vadd.f32 %v315, %v332
    %v339 = vadd.f32 %v316, %v332
    %v340 = vadd.f32 %v317, %v332
    %v341 = vadd.f32 %v318, %v332
    %v342 = vadd.f32 %v319, %v332
    %v343 = vadd.f32 %v320, %v332
    %v344 = vadd.f32 %v321, %v332
    %v345 = vadd.f32 %v322, %v332
    %v346 = vadd.f32 %v323, %v332
    %v347 = vadd.f32 %v324, %v332
    %v348 = vadd.f32 %v325, %v332
    %v349 = vadd.f32 %v326, %v332
    %350 = vst [vmem:[%s3] sm:$0xff] %v334
    %351 = vst [vmem:[%s3 + $0x8] sm:$0xff] %v335
    %352 = vst [vmem:[%s3 + $0x10] sm:$0xff] %v336
    %353 = vst [vmem:[%s3 + $0x18] sm:$0xff] %v337
    %354 = vst [vmem:[%s3 + $0x20] sm:$0xff] %v338
    %355 = vst [vmem:[%s3 + $0x28] sm:$0xff] %v339
    %356 = vst [vmem:[%s3 + $0x30] sm:$0xff] %v340
    %357 = vst [vmem:[%s3 + $0x38] sm:$0xff] %v341
    %358 = vst [vmem:[%s3 + $0x40] sm:$0xff] %v342
    %359 = vst [vmem:[%s3 + $0x48] sm:$0xff] %v343
    %360 = vst [vmem:[%s3 + $0x50] sm:$0xff] %v344
    %361 = vst [vmem:[%s3 + $0x58] sm:$0xff] %v345
    %362 = vst [vmem:[%s3 + $0x60] sm:$0xff] %v346
    %363 = vst [vmem:[%s3 + $0x68] sm:$0xff] %v347
    %364 = vst [vmem:[%s3 + $0x70] sm:$0xff] %v348
    %365 = vst [vmem:[%s3 + $0x78] sm:$0xff] %v349
  $region21: #{bottleneck_forward.6} parent=0 // pred_fallthru
    _
  // Predicated region
  $region22: #{bottleneck_forward.6} parent=0 // pred_check
    _
  $region23: #{bottleneck_forward.6} parent=0 // pred_check_branch
    %367 = sbr.rel (0) target = $region25
  $region24: #{bottleneck_forward.6} parent=0 // pred_region
    _
  $region25: #{bottleneck_forward.6} parent=0 // pred_fallthru
    _
  // Predicated region
  $region26: #{bottleneck_forward.6} parent=0 // pred_check
    _
  $region27: #{bottleneck_forward.6} parent=0 // pred_check_branch
    %369 = sbr.rel (0) target = $region29
  $region28: #{bottleneck_forward.6} parent=0 // pred_region
    _
  $region29: #{bottleneck_forward.6} parent=0 // pred_fallthru
    _

// kernel: bottleneck_forward.7
$region0: #{bottleneck_forward.7}
  #allocation0 [shape = 'u32[]', space=smem, size = 0x4, offset = 0x4, fixed_abs, tag = 'smem constant byte address 0x4 - core index']
  #allocation1 [shape = 'u32[144,128]{1,0:T(1,128)}', space=vmem, size = 0x12000, scoped, tag = 'internal scratch']
  #allocation2 [shape = 'f32[128,128]{1,0:T(8,128)}', space=vmem, size = 0x10000, scoped, tag = 'scratch operand']
  %s0 = inlined_call_operand.vmem [shape: bf16[128,128], index: 0, kind: input, shape index: {}]
  %s1 = inlined_call_operand.vmem [shape: bf16[128,128], index: 1, kind: input, shape index: {}]
  %s2 = inlined_call_operand.vmem [shape: f32[1,128], index: 2, kind: input, shape index: {}]
  %s3 = inlined_call_operand.vmem [shape: f32[128,128], index: 3, kind: input, shape index: {}]
  %s4 = inlined_call_operand.vmem [shape: f32[128,128], index: 4, kind: output, shape index: {}]
  %s5 = sld [smem:[#allocation0]]
  $region34: #{bottleneck_forward.7} parent=0
    _
  %s7 = ssub.s32 1, %s5
  %s8 = scalar_select 0, %s7, %s5
  // Predicated region
  $region2: #{bottleneck_forward.7} parent=0 // pred_check
    _
  $region3: #{bottleneck_forward.7} parent=0 // pred_check_branch
    %10 = sbr.rel (0) target = $region5
  $region4: #{bottleneck_forward.7} parent=0 // pred_region
    _
  $region5: #{bottleneck_forward.7} parent=0 // pred_fallthru
    _
  // Predicated region
  $region6: #{bottleneck_forward.7} parent=0 // pred_check
    _
  $region7: #{bottleneck_forward.7} parent=0 // pred_check_branch
    %12 = sbr.rel (0) target = $region9
  $region8: #{bottleneck_forward.7} parent=0 // pred_region
    _
  $region9: #{bottleneck_forward.7} parent=0 // pred_fallthru
    _
  // Predicated region
  $region10: #{bottleneck_forward.7} parent=0 // pred_check
    _
  $region11: #{bottleneck_forward.7} parent=0 // pred_check_branch
    %14 = sbr.rel (0) target = $region13
  $region12: #{bottleneck_forward.7} parent=0 // pred_region
    _
  $region13: #{bottleneck_forward.7} parent=0 // pred_fallthru
    _
  // Predicated region
  $region14: #{bottleneck_forward.7} parent=0 // pred_check
    _
  $region15: #{bottleneck_forward.7} parent=0 // pred_check_branch
    %16 = sbr.rel (0) target = $region17
  $region16: #{bottleneck_forward.7} parent=0 // pred_region
    _
  $region17: #{bottleneck_forward.7} parent=0 // pred_fallthru
    _
  %p18 = scmp.eq.s32.totalorder 0, 0
  // Predicated region
  $region18: #{bottleneck_forward.7} parent=0 // pred_check
    %p19 = pneg %p18
  $region19: #{bottleneck_forward.7} parent=0 // pred_check_branch
    %21 = sbr.rel (%p19) target = $region21
  $region20: #{bottleneck_forward.7} parent=0 // pred_region
    %22 = vst [vmem:[#allocation2] sm:$0xff] 0.0
    %23 = vst [vmem:[#allocation2 + $0x8] sm:$0xff] 0.0
    %24 = vst [vmem:[#allocation2 + $0x10] sm:$0xff] 0.0
    %25 = vst [vmem:[#allocation2 + $0x18] sm:$0xff] 0.0
    %26 = vst [vmem:[#allocation2 + $0x20] sm:$0xff] 0.0
    %27 = vst [vmem:[#allocation2 + $0x28] sm:$0xff] 0.0
    %28 = vst [vmem:[#allocation2 + $0x30] sm:$0xff] 0.0
    %29 = vst [vmem:[#allocation2 + $0x38] sm:$0xff] 0.0
    %30 = vst [vmem:[#allocation2 + $0x40] sm:$0xff] 0.0
    %31 = vst [vmem:[#allocation2 + $0x48] sm:$0xff] 0.0
    %32 = vst [vmem:[#allocation2 + $0x50] sm:$0xff] 0.0
    %33 = vst [vmem:[#allocation2 + $0x58] sm:$0xff] 0.0
    %34 = vst [vmem:[#allocation2 + $0x60] sm:$0xff] 0.0
    %35 = vst [vmem:[#allocation2 + $0x68] sm:$0xff] 0.0
    %36 = vst [vmem:[#allocation2 + $0x70] sm:$0xff] 0.0
    %37 = vst [vmem:[#allocation2 + $0x78] sm:$0xff] 0.0
  $region21: #{bottleneck_forward.7} parent=0 // pred_fallthru
    _
  %v38 = vld [vmem:[#allocation2] sm:$0xff]
  %v39 = vld [vmem:[#allocation2 + $0x8] sm:$0xff]
  %v40 = vld [vmem:[#allocation2 + $0x10] sm:$0xff]
  %v41 = vld [vmem:[#allocation2 + $0x18] sm:$0xff]
  %v42 = vld [vmem:[#allocation2 + $0x20] sm:$0xff]
  %v43 = vld [vmem:[#allocation2 + $0x28] sm:$0xff]
  %v44 = vld [vmem:[#allocation2 + $0x30] sm:$0xff]
  %v45 = vld [vmem:[#allocation2 + $0x38] sm:$0xff]
  %v46 = vld [vmem:[#allocation2 + $0x40] sm:$0xff]
  %v47 = vld [vmem:[#allocation2 + $0x48] sm:$0xff]
  %v48 = vld [vmem:[#allocation2 + $0x50] sm:$0xff]
  %v49 = vld [vmem:[#allocation2 + $0x58] sm:$0xff]
  %v50 = vld [vmem:[#allocation2 + $0x60] sm:$0xff]
  %v51 = vld [vmem:[#allocation2 + $0x68] sm:$0xff]
  %v52 = vld [vmem:[#allocation2 + $0x70] sm:$0xff]
  %v53 = vld [vmem:[#allocation2 + $0x78] sm:$0xff]
  %v54 = vld [vmem:[%s0] sm:$0xf]
  %v55 = vld [vmem:[%s0 + $0x4] sm:$0xf]
  %v56 = vld [vmem:[%s0 + $0x8] sm:$0xf]
  %v57 = vld [vmem:[%s0 + $0xc] sm:$0xf]
  %v58 = vld [vmem:[%s0 + $0x10] sm:$0xf]
  %v59 = vld [vmem:[%s0 + $0x14] sm:$0xf]
  %v60 = vld [vmem:[%s0 + $0x18] sm:$0xf]
  %v61 = vld [vmem:[%s0 + $0x1c] sm:$0xf]
  %v62 = vld [vmem:[%s0 + $0x20] sm:$0xf]
  %v63 = vld [vmem:[%s0 + $0x24] sm:$0xf]
  %v64 = vld [vmem:[%s0 + $0x28] sm:$0xf]
  %v65 = vld [vmem:[%s0 + $0x2c] sm:$0xf]
  %v66 = vld [vmem:[%s0 + $0x30] sm:$0xf]
  %v67 = vld [vmem:[%s0 + $0x34] sm:$0xf]
  %v68 = vld [vmem:[%s0 + $0x38] sm:$0xf]
  %v69 = vld [vmem:[%s0 + $0x3c] sm:$0xf]
  %v70 = vld [vmem:[%s1] sm:$0xf]
  %v71 = vld [vmem:[%s1 + $0x4] sm:$0xf]
  %v72 = vld [vmem:[%s1 + $0x8] sm:$0xf]
  %v73 = vld [vmem:[%s1 + $0xc] sm:$0xf]
  %v74 = vld [vmem:[%s1 + $0x10] sm:$0xf]
  %v75 = vld [vmem:[%s1 + $0x14] sm:$0xf]
  %v76 = vld [vmem:[%s1 + $0x18] sm:$0xf]
  %v77 = vld [vmem:[%s1 + $0x1c] sm:$0xf]
  %v78 = vld [vmem:[%s1 + $0x20] sm:$0xf]
  %v79 = vld [vmem:[%s1 + $0x24] sm:$0xf]
  %v80 = vld [vmem:[%s1 + $0x28] sm:$0xf]
  %v81 = vld [vmem:[%s1 + $0x2c] sm:$0xf]
  %v82 = vld [vmem:[%s1 + $0x30] sm:$0xf]
  %v83 = vld [vmem:[%s1 + $0x34] sm:$0xf]
  %v84 = vld [vmem:[%s1 + $0x38] sm:$0xf]
  %v85 = vld [vmem:[%s1 + $0x3c] sm:$0xf]
  %v102 = vunpack.c.l.b16 %v54
  %v103 = vunpack.c.l.b16 %v55
  %v104 = vunpack.c.l.b16 %v56
  %v105 = vunpack.c.l.b16 %v57
  %v106 = vunpack.c.l.b16 %v58
  %v107 = vunpack.c.l.b16 %v59
  %v108 = vunpack.c.l.b16 %v60
  %v109 = vunpack.c.l.b16 %v61
  %v110 = vunpack.c.l.b16 %v62
  %v111 = vunpack.c.l.b16 %v63
  %v112 = vunpack.c.l.b16 %v64
  %v113 = vunpack.c.l.b16 %v65
  %v114 = vunpack.c.l.b16 %v66
  %v115 = vunpack.c.l.b16 %v67
  %v116 = vunpack.c.l.b16 %v68
  %v117 = vunpack.c.l.b16 %v69
  %v118 = vpack.c.b16 %v103, %v102
  %v119 = vpack.c.b16 %v105, %v104
  %v120 = vpack.c.b16 %v107, %v106
  %v121 = vpack.c.b16 %v109, %v108
  %v122 = vpack.c.b16 %v111, %v110
  %v123 = vpack.c.b16 %v113, %v112
  %v124 = vpack.c.b16 %v115, %v114
  %v125 = vpack.c.b16 %v117, %v116
  %v150 = vunpack.c.l.b16 %v70
  %v151 = vunpack.c.l.b16 %v71
  %v152 = vunpack.c.l.b16 %v72
  %v153 = vunpack.c.l.b16 %v73
  %v154 = vunpack.c.l.b16 %v74
  %v155 = vunpack.c.l.b16 %v75
  %v156 = vunpack.c.l.b16 %v76
  %v157 = vunpack.c.l.b16 %v77
  %v158 = vunpack.c.l.b16 %v78
  %v159 = vunpack.c.l.b16 %v79
  %v160 = vunpack.c.l.b16 %v80
  %v161 = vunpack.c.l.b16 %v81
  %v162 = vunpack.c.l.b16 %v82
  %v163 = vunpack.c.l.b16 %v83
  %v164 = vunpack.c.l.b16 %v84
  %v165 = vunpack.c.l.b16 %v85
  %v166 = vpack.c.b16 %v151, %v150
  %v167 = vpack.c.b16 %v153, %v152
  %v168 = vpack.c.b16 %v155, %v154
  %v169 = vpack.c.b16 %v157, %v156
  %v170 = vpack.c.b16 %v159, %v158
  %v171 = vpack.c.b16 %v161, %v160
  %v172 = vpack.c.b16 %v163, %v162
  %v173 = vpack.c.b16 %v165, %v164
  %182 = vmatprep.subr.bf16.mxu0 0
  %183 = vmatpush1.bf16.msra.mxu0 %v166
  %184 = vmatprep.subr.bf16.mxu0 0
  %185 = vmatpush1.bf16.msra.mxu0 %v167
  %186 = vmatprep.subr.bf16.mxu0 0
  %187 = vmatpush1.bf16.msra.mxu0 %v168
  %188 = vmatprep.subr.bf16.mxu0 0
  %189 = vmatpush1.bf16.msra.mxu0 %v169
  %190 = vmatprep.subr.bf16.mxu0 0
  %191 = vmatpush1.bf16.msra.mxu0 %v170
  %192 = vmatprep.subr.bf16.mxu0 0
  %193 = vmatpush1.bf16.msra.mxu0 %v171
  %194 = vmatprep.subr.bf16.mxu0 0
  %195 = vmatpush1.bf16.msra.mxu0 %v172
  %196 = vmatprep.subr.bf16.mxu0 0
  %197 = vmatpush1.bf16.msra.mxu0 %v173
  %198 = vmatprep.subr.bf16.mxu0 0
  %199 = vmatpush1.bf16.msra.mxu0 0
  %200 = vmatprep.subr.bf16.mxu0 0
  %201 = vmatpush1.bf16.msra.mxu0 0
  %202 = vmatprep.subr.bf16.mxu0 0
  %203 = vmatpush1.bf16.msra.mxu0 0
  %204 = vmatprep.subr.bf16.mxu0 0
  %205 = vmatpush1.bf16.msra.mxu0 0
  %206 = vmatprep.subr.bf16.mxu0 0
  %207 = vmatpush1.bf16.msra.mxu0 0
  %208 = vmatprep.subr.bf16.mxu0 0
  %209 = vmatpush1.bf16.msra.mxu0 0
  %210 = vmatprep.subr.bf16.mxu0 0
  %211 = vmatpush1.bf16.msra.mxu0 0
  %212 = vmatprep.subr.bf16.mxu0 0
  %213 = vmatpush1.bf16.msra.mxu0 0
  %214 = vmatprep.mubr.bf16.mxu0 0
  %215 = vmatmul.mubr.bf16.gmra.mrb[0].mxu0 %v118
  %v216 = vpop.f32.mrb[0].mxu0
  %v217 = vadd.f32 0.0, %v216
  %v218 = vpop.f32.mrb[0].mxu0
  %v219 = vpop.f32.mrb[0].mxu0
  %v220 = vadd.f32 0.0, %v219
  %v221 = vpop.f32.mrb[0].mxu0
  %222 = vmatprep.mubr.bf16.mxu0 0
  %223 = vmatmul.mubr.bf16.gmra.mrb[0].mxu0 %v119
  %v224 = vpop.f32.mrb[0].mxu0
  %v225 = vadd.f32 0.0, %v224
  %v226 = vpop.f32.mrb[0].mxu0
  %v227 = vpop.f32.mrb[0].mxu0
  %v228 = vadd.f32 0.0, %v227
  %v229 = vpop.f32.mrb[0].mxu0
  %230 = vmatprep.mubr.bf16.mxu0 0
  %231 = vmatmul.mubr.bf16.gmra.mrb[0].mxu0 %v120
  %v232 = vpop.f32.mrb[0].mxu0
  %v233 = vadd.f32 0.0, %v232
  %v234 = vpop.f32.mrb[0].mxu0
  %v235 = vpop.f32.mrb[0].mxu0
  %v236 = vadd.f32 0.0, %v235
  %v237 = vpop.f32.mrb[0].mxu0
  %238 = vmatprep.mubr.bf16.mxu0 0
  %239 = vmatmul.mubr.bf16.gmra.mrb[0].mxu0 %v121
  %v240 = vpop.f32.mrb[0].mxu0
  %v241 = vadd.f32 0.0, %v240
  %v242 = vpop.f32.mrb[0].mxu0
  %v243 = vpop.f32.mrb[0].mxu0
  %v244 = vadd.f32 0.0, %v243
  %v245 = vpop.f32.mrb[0].mxu0
  %246 = vmatprep.mubr.bf16.mxu0 0
  %247 = vmatmul.mubr.bf16.gmra.mrb[0].mxu0 %v122
  %v248 = vpop.f32.mrb[0].mxu0
  %v249 = vadd.f32 0.0, %v248
  %v250 = vpop.f32.mrb[0].mxu0
  %v251 = vpop.f32.mrb[0].mxu0
  %v252 = vadd.f32 0.0, %v251
  %v253 = vpop.f32.mrb[0].mxu0
  %254 = vmatprep.mubr.bf16.mxu0 0
  %255 = vmatmul.mubr.bf16.gmra.mrb[0].mxu0 %v123
  %v256 = vpop.f32.mrb[0].mxu0
  %v257 = vadd.f32 0.0, %v256
  %v258 = vpop.f32.mrb[0].mxu0
  %v259 = vpop.f32.mrb[0].mxu0
  %v260 = vadd.f32 0.0, %v259
  %v261 = vpop.f32.mrb[0].mxu0
  %262 = vmatprep.mubr.bf16.mxu0 0
  %263 = vmatmul.mubr.bf16.gmra.mrb[0].mxu0 %v124
  %v264 = vpop.f32.mrb[0].mxu0
  %v265 = vadd.f32 0.0, %v264
  %v266 = vpop.f32.mrb[0].mxu0
  %v267 = vpop.f32.mrb[0].mxu0
  %v268 = vadd.f32 0.0, %v267
  %v269 = vpop.f32.mrb[0].mxu0
  %270 = vmatprep.mubr.bf16.mxu0 0
  %271 = vmatmul.mubr.bf16.gmra.mrb[0].mxu0 %v125
  %v272 = vpop.f32.mrb[0].mxu0
  %v273 = vadd.f32 0.0, %v272
  %v274 = vpop.f32.mrb[0].mxu0
  %v275 = vpop.f32.mrb[0].mxu0
  %v276 = vadd.f32 0.0, %v275
  %v277 = vpop.f32.mrb[0].mxu0
  %278 = vdwg.mxu0
  %v279 = vadd.f32 %v38, %v217
  %v280 = vadd.f32 %v39, %v220
  %v281 = vadd.f32 %v40, %v225
  %v282 = vadd.f32 %v41, %v228
  %v283 = vadd.f32 %v42, %v233
  %v284 = vadd.f32 %v43, %v236
  %v285 = vadd.f32 %v44, %v241
  %v286 = vadd.f32 %v45, %v244
  %v287 = vadd.f32 %v46, %v249
  %v288 = vadd.f32 %v47, %v252
  %v289 = vadd.f32 %v48, %v257
  %v290 = vadd.f32 %v49, %v260
  %v291 = vadd.f32 %v50, %v265
  %v292 = vadd.f32 %v51, %v268
  %v293 = vadd.f32 %v52, %v273
  %v294 = vadd.f32 %v53, %v276
  %295 = vst [vmem:[#allocation2] sm:$0xff] %v279
  %296 = vst [vmem:[#allocation2 + $0x8] sm:$0xff] %v280
  %297 = vst [vmem:[#allocation2 + $0x10] sm:$0xff] %v281
  %298 = vst [vmem:[#allocation2 + $0x18] sm:$0xff] %v282
  %299 = vst [vmem:[#allocation2 + $0x20] sm:$0xff] %v283
  %300 = vst [vmem:[#allocation2 + $0x28] sm:$0xff] %v284
  %301 = vst [vmem:[#allocation2 + $0x30] sm:$0xff] %v285
  %302 = vst [vmem:[#allocation2 + $0x38] sm:$0xff] %v286
  %303 = vst [vmem:[#allocation2 + $0x40] sm:$0xff] %v287
  %304 = vst [vmem:[#allocation2 + $0x48] sm:$0xff] %v288
  %305 = vst [vmem:[#allocation2 + $0x50] sm:$0xff] %v289
  %306 = vst [vmem:[#allocation2 + $0x58] sm:$0xff] %v290
  %307 = vst [vmem:[#allocation2 + $0x60] sm:$0xff] %v291
  %308 = vst [vmem:[#allocation2 + $0x68] sm:$0xff] %v292
  %309 = vst [vmem:[#allocation2 + $0x70] sm:$0xff] %v293
  %310 = vst [vmem:[#allocation2 + $0x78] sm:$0xff] %v294
  // Predicated region
  $region22: #{bottleneck_forward.7} parent=0 // pred_check
    %p311 = pneg %p18
  $region23: #{bottleneck_forward.7} parent=0 // pred_check_branch
    %313 = sbr.rel (%p311) target = $region25
  $region24: #{bottleneck_forward.7} parent=0 // pred_region
    %v314 = vld [vmem:[#allocation2] sm:$0xff]
    %v315 = vld [vmem:[#allocation2 + $0x8] sm:$0xff]
    %v316 = vld [vmem:[#allocation2 + $0x10] sm:$0xff]
    %v317 = vld [vmem:[#allocation2 + $0x18] sm:$0xff]
    %v318 = vld [vmem:[#allocation2 + $0x20] sm:$0xff]
    %v319 = vld [vmem:[#allocation2 + $0x28] sm:$0xff]
    %v320 = vld [vmem:[#allocation2 + $0x30] sm:$0xff]
    %v321 = vld [vmem:[#allocation2 + $0x38] sm:$0xff]
    %v322 = vld [vmem:[#allocation2 + $0x40] sm:$0xff]
    %v323 = vld [vmem:[#allocation2 + $0x48] sm:$0xff]
    %v324 = vld [vmem:[#allocation2 + $0x50] sm:$0xff]
    %v325 = vld [vmem:[#allocation2 + $0x58] sm:$0xff]
    %v326 = vld [vmem:[#allocation2 + $0x60] sm:$0xff]
    %v327 = vld [vmem:[#allocation2 + $0x68] sm:$0xff]
    %v328 = vld [vmem:[#allocation2 + $0x70] sm:$0xff]
    %v329 = vld [vmem:[#allocation2 + $0x78] sm:$0xff]
    %v330 = vld [vmem:[%s2] sm:$0x1]
    %v332 = vlaneseq
    %v333 = vshrl.u32 %v332, 7
    %v334 = vsub.s32 0, %v333
    %v335 = vrot.slane %v330, %v334
    %v337 = vadd.f32 %v314, %v335
    %v338 = vadd.f32 %v315, %v335
    %v339 = vadd.f32 %v316, %v335
    %v340 = vadd.f32 %v317, %v335
    %v341 = vadd.f32 %v318, %v335
    %v342 = vadd.f32 %v319, %v335
    %v343 = vadd.f32 %v320, %v335
    %v344 = vadd.f32 %v321, %v335
    %v345 = vadd.f32 %v322, %v335
    %v346 = vadd.f32 %v323, %v335
    %v347 = vadd.f32 %v324, %v335
    %v348 = vadd.f32 %v325, %v335
    %v349 = vadd.f32 %v326, %v335
    %v350 = vadd.f32 %v327, %v335
    %v351 = vadd.f32 %v328, %v335
    %v352 = vadd.f32 %v329, %v335
    %v353 = vld [vmem:[%s3] sm:$0xff]
    %v354 = vld [vmem:[%s3 + $0x8] sm:$0xff]
    %v355 = vld [vmem:[%s3 + $0x10] sm:$0xff]
    %v356 = vld [vmem:[%s3 + $0x18] sm:$0xff]
    %v357 = vld [vmem:[%s3 + $0x20] sm:$0xff]
    %v358 = vld [vmem:[%s3 + $0x28] sm:$0xff]
    %v359 = vld [vmem:[%s3 + $0x30] sm:$0xff]
    %v360 = vld [vmem:[%s3 + $0x38] sm:$0xff]
    %v361 = vld [vmem:[%s3 + $0x40] sm:$0xff]
    %v362 = vld [vmem:[%s3 + $0x48] sm:$0xff]
    %v363 = vld [vmem:[%s3 + $0x50] sm:$0xff]
    %v364 = vld [vmem:[%s3 + $0x58] sm:$0xff]
    %v365 = vld [vmem:[%s3 + $0x60] sm:$0xff]
    %v366 = vld [vmem:[%s3 + $0x68] sm:$0xff]
    %v367 = vld [vmem:[%s3 + $0x70] sm:$0xff]
    %v368 = vld [vmem:[%s3 + $0x78] sm:$0xff]
    %v369 = vadd.f32 %v337, %v353
    %v370 = vadd.f32 %v338, %v354
    %v371 = vadd.f32 %v339, %v355
    %v372 = vadd.f32 %v340, %v356
    %v373 = vadd.f32 %v341, %v357
    %v374 = vadd.f32 %v342, %v358
    %v375 = vadd.f32 %v343, %v359
    %v376 = vadd.f32 %v344, %v360
    %v377 = vadd.f32 %v345, %v361
    %v378 = vadd.f32 %v346, %v362
    %v379 = vadd.f32 %v347, %v363
    %v380 = vadd.f32 %v348, %v364
    %v381 = vadd.f32 %v349, %v365
    %v382 = vadd.f32 %v350, %v366
    %v383 = vadd.f32 %v351, %v367
    %v384 = vadd.f32 %v352, %v368
    %v385 = vmax.f32 %v369, 0.0
    %v386 = vmax.f32 %v370, 0.0
    %v387 = vmax.f32 %v371, 0.0
    %v388 = vmax.f32 %v372, 0.0
    %v389 = vmax.f32 %v373, 0.0
    %v390 = vmax.f32 %v374, 0.0
    %v391 = vmax.f32 %v375, 0.0
    %v392 = vmax.f32 %v376, 0.0
    %v393 = vmax.f32 %v377, 0.0
    %v394 = vmax.f32 %v378, 0.0
    %v395 = vmax.f32 %v379, 0.0
    %v396 = vmax.f32 %v380, 0.0
    %v397 = vmax.f32 %v381, 0.0
    %v398 = vmax.f32 %v382, 0.0
    %v399 = vmax.f32 %v383, 0.0
    %v400 = vmax.f32 %v384, 0.0
    %401 = vst [vmem:[%s4] sm:$0xff] %v385
    %402 = vst [vmem:[%s4 + $0x8] sm:$0xff] %v386
    %403 = vst [vmem:[%s4 + $0x10] sm:$0xff] %v387
    %404 = vst [vmem:[%s4 + $0x18] sm:$0xff] %v388
    %405 = vst [vmem:[%s4 + $0x20] sm:$0xff] %v389
    %406 = vst [vmem:[%s4 + $0x28] sm:$0xff] %v390
    %407 = vst [vmem:[%s4 + $0x30] sm:$0xff] %v391
    %408 = vst [vmem:[%s4 + $0x38] sm:$0xff] %v392
    %409 = vst [vmem:[%s4 + $0x40] sm:$0xff] %v393
    %410 = vst [vmem:[%s4 + $0x48] sm:$0xff] %v394
    %411 = vst [vmem:[%s4 + $0x50] sm:$0xff] %v395
    %412 = vst [vmem:[%s4 + $0x58] sm:$0xff] %v396
    %413 = vst [vmem:[%s4 + $0x60] sm:$0xff] %v397
    %414 = vst [vmem:[%s4 + $0x68] sm:$0xff] %v398
    %415 = vst [vmem:[%s4 + $0x70] sm:$0xff] %v399
    %416 = vst [vmem:[%s4 + $0x78] sm:$0xff] %v400
  $region25: #{bottleneck_forward.7} parent=0 // pred_fallthru
    _
  // Predicated region
  $region26: #{bottleneck_forward.7} parent=0 // pred_check
    _
  $region27: #{bottleneck_forward.7} parent=0 // pred_check_branch
    %418 = sbr.rel (0) target = $region29
  $region28: #{bottleneck_forward.7} parent=0 // pred_region
    _
  $region29: #{bottleneck_forward.7} parent=0 // pred_fallthru
    _
  // Predicated region
  $region30: #{bottleneck_forward.7} parent=0 // pred_check
    _
  $region31: #{bottleneck_forward.7} parent=0 // pred_check_branch
    %420 = sbr.rel (0) target = $region33
  $region32: #{bottleneck_forward.7} parent=0 // pred_region
    _
  $region33: #{bottleneck_forward.7} parent=0 // pred_fallthru
    _

</llo_original>
